<compile_context>
chip_gen: v6e
topology: v6e:2x2x1
jax: 0.10.0
libtpu: 0.0.40
codegen_flags: <defaults>
</compile_context>

<pallas_src>
import functools

import jax
import jax.numpy as jnp
from jax import lax
from jax.experimental import pallas as pl
from jax.experimental.pallas import tpu as pltpu

GATE_KEYS = ("f1w", "f1b", "f2w", "f2b", "f3w", "f3b",
             "w0z", "w1z", "bz", "w0r", "w1r", "br")
UPD_KEYS = ("f1w", "f1b", "f2w", "f2b", "f3w", "f3b", "w0", "w1", "b")


# --------------------------------------------------------------------------------------
# Pallas kernel: one DGCRM layer (full T recurrence) for one batch tile.
# --------------------------------------------------------------------------------------
def _layer_kernel(*refs):
    x_ref, h0_ref, et_ref, erep_ref, ssel_ref = refs[:5]
    gate = dict(zip(GATE_KEYS, refs[5:5 + len(GATE_KEYS)]))
    upd = dict(zip(UPD_KEYS, refs[5 + len(GATE_KEYS):5 + len(GATE_KEYS) + len(UPD_KEYS)]))
    out_ref, h_scr = refs[-2], refs[-1]

    t = pl.program_id(1)

    @pl.when(t == 0)
    def _():
        # New batch tile: load the initial hidden state into the VMEM carry.
        h_scr[...] = h0_ref[...].astype(jnp.float32)

    Bb, N, _din = x_ref.shape[1], x_ref.shape[2], x_ref.shape[3]
    dout = h_scr.shape[2]
    D = et_ref.shape[3]
    BN = Bb * N
    cdt = gate["w0z"].dtype                      # MXU operand dtype (bf16 or f32)

    x = x_ref[0].astype(jnp.float32)                               # [Bb, N, din]
    et_flat = et_ref[0].astype(jnp.float32).reshape(BN, D)          # [BN, D]
    e_rep = erep_ref[...]                                           # [BN, D*dout], f32
    s_sel = ssel_ref[...]                                           # [D*dout, dout], f32
    h3 = h_scr[...]                                                 # [Bb, N, dout], f32
    h_f = h3.reshape(BN, dout)

    def dgcn_feats(state3, p):
        """Shared DGCN front-end: returns (xcat, L@xcat) as MXU operands [BN, C]."""
        xcat = jnp.concatenate([x, state3], axis=-1)                # [Bb, N, C]
        C = xcat.shape[-1]
        xcat_f = xcat.reshape(BN, C)

        # Hyper-network MLP -> per-(sample, node) filter -> dynamic node vectors (tiny, f32).
        f = jax.nn.sigmoid(
            jnp.dot(xcat_f, p["f1w"][...], preferred_element_type=jnp.float32)
            + p["f1b"][...])
        f = jax.nn.sigmoid(
            jnp.dot(f, p["f2w"][...], preferred_element_type=jnp.float32)
            + p["f2b"][...])
        f = jnp.dot(f, p["f3w"][...], preferred_element_type=jnp.float32) + p["f3b"][...]
        nv = jnp.tanh(et_flat * f).reshape(Bb, N, D).astype(cdt)    # [Bb, N, D]

        # Dynamic adjacency; the identity support is folded in algebraically:
        # deg = rowsum(adj) + 1;  L@v = d*(adj@(d*v)) + d*(d*v)   (adj symmetric).
        adj = jnp.maximum(
            jnp.einsum("bnd,bmd->bnm", nv, nv,
                       preferred_element_type=jnp.float32), 0.0)    # [Bb, N, N]
        d_inv = lax.rsqrt(jnp.sum(adj, axis=2, keepdims=True) + 1.0)  # [Bb, N, 1]
        dx = d_inv * xcat
        sx = d_inv * jnp.einsum("bnm,bmc->bnc", adj.astype(cdt), dx.astype(cdt),
                                preferred_element_type=jnp.float32) + d_inv * dx
        return xcat_f.astype(cdt), sx.reshape(BN, C).astype(cdt)

    def pool(xc, sx, w0, w1, bias):
        """E-weighted weights-pool contraction -> [BN, dout] (fused, no per-d loop)."""
        m = (jnp.dot(xc, w0[...], preferred_element_type=jnp.float32)
             + jnp.dot(sx, w1[...], preferred_element_type=jnp.float32))   # [BN, D*dout]
        pw = m * e_rep                                                     # e[n,d]-weighting
        return jnp.dot(pw, s_sel, preferred_element_type=jnp.float32) + bias[...]

    # ---- gate DGCN (z and r share the adjacency / graph-conv work) ----
    xc_g, sx_g = dgcn_feats(h3, gate)
    z = jax.nn.sigmoid(pool(xc_g, sx_g, gate["w0z"], gate["w1z"], gate["bz"]))
    r = jax.nn.sigmoid(pool(xc_g, sx_g, gate["w0r"], gate["w1r"], gate["br"]))

    # ---- candidate DGCN on cat(x, z*h) ----
    xc_u, sx_u = dgcn_feats((z * h_f).reshape(Bb, N, dout), upd)
    hc = jnp.tanh(pool(xc_u, sx_u, upd["w0"], upd["w1"], upd["b"]))

    h_new = (r * h_f + (1.0 - r) * hc).reshape(Bb, N, dout)
    h_scr[...] = h_new                           # carry to next timestep (VMEM resident)
    out_ref[0] = h_new.astype(out_ref.dtype)


# --------------------------------------------------------------------------------------
# Parameter construction / derivation (plain-JAX glue).
# --------------------------------------------------------------------------------------
def _init_dgcn_params(key, c_in, c_out, cheb_k, embed_dim):
    ks = jax.random.split(key, 8)
    hyper, mid, s = 16, 2, 0.1
    return dict(
        weights_pool=s * jax.random.normal(ks[0], (embed_dim, cheb_k, c_in, c_out), jnp.float32),
        bias_pool=s * jax.random.normal(ks[1], (embed_dim, c_out), jnp.float32),
        fc1_w=s * jax.random.normal(ks[2], (hyper, c_in), jnp.float32),   # torch Linear: [out, in]
        fc1_b=s * jax.random.normal(ks[3], (hyper,), jnp.float32),
        fc2_w=s * jax.random.normal(ks[4], (mid, hyper), jnp.float32),
        fc2_b=s * jax.random.normal(ks[5], (mid,), jnp.float32),
        fc3_w=s * jax.random.normal(ks[6], (embed_dim, mid), jnp.float32),
        fc3_b=s * jax.random.normal(ks[7], (embed_dim,), jnp.float32),
    )


def init_dgcrm_params(key, dim_in, dim_out, cheb_k, embed_dim, num_layers):
    assert cheb_k == 2, "DGCN in DDGCRN uses exactly two supports (identity + dynamic Laplacian)"
    layers = []
    for i in range(num_layers):
        din = dim_in if i == 0 else dim_out
        key, kg, ku = jax.random.split(key, 3)
        layers.append(dict(
            gate=_init_dgcn_params(kg, din + dim_out, 2 * dim_out, cheb_k, embed_dim),
            update=_init_dgcn_params(ku, din + dim_out, dim_out, cheb_k, embed_dim),
        ))
    return layers


def _mlp_params(p):
    return dict(
        f1w=p["fc1_w"].T, f1b=p["fc1_b"][None, :],
        f2w=p["fc2_w"].T, f2b=p["fc2_b"][None, :],
        f3w=p["fc3_w"].T, f3b=p["fc3_b"][None, :],
    )


def _derive_gate_params(p, dim_out, node_emb, Bb, mxu_dtype):
    wp = p["weights_pool"]                       # [D, 2, C, 2*dout]
    D, _K, C, _O2 = wp.shape

    def flat(k, lo):                             # -> [C, D*dout]:  W[i, d*dout+o] = wp[d,k,i,lo+o]
        w = wp[:, k, :, lo:lo + dim_out]
        return jnp.transpose(w, (1, 0, 2)).reshape(C, D * dim_out).astype(mxu_dtype)

    bias = jnp.tile(jnp.dot(node_emb, p["bias_pool"]), (Bb, 1)).astype(jnp.float32)
    out = _mlp_params(p)
    out.update(w0z=flat(0, 0), w1z=flat(1, 0), bz=bias[:, :dim_out],
               w0r=flat(0, dim_out), w1r=flat(1, dim_out), br=bias[:, dim_out:])
    return out


def _derive_update_params(p, dim_out, node_emb, Bb, mxu_dtype):
    wp = p["weights_pool"]                       # [D, 2, C, dout]
    D, _K, C, O = wp.shape

    def flat(k):
        return jnp.transpose(wp[:, k], (1, 0, 2)).reshape(C, D * O).astype(mxu_dtype)

    bias = jnp.tile(jnp.dot(node_emb, p["bias_pool"]), (Bb, 1)).astype(jnp.float32)
    out = _mlp_params(p)
    out.update(w0=flat(0), w1=flat(1), b=bias)
    return out


def _default_batch_tile(B):
    """B//2 on 2-TensorCore parts (v3/v4/v7x) so 'parallel' feeds both cores, else full B."""
    try:
        kind = jax.devices()[0].device_kind.lower()
    except Exception:  # pragma: no cover
        kind = ""
    two_tc = ("v7" in kind) or ("v4" in kind) or ("v3" in kind)
    if two_tc and B % 2 == 0:
        return B // 2
    return B


# --------------------------------------------------------------------------------------
# One DGCRM layer: pallas_call over (batch tiles, T).
# --------------------------------------------------------------------------------------
def _dgcrm_layer(x_t, h0, et_t, node_emb, cell_p, *, dim_out, batch_tile=None,
                 mxu_dtype=jnp.bfloat16, vmem_limit_bytes=64 * 1024 * 1024):
    """x_t/et_t are [T, B, N, .]; returns [T, B, N, dim_out]."""
    T, B, N, din = x_t.shape
    D = node_emb.shape[-1]
    Bb = batch_tile if batch_tile is not None else _default_batch_tile(B)
    assert B % Bb == 0

    gate_p = _derive_gate_params(cell_p["gate"], dim_out, node_emb, Bb, mxu_dtype)
    upd_p = _derive_update_params(cell_p["update"], dim_out, node_emb, Bb, mxu_dtype)

    # Resident constants: e_rep[n*, d*dout + o] = E[n, d]  and the d-fold selector.
    e_rep = jnp.tile(jnp.repeat(node_emb.astype(jnp.float32), dim_out, axis=1), (Bb, 1))
    s_sel = jnp.tile(jnp.eye(dim_out, dtype=jnp.float32), (D, 1))       # [D*dout, dout]

    gate_flat = tuple(gate_p[k] for k in GATE_KEYS)
    upd_flat = tuple(upd_p[k] for k in UPD_KEYS)

    def const_spec(a):
        nd = a.ndim
        return pl.BlockSpec(tuple(a.shape), lambda bt, t, _nd=nd: (0,) * _nd)

    in_specs = [
        pl.BlockSpec((1, Bb, N, din), lambda bt, t: (t, bt, 0, 0)),      # x[t]
        pl.BlockSpec((Bb, N, dim_out), lambda bt, t: (bt, 0, 0)),        # init_state
        pl.BlockSpec((1, Bb, N, D), lambda bt, t: (t, bt, 0, 0)),        # node_emb_t[t]
        const_spec(e_rep),
        const_spec(s_sel),
    ] + [const_spec(a) for a in gate_flat + upd_flat]                    # resident params

    # Advisory cost estimate (per-step work is opaque to XLA otherwise).
    C = din + dim_out
    BN = Bb * N
    DO = D * dim_out
    front = 2 * Bb * N * N * D + 2 * Bb * N * N * C + 2 * BN * (C * 16 + 16 * 2 + 2 * D)
    pool_head = 2 * 2 * BN * C * DO + 2 * BN * DO * dim_out
    flops_step = 2 * front + 3 * pool_head
    trans_step = BN * (2 * (16 + 2 + D) + 3 * dim_out) + 2 * Bb * N
    steps = (B // Bb) * T
    param_bytes = sum(int(a.size) * a.dtype.itemsize for a in gate_flat + upd_flat)
    cost = pl.CostEstimate(
        flops=int(steps * flops_step),
        transcendentals=int(steps * trans_step),
        bytes_accessed=int(4 * (x_t.size + et_t.size + T * B * N * dim_out + h0.size)
                           + param_bytes + e_rep.size * 4 + s_sel.size * 4),
    )

    return pl.pallas_call(
        _layer_kernel,
        out_shape=jax.ShapeDtypeStruct((T, B, N, dim_out), jnp.float32),
        grid=(B // Bb, T),
        in_specs=in_specs,
        out_specs=pl.BlockSpec((1, Bb, N, dim_out), lambda bt, t: (t, bt, 0, 0)),
        scratch_shapes=[pltpu.VMEM((Bb, N, dim_out), jnp.float32)],      # hidden-state carry
        compiler_params=pltpu.CompilerParams(
            dimension_semantics=("parallel", "arbitrary"),
            vmem_limit_bytes=int(vmem_limit_bytes)),
        cost_estimate=cost,
    )(x_t, h0, et_t, e_rep, s_sel, *gate_flat, *upd_flat)


# --------------------------------------------------------------------------------------
# DGCRM forward: layer loop (Python) around one pallas_call per layer.
# --------------------------------------------------------------------------------------
def dgcrm_forward(x, init_state, node_emb_t, node_emb, layer_params, *, dim_out,
                  batch_tile=None, mxu_dtype=jnp.bfloat16):
    # Time-major layouts produced once (hoisted out of the layer loop).
    cur = jnp.swapaxes(x, 0, 1)                 # [T, B, N, din]
    et_t = jnp.swapaxes(node_emb_t, 0, 1)       # [T, B, N, D]
    output_hidden = []
    for i, cell_p in enumerate(layer_params):
        cur = _dgcrm_layer(cur, init_state[i], et_t, node_emb, cell_p,
                           dim_out=dim_out, batch_tile=batch_tile,
                           mxu_dtype=mxu_dtype)  # [T, B, N, dout]
        output_hidden.append(cur[-1])            # state after the last timestep
    return jnp.swapaxes(cur, 0, 1), output_hidden


if __name__ == "__main__":
    B, T, N = 2, 8, 16
    dim_in, dim_out, cheb_k, embed_dim, num_layers = 2, 32, 2, 8, 1

    key = jax.random.PRNGKey(0)
    kx, ke1, ke2, kp = jax.random.split(key, 4)

    x = jax.random.normal(kx, (B, T, N, dim_in), jnp.float32)
    node_emb_t = jax.random.normal(ke1, (B, T, N, embed_dim), jnp.float32)   # node_embeddings[0]
    node_emb = jax.random.normal(ke2, (N, embed_dim), jnp.float32)           # node_embeddings[1]
    init_state = jnp.zeros((num_layers, B, N, dim_out), jnp.float32)         # DGCRM.init_hidden

    params = init_dgcrm_params(kp, dim_in, dim_out, cheb_k, embed_dim, num_layers)

    fwd = jax.jit(functools.partial(dgcrm_forward, dim_out=dim_out))
    outputs, output_hidden = fwd(x, init_state, node_emb_t, node_emb, params)
    jax.block_until_ready(outputs)
    jax.block_until_ready(output_hidden)

    assert outputs.shape == (B, T, N, dim_out)
    assert len(output_hidden) == num_layers and output_hidden[0].shape == (B, N, dim_out)
    print("KERNEL_OK")
</pallas_src>

<mosaic_0001>
module attributes {stable_mosaic.version = 11 : i64} {
  func.func @_layer_kernel(%arg0: i32, %arg1: i32, %arg2: memref<1x2x16x2xf32, #tpu.memory_space<vmem>>, %arg3: memref<2x16x32xf32, #tpu.memory_space<vmem>>, %arg4: memref<1x2x16x8xf32, #tpu.memory_space<vmem>>, %arg5: memref<32x256xf32, #tpu.memory_space<vmem>>, %arg6: memref<256x32xf32, #tpu.memory_space<vmem>>, %arg7: memref<34x16xf32, #tpu.memory_space<vmem>>, %arg8: memref<1x16xf32, #tpu.memory_space<vmem>>, %arg9: memref<16x2xf32, #tpu.memory_space<vmem>>, %arg10: memref<1x2xf32, #tpu.memory_space<vmem>>, %arg11: memref<2x8xf32, #tpu.memory_space<vmem>>, %arg12: memref<1x8xf32, #tpu.memory_space<vmem>>, %arg13: memref<34x256xbf16, #tpu.memory_space<vmem>>, %arg14: memref<34x256xbf16, #tpu.memory_space<vmem>>, %arg15: memref<32x32xf32, #tpu.memory_space<vmem>>, %arg16: memref<34x256xbf16, #tpu.memory_space<vmem>>, %arg17: memref<34x256xbf16, #tpu.memory_space<vmem>>, %arg18: memref<32x32xf32, #tpu.memory_space<vmem>>, %arg19: memref<34x16xf32, #tpu.memory_space<vmem>>, %arg20: memref<1x16xf32, #tpu.memory_space<vmem>>, %arg21: memref<16x2xf32, #tpu.memory_space<vmem>>, %arg22: memref<1x2xf32, #tpu.memory_space<vmem>>, %arg23: memref<2x8xf32, #tpu.memory_space<vmem>>, %arg24: memref<1x8xf32, #tpu.memory_space<vmem>>, %arg25: memref<34x256xbf16, #tpu.memory_space<vmem>>, %arg26: memref<34x256xbf16, #tpu.memory_space<vmem>>, %arg27: memref<32x32xf32, #tpu.memory_space<vmem>>, %arg28: memref<1x2x16x32xf32, #tpu.memory_space<vmem>>, %arg29: memref<2x16x32xf32, #tpu.memory_space<vmem>>) attributes {dimension_semantics = [#tpu.dimension_semantics<parallel>, #tpu.dimension_semantics<arbitrary>], iteration_bounds = array<i64: 1, 8>, scalar_prefetch = 0 : i64, scratch_operands = 1 : i64, tpu.core_type = #tpu.core_type<tc>, window_params = [{transform_indices = @transform_0, window_bounds = array<i64: 1, 2, 16, 2>}, {transform_indices = @transform_1, window_bounds = array<i64: 2, 16, 32>}, {transform_indices = @transform_2, window_bounds = array<i64: 1, 2, 16, 8>}, {pipeline_mode = #tpu.pipeline_mode<synchronous>, transform_indices = @transform_3, window_bounds = array<i64: 32, 256>}, {pipeline_mode = #tpu.pipeline_mode<synchronous>, transform_indices = @transform_4, window_bounds = array<i64: 256, 32>}, {pipeline_mode = #tpu.pipeline_mode<synchronous>, transform_indices = @transform_5, window_bounds = array<i64: 34, 16>}, {pipeline_mode = #tpu.pipeline_mode<synchronous>, transform_indices = @transform_6, window_bounds = array<i64: 1, 16>}, {pipeline_mode = #tpu.pipeline_mode<synchronous>, transform_indices = @transform_7, window_bounds = array<i64: 16, 2>}, {pipeline_mode = #tpu.pipeline_mode<synchronous>, transform_indices = @transform_8, window_bounds = array<i64: 1, 2>}, {pipeline_mode = #tpu.pipeline_mode<synchronous>, transform_indices = @transform_9, window_bounds = array<i64: 2, 8>}, {pipeline_mode = #tpu.pipeline_mode<synchronous>, transform_indices = @transform_10, window_bounds = array<i64: 1, 8>}, {pipeline_mode = #tpu.pipeline_mode<synchronous>, transform_indices = @transform_11, window_bounds = array<i64: 34, 256>}, {pipeline_mode = #tpu.pipeline_mode<synchronous>, transform_indices = @transform_12, window_bounds = array<i64: 34, 256>}, {pipeline_mode = #tpu.pipeline_mode<synchronous>, transform_indices = @transform_13, window_bounds = array<i64: 32, 32>}, {pipeline_mode = #tpu.pipeline_mode<synchronous>, transform_indices = @transform_14, window_bounds = array<i64: 34, 256>}, {pipeline_mode = #tpu.pipeline_mode<synchronous>, transform_indices = @transform_15, window_bounds = array<i64: 34, 256>}, {pipeline_mode = #tpu.pipeline_mode<synchronous>, transform_indices = @transform_16, window_bounds = array<i64: 32, 32>}, {pipeline_mode = #tpu.pipeline_mode<synchronous>, transform_indices = @transform_17, window_bounds = array<i64: 34, 16>}, {pipeline_mode = #tpu.pipeline_mode<synchronous>, transform_indices = @transform_18, window_bounds = array<i64: 1, 16>}, {pipeline_mode = #tpu.pipeline_mode<synchronous>, transform_indices = @transform_19, window_bounds = array<i64: 16, 2>}, {pipeline_mode = #tpu.pipeline_mode<synchronous>, transform_indices = @transform_20, window_bounds = array<i64: 1, 2>}, {pipeline_mode = #tpu.pipeline_mode<synchronous>, transform_indices = @transform_21, window_bounds = array<i64: 2, 8>}, {pipeline_mode = #tpu.pipeline_mode<synchronous>, transform_indices = @transform_22, window_bounds = array<i64: 1, 8>}, {pipeline_mode = #tpu.pipeline_mode<synchronous>, transform_indices = @transform_23, window_bounds = array<i64: 34, 256>}, {pipeline_mode = #tpu.pipeline_mode<synchronous>, transform_indices = @transform_24, window_bounds = array<i64: 34, 256>}, {pipeline_mode = #tpu.pipeline_mode<synchronous>, transform_indices = @transform_25, window_bounds = array<i64: 32, 32>}, {transform_indices = @transform_26, window_bounds = array<i64: 1, 2, 16, 32>}]} {
    %c0_i32 = arith.constant 0 : i32
    %0 = arith.cmpi eq, %arg1, %c0_i32 : i32
    %1 = arith.extui %0 : i1 to i32
    %c0_i32_0 = arith.constant 0 : i32
    %2 = arith.cmpi ne, %1, %c0_i32_0 : i32
    scf.if %2 {
      %c0_95 = arith.constant 0 : index
      %c0_96 = arith.constant 0 : index
      %c0_97 = arith.constant 0 : index
      %166 = vector.load %arg3[%c0_95, %c0_96, %c0_97] : memref<2x16x32xf32, #tpu.memory_space<vmem>>, vector<2x16x32xf32>
      %c0_98 = arith.constant 0 : index
      %c0_99 = arith.constant 0 : index
      %c0_100 = arith.constant 0 : index
      %167 = vector.load %arg29[%c0_98, %c0_99, %c0_100] : memref<2x16x32xf32, #tpu.memory_space<vmem>>, vector<2x16x32xf32>
      tpu.vector_store %arg29[%c0_98, %c0_99, %c0_100], %166 {strides = array<i32>} : memref<2x16x32xf32, #tpu.memory_space<vmem>>, vector<2x16x32xf32>,
    } else {
    }
    %c0 = arith.constant 0 : index
    %c0_1 = arith.constant 0 : index
    %c0_2 = arith.constant 0 : index
    %c0_3 = arith.constant 0 : index
    %3 = vector.load %arg2[%c0, %c0_1, %c0_2, %c0_3] : memref<1x2x16x2xf32, #tpu.memory_space<vmem>>, vector<1x2x16x2xf32>
    %4 = vector.shape_cast %3 : vector<1x2x16x2xf32> to vector<2x16x2xf32>
    %c0_4 = arith.constant 0 : index
    %c0_5 = arith.constant 0 : index
    %c0_6 = arith.constant 0 : index
    %c0_7 = arith.constant 0 : index
    %5 = vector.load %arg4[%c0_4, %c0_5, %c0_6, %c0_7] : memref<1x2x16x8xf32, #tpu.memory_space<vmem>>, vector<1x2x16x8xf32>
    %6 = vector.shape_cast %5 : vector<1x2x16x8xf32> to vector<2x16x8xf32>
    %7 = vector.shape_cast %6 : vector<2x16x8xf32> to vector<32x8xf32>
    %c0_8 = arith.constant 0 : index
    %c0_9 = arith.constant 0 : index
    %8 = vector.load %arg5[%c0_8, %c0_9] : memref<32x256xf32, #tpu.memory_space<vmem>>, vector<32x256xf32>
    %c0_10 = arith.constant 0 : index
    %c0_11 = arith.constant 0 : index
    %9 = vector.load %arg6[%c0_10, %c0_11] : memref<256x32xf32, #tpu.memory_space<vmem>>, vector<256x32xf32>
    %c0_12 = arith.constant 0 : index
    %c0_13 = arith.constant 0 : index
    %c0_14 = arith.constant 0 : index
    %10 = vector.load %arg29[%c0_12, %c0_13, %c0_14] : memref<2x16x32xf32, #tpu.memory_space<vmem>>, vector<2x16x32xf32>
    %11 = vector.shape_cast %10 : vector<2x16x32xf32> to vector<32x32xf32>
    %12 = tpu.concatenate %4, %10 in 2 : vector<2x16x2xf32>, vector<2x16x32xf32> -> vector<2x16x34xf32>
    %13 = vector.shape_cast %12 : vector<2x16x34xf32> to vector<32x34xf32>
    %c0_15 = arith.constant 0 : index
    %c0_16 = arith.constant 0 : index
    %14 = vector.load %arg7[%c0_15, %c0_16] : memref<34x16xf32, #tpu.memory_space<vmem>>, vector<34x16xf32>
    %cst = arith.constant dense<0.000000e+00> : vector<32x16xf32>
    %15 = tpu.matmul %13, %14, %cst {dimension_numbers = #tpu.dot_dimension_numbers<[1], [0], [0], [1], [0, 0, 1, 1], [], []>} : vector<32x34xf32>, vector<34x16xf32>, vector<32x16xf32> -> vector<32x16xf32>
    %c0_17 = arith.constant 0 : index
    %c0_18 = arith.constant 0 : index
    %16 = vector.load %arg8[%c0_17, %c0_18] : memref<1x16xf32, #tpu.memory_space<vmem>>, vector<1x16xf32>
    %17 = vector.broadcast %16 : vector<1x16xf32> to vector<32x16xf32>
    %18 = arith.addf %15, %17 : vector<32x16xf32>
    %19 = arith.negf %18 : vector<32x16xf32>
    %20 = math.exp %19 : vector<32x16xf32>
    %cst_19 = arith.constant 1.000000e+00 : f32
    %21 = vector.broadcast %cst_19 : f32 to vector<32x16xf32>
    %22 = arith.addf %21, %20 : vector<32x16xf32>
    %23 = arith.divf %21, %22 : vector<32x16xf32>
    %c0_20 = arith.constant 0 : index
    %c0_21 = arith.constant 0 : index
    %24 = vector.load %arg9[%c0_20, %c0_21] : memref<16x2xf32, #tpu.memory_space<vmem>>, vector<16x2xf32>
    %cst_22 = arith.constant dense<0.000000e+00> : vector<32x2xf32>
    %25 = tpu.matmul %23, %24, %cst_22 {dimension_numbers = #tpu.dot_dimension_numbers<[1], [0], [0], [1], [0, 0, 1, 1], [], []>} : vector<32x16xf32>, vector<16x2xf32>, vector<32x2xf32> -> vector<32x2xf32>
    %c0_23 = arith.constant 0 : index
    %c0_24 = arith.constant 0 : index
    %26 = vector.load %arg10[%c0_23, %c0_24] : memref<1x2xf32, #tpu.memory_space<vmem>>, vector<1x2xf32>
    %27 = vector.broadcast %26 : vector<1x2xf32> to vector<32x2xf32>
    %28 = arith.addf %25, %27 : vector<32x2xf32>
    %29 = arith.negf %28 : vector<32x2xf32>
    %30 = math.exp %29 : vector<32x2xf32>
    %cst_25 = arith.constant 1.000000e+00 : f32
    %31 = vector.broadcast %cst_25 : f32 to vector<32x2xf32>
    %32 = arith.addf %31, %30 : vector<32x2xf32>
    %33 = arith.divf %31, %32 : vector<32x2xf32>
    %c0_26 = arith.constant 0 : index
    %c0_27 = arith.constant 0 : index
    %34 = vector.load %arg11[%c0_26, %c0_27] : memref<2x8xf32, #tpu.memory_space<vmem>>, vector<2x8xf32>
    %cst_28 = arith.constant dense<0.000000e+00> : vector<32x8xf32>
    %35 = tpu.matmul %33, %34, %cst_28 {dimension_numbers = #tpu.dot_dimension_numbers<[1], [0], [0], [1], [0, 0, 1, 1], [], []>} : vector<32x2xf32>, vector<2x8xf32>, vector<32x8xf32> -> vector<32x8xf32>
    %c0_29 = arith.constant 0 : index
    %c0_30 = arith.constant 0 : index
    %36 = vector.load %arg12[%c0_29, %c0_30] : memref<1x8xf32, #tpu.memory_space<vmem>>, vector<1x8xf32>
    %37 = vector.broadcast %36 : vector<1x8xf32> to vector<32x8xf32>
    %38 = arith.addf %35, %37 : vector<32x8xf32>
    %39 = arith.mulf %7, %38 : vector<32x8xf32>
    %40 = math.tanh %39 : vector<32x8xf32>
    %41 = vector.shape_cast %40 : vector<32x8xf32> to vector<2x16x8xf32>
    %42 = arith.truncf %41 : vector<2x16x8xf32> to vector<2x16x8xbf16>
    "tpu.trace_start"() <{level = 10 : i32, message = "bnd,bmd->bnm"}> : () -> ()
    %cst_31 = arith.constant dense<0.000000e+00> : vector<2x16x16xf32>
    %43 = tpu.matmul %42, %42, %cst_31 {dimension_numbers = #tpu.dot_dimension_numbers<[2], [2], [1], [1], [0, 0, 0, 1, 1, 1], [0], [0]>} : vector<2x16x8xbf16>, vector<2x16x8xbf16>, vector<2x16x16xf32> -> vector<2x16x16xf32>
    "tpu.trace_stop"() : () -> ()
    %cst_32 = arith.constant 0.000000e+00 : f32
    %44 = vector.broadcast %cst_32 : f32 to vector<2x16x16xf32>
    %45 = arith.maximumf %43, %44 : vector<2x16x16xf32>
    %cst_33 = arith.constant dense<0.000000e+00> : vector<2x16xf32>
    %46 = vector.multi_reduction <add>, %45, %cst_33 [2] : vector<2x16x16xf32> to vector<2x16xf32>
    %47 = vector.shape_cast %46 : vector<2x16xf32> to vector<2x16x1xf32>
    %cst_34 = arith.constant 1.000000e+00 : f32
    %48 = vector.broadcast %cst_34 : f32 to vector<2x16x1xf32>
    %49 = arith.addf %47, %48 : vector<2x16x1xf32>
    %50 = math.rsqrt %49 : vector<2x16x1xf32>
    %51 = vector.broadcast %50 : vector<2x16x1xf32> to vector<2x16x34xf32>
    %52 = arith.mulf %51, %12 : vector<2x16x34xf32>
    %53 = arith.truncf %45 : vector<2x16x16xf32> to vector<2x16x16xbf16>
    %54 = arith.truncf %52 : vector<2x16x34xf32> to vector<2x16x34xbf16>
    "tpu.trace_start"() <{level = 10 : i32, message = "bnm,bmc->bnc"}> : () -> ()
    %cst_35 = arith.constant dense<0.000000e+00> : vector<2x16x34xf32>
    %55 = tpu.matmul %53, %54, %cst_35 {dimension_numbers = #tpu.dot_dimension_numbers<[2], [1], [1], [2], [0, 0, 0, 1, 1, 2], [0], [0]>} : vector<2x16x16xbf16>, vector<2x16x34xbf16>, vector<2x16x34xf32> -> vector<2x16x34xf32>
    "tpu.trace_stop"() : () -> ()
    %56 = vector.broadcast %50 : vector<2x16x1xf32> to vector<2x16x34xf32>
    %57 = arith.mulf %56, %55 : vector<2x16x34xf32>
    %58 = vector.broadcast %50 : vector<2x16x1xf32> to vector<2x16x34xf32>
    %59 = arith.mulf %58, %52 : vector<2x16x34xf32>
    %60 = arith.addf %57, %59 : vector<2x16x34xf32>
    %61 = arith.truncf %13 : vector<32x34xf32> to vector<32x34xbf16>
    %62 = vector.shape_cast %60 : vector<2x16x34xf32> to vector<32x34xf32>
    %63 = arith.truncf %62 : vector<32x34xf32> to vector<32x34xbf16>
    %c0_36 = arith.constant 0 : index
    %c0_37 = arith.constant 0 : index
    %64 = vector.load %arg13[%c0_36, %c0_37] : memref<34x256xbf16, #tpu.memory_space<vmem>>, vector<34x256xbf16>
    %cst_38 = arith.constant dense<0.000000e+00> : vector<32x256xf32>
    %65 = tpu.matmul %61, %64, %cst_38 {dimension_numbers = #tpu.dot_dimension_numbers<[1], [0], [0], [1], [0, 0, 1, 1], [], []>} : vector<32x34xbf16>, vector<34x256xbf16>, vector<32x256xf32> -> vector<32x256xf32>
    %c0_39 = arith.constant 0 : index
    %c0_40 = arith.constant 0 : index
    %66 = vector.load %arg14[%c0_39, %c0_40] : memref<34x256xbf16, #tpu.memory_space<vmem>>, vector<34x256xbf16>
    %cst_41 = arith.constant dense<0.000000e+00> : vector<32x256xf32>
    %67 = tpu.matmul %63, %66, %cst_41 {dimension_numbers = #tpu.dot_dimension_numbers<[1], [0], [0], [1], [0, 0, 1, 1], [], []>} : vector<32x34xbf16>, vector<34x256xbf16>, vector<32x256xf32> -> vector<32x256xf32>
    %68 = arith.addf %65, %67 : vector<32x256xf32>
    %69 = arith.mulf %68, %8 : vector<32x256xf32>
    %cst_42 = arith.constant dense<0.000000e+00> : vector<32x32xf32>
    %70 = tpu.matmul %69, %9, %cst_42 {dimension_numbers = #tpu.dot_dimension_numbers<[1], [0], [0], [1], [0, 0, 1, 1], [], []>} : vector<32x256xf32>, vector<256x32xf32>, vector<32x32xf32> -> vector<32x32xf32>
    %c0_43 = arith.constant 0 : index
    %c0_44 = arith.constant 0 : index
    %71 = vector.load %arg15[%c0_43, %c0_44] : memref<32x32xf32, #tpu.memory_space<vmem>>, vector<32x32xf32>
    %72 = arith.addf %70, %71 : vector<32x32xf32>
    %73 = arith.negf %72 : vector<32x32xf32>
    %74 = math.exp %73 : vector<32x32xf32>
    %cst_45 = arith.constant 1.000000e+00 : f32
    %75 = vector.broadcast %cst_45 : f32 to vector<32x32xf32>
    %76 = arith.addf %75, %74 : vector<32x32xf32>
    %77 = arith.divf %75, %76 : vector<32x32xf32>
    %c0_46 = arith.constant 0 : index
    %c0_47 = arith.constant 0 : index
    %78 = vector.load %arg16[%c0_46, %c0_47] : memref<34x256xbf16, #tpu.memory_space<vmem>>, vector<34x256xbf16>
    %cst_48 = arith.constant dense<0.000000e+00> : vector<32x256xf32>
    %79 = tpu.matmul %61, %78, %cst_48 {dimension_numbers = #tpu.dot_dimension_numbers<[1], [0], [0], [1], [0, 0, 1, 1], [], []>} : vector<32x34xbf16>, vector<34x256xbf16>, vector<32x256xf32> -> vector<32x256xf32>
    %c0_49 = arith.constant 0 : index
    %c0_50 = arith.constant 0 : index
    %80 = vector.load %arg17[%c0_49, %c0_50] : memref<34x256xbf16, #tpu.memory_space<vmem>>, vector<34x256xbf16>
    %cst_51 = arith.constant dense<0.000000e+00> : vector<32x256xf32>
    %81 = tpu.matmul %63, %80, %cst_51 {dimension_numbers = #tpu.dot_dimension_numbers<[1], [0], [0], [1], [0, 0, 1, 1], [], []>} : vector<32x34xbf16>, vector<34x256xbf16>, vector<32x256xf32> -> vector<32x256xf32>
    %82 = arith.addf %79, %81 : vector<32x256xf32>
    %83 = arith.mulf %82, %8 : vector<32x256xf32>
    %cst_52 = arith.constant dense<0.000000e+00> : vector<32x32xf32>
    %84 = tpu.matmul %83, %9, %cst_52 {dimension_numbers = #tpu.dot_dimension_numbers<[1], [0], [0], [1], [0, 0, 1, 1], [], []>} : vector<32x256xf32>, vector<256x32xf32>, vector<32x32xf32> -> vector<32x32xf32>
    %c0_53 = arith.constant 0 : index
    %c0_54 = arith.constant 0 : index
    %85 = vector.load %arg18[%c0_53, %c0_54] : memref<32x32xf32, #tpu.memory_space<vmem>>, vector<32x32xf32>
    %86 = arith.addf %84, %85 : vector<32x32xf32>
    %87 = arith.negf %86 : vector<32x32xf32>
    %88 = math.exp %87 : vector<32x32xf32>
    %cst_55 = arith.constant 1.000000e+00 : f32
    %89 = vector.broadcast %cst_55 : f32 to vector<32x32xf32>
    %90 = arith.addf %89, %88 : vector<32x32xf32>
    %91 = arith.divf %89, %90 : vector<32x32xf32>
    %92 = arith.mulf %77, %11 : vector<32x32xf32>
    %93 = vector.shape_cast %92 : vector<32x32xf32> to vector<2x16x32xf32>
    %94 = tpu.concatenate %4, %93 in 2 : vector<2x16x2xf32>, vector<2x16x32xf32> -> vector<2x16x34xf32>
    %95 = vector.shape_cast %94 : vector<2x16x34xf32> to vector<32x34xf32>
    %c0_56 = arith.constant 0 : index
    %c0_57 = arith.constant 0 : index
    %96 = vector.load %arg19[%c0_56, %c0_57] : memref<34x16xf32, #tpu.memory_space<vmem>>, vector<34x16xf32>
    %cst_58 = arith.constant dense<0.000000e+00> : vector<32x16xf32>
    %97 = tpu.matmul %95, %96, %cst_58 {dimension_numbers = #tpu.dot_dimension_numbers<[1], [0], [0], [1], [0, 0, 1, 1], [], []>} : vector<32x34xf32>, vector<34x16xf32>, vector<32x16xf32> -> vector<32x16xf32>
    %c0_59 = arith.constant 0 : index
    %c0_60 = arith.constant 0 : index
    %98 = vector.load %arg20[%c0_59, %c0_60] : memref<1x16xf32, #tpu.memory_space<vmem>>, vector<1x16xf32>
    %99 = vector.broadcast %98 : vector<1x16xf32> to vector<32x16xf32>
    %100 = arith.addf %97, %99 : vector<32x16xf32>
    %101 = arith.negf %100 : vector<32x16xf32>
    %102 = math.exp %101 : vector<32x16xf32>
    %cst_61 = arith.constant 1.000000e+00 : f32
    %103 = vector.broadcast %cst_61 : f32 to vector<32x16xf32>
    %104 = arith.addf %103, %102 : vector<32x16xf32>
    %105 = arith.divf %103, %104 : vector<32x16xf32>
    %c0_62 = arith.constant 0 : index
    %c0_63 = arith.constant 0 : index
    %106 = vector.load %arg21[%c0_62, %c0_63] : memref<16x2xf32, #tpu.memory_space<vmem>>, vector<16x2xf32>
    %cst_64 = arith.constant dense<0.000000e+00> : vector<32x2xf32>
    %107 = tpu.matmul %105, %106, %cst_64 {dimension_numbers = #tpu.dot_dimension_numbers<[1], [0], [0], [1], [0, 0, 1, 1], [], []>} : vector<32x16xf32>, vector<16x2xf32>, vector<32x2xf32> -> vector<32x2xf32>
    %c0_65 = arith.constant 0 : index
    %c0_66 = arith.constant 0 : index
    %108 = vector.load %arg22[%c0_65, %c0_66] : memref<1x2xf32, #tpu.memory_space<vmem>>, vector<1x2xf32>
    %109 = vector.broadcast %108 : vector<1x2xf32> to vector<32x2xf32>
    %110 = arith.addf %107, %109 : vector<32x2xf32>
    %111 = arith.negf %110 : vector<32x2xf32>
    %112 = math.exp %111 : vector<32x2xf32>
    %cst_67 = arith.constant 1.000000e+00 : f32
    %113 = vector.broadcast %cst_67 : f32 to vector<32x2xf32>
    %114 = arith.addf %113, %112 : vector<32x2xf32>
    %115 = arith.divf %113, %114 : vector<32x2xf32>
    %c0_68 = arith.constant 0 : index
    %c0_69 = arith.constant 0 : index
    %116 = vector.load %arg23[%c0_68, %c0_69] : memref<2x8xf32, #tpu.memory_space<vmem>>, vector<2x8xf32>
    %cst_70 = arith.constant dense<0.000000e+00> : vector<32x8xf32>
    %117 = tpu.matmul %115, %116, %cst_70 {dimension_numbers = #tpu.dot_dimension_numbers<[1], [0], [0], [1], [0, 0, 1, 1], [], []>} : vector<32x2xf32>, vector<2x8xf32>, vector<32x8xf32> -> vector<32x8xf32>
    %c0_71 = arith.constant 0 : index
    %c0_72 = arith.constant 0 : index
    %118 = vector.load %arg24[%c0_71, %c0_72] : memref<1x8xf32, #tpu.memory_space<vmem>>, vector<1x8xf32>
    %119 = vector.broadcast %118 : vector<1x8xf32> to vector<32x8xf32>
    %120 = arith.addf %117, %119 : vector<32x8xf32>
    %121 = arith.mulf %7, %120 : vector<32x8xf32>
    %122 = math.tanh %121 : vector<32x8xf32>
    %123 = vector.shape_cast %122 : vector<32x8xf32> to vector<2x16x8xf32>
    %124 = arith.truncf %123 : vector<2x16x8xf32> to vector<2x16x8xbf16>
    "tpu.trace_start"() <{level = 10 : i32, message = "bnd,bmd->bnm"}> : () -> ()
    %cst_73 = arith.constant dense<0.000000e+00> : vector<2x16x16xf32>
    %125 = tpu.matmul %124, %124, %cst_73 {dimension_numbers = #tpu.dot_dimension_numbers<[2], [2], [1], [1], [0, 0, 0, 1, 1, 1], [0], [0]>} : vector<2x16x8xbf16>, vector<2x16x8xbf16>, vector<2x16x16xf32> -> vector<2x16x16xf32>
    "tpu.trace_stop"() : () -> ()
    %cst_74 = arith.constant 0.000000e+00 : f32
    %126 = vector.broadcast %cst_74 : f32 to vector<2x16x16xf32>
    %127 = arith.maximumf %125, %126 : vector<2x16x16xf32>
    %cst_75 = arith.constant dense<0.000000e+00> : vector<2x16xf32>
    %128 = vector.multi_reduction <add>, %127, %cst_75 [2] : vector<2x16x16xf32> to vector<2x16xf32>
    %129 = vector.shape_cast %128 : vector<2x16xf32> to vector<2x16x1xf32>
    %cst_76 = arith.constant 1.000000e+00 : f32
    %130 = vector.broadcast %cst_76 : f32 to vector<2x16x1xf32>
    %131 = arith.addf %129, %130 : vector<2x16x1xf32>
    %132 = math.rsqrt %131 : vector<2x16x1xf32>
    %133 = vector.broadcast %132 : vector<2x16x1xf32> to vector<2x16x34xf32>
    %134 = arith.mulf %133, %94 : vector<2x16x34xf32>
    %135 = arith.truncf %127 : vector<2x16x16xf32> to vector<2x16x16xbf16>
    %136 = arith.truncf %134 : vector<2x16x34xf32> to vector<2x16x34xbf16>
    "tpu.trace_start"() <{level = 10 : i32, message = "bnm,bmc->bnc"}> : () -> ()
    %cst_77 = arith.constant dense<0.000000e+00> : vector<2x16x34xf32>
    %137 = tpu.matmul %135, %136, %cst_77 {dimension_numbers = #tpu.dot_dimension_numbers<[2], [1], [1], [2], [0, 0, 0, 1, 1, 2], [0], [0]>} : vector<2x16x16xbf16>, vector<2x16x34xbf16>, vector<2x16x34xf32> -> vector<2x16x34xf32>
    "tpu.trace_stop"() : () -> ()
    %138 = vector.broadcast %132 : vector<2x16x1xf32> to vector<2x16x34xf32>
    %139 = arith.mulf %138, %137 : vector<2x16x34xf32>
    %140 = vector.broadcast %132 : vector<2x16x1xf32> to vector<2x16x34xf32>
    %141 = arith.mulf %140, %134 : vector<2x16x34xf32>
    %142 = arith.addf %139, %141 : vector<2x16x34xf32>
    %143 = arith.truncf %95 : vector<32x34xf32> to vector<32x34xbf16>
    %144 = vector.shape_cast %142 : vector<2x16x34xf32> to vector<32x34xf32>
    %145 = arith.truncf %144 : vector<32x34xf32> to vector<32x34xbf16>
    %c0_78 = arith.constant 0 : index
    %c0_79 = arith.constant 0 : index
    %146 = vector.load %arg25[%c0_78, %c0_79] : memref<34x256xbf16, #tpu.memory_space<vmem>>, vector<34x256xbf16>
    %cst_80 = arith.constant dense<0.000000e+00> : vector<32x256xf32>
    %147 = tpu.matmul %143, %146, %cst_80 {dimension_numbers = #tpu.dot_dimension_numbers<[1], [0], [0], [1], [0, 0, 1, 1], [], []>} : vector<32x34xbf16>, vector<34x256xbf16>, vector<32x256xf32> -> vector<32x256xf32>
    %c0_81 = arith.constant 0 : index
    %c0_82 = arith.constant 0 : index
    %148 = vector.load %arg26[%c0_81, %c0_82] : memref<34x256xbf16, #tpu.memory_space<vmem>>, vector<34x256xbf16>
    %cst_83 = arith.constant dense<0.000000e+00> : vector<32x256xf32>
    %149 = tpu.matmul %145, %148, %cst_83 {dimension_numbers = #tpu.dot_dimension_numbers<[1], [0], [0], [1], [0, 0, 1, 1], [], []>} : vector<32x34xbf16>, vector<34x256xbf16>, vector<32x256xf32> -> vector<32x256xf32>
    %150 = arith.addf %147, %149 : vector<32x256xf32>
    %151 = arith.mulf %150, %8 : vector<32x256xf32>
    %cst_84 = arith.constant dense<0.000000e+00> : vector<32x32xf32>
    %152 = tpu.matmul %151, %9, %cst_84 {dimension_numbers = #tpu.dot_dimension_numbers<[1], [0], [0], [1], [0, 0, 1, 1], [], []>} : vector<32x256xf32>, vector<256x32xf32>, vector<32x32xf32> -> vector<32x32xf32>
    %c0_85 = arith.constant 0 : index
    %c0_86 = arith.constant 0 : index
    %153 = vector.load %arg27[%c0_85, %c0_86] : memref<32x32xf32, #tpu.memory_space<vmem>>, vector<32x32xf32>
    %154 = arith.addf %152, %153 : vector<32x32xf32>
    %155 = math.tanh %154 : vector<32x32xf32>
    %156 = arith.mulf %91, %11 : vector<32x32xf32>
    %cst_87 = arith.constant 1.000000e+00 : f32
    %157 = vector.broadcast %cst_87 : f32 to vector<32x32xf32>
    %158 = arith.subf %157, %91 : vector<32x32xf32>
    %159 = arith.mulf %158, %155 : vector<32x32xf32>
    %160 = arith.addf %156, %159 : vector<32x32xf32>
    %161 = vector.shape_cast %160 : vector<32x32xf32> to vector<2x16x32xf32>
    %c0_88 = arith.constant 0 : index
    %c0_89 = arith.constant 0 : index
    %c0_90 = arith.constant 0 : index
    %162 = vector.load %arg29[%c0_88, %c0_89, %c0_90] : memref<2x16x32xf32, #tpu.memory_space<vmem>>, vector<2x16x32xf32>
    tpu.vector_store %arg29[%c0_88, %c0_89, %c0_90], %161 {strides = array<i32>} : memref<2x16x32xf32, #tpu.memory_space<vmem>>, vector<2x16x32xf32>,
    %c0_91 = arith.constant 0 : index
    %c0_92 = arith.constant 0 : index
    %c0_93 = arith.constant 0 : index
    %c0_94 = arith.constant 0 : index
    %163 = vector.load %arg28[%c0_91, %c0_92, %c0_93, %c0_94] : memref<1x2x16x32xf32, #tpu.memory_space<vmem>>, vector<1x2x16x32xf32>
    %164 = vector.shape_cast %163 : vector<1x2x16x32xf32> to vector<2x16x32xf32>
    %165 = vector.shape_cast %161 : vector<2x16x32xf32> to vector<1x2x16x32xf32>
    tpu.vector_store %arg28[%c0_91, %c0_92, %c0_93, %c0_94], %165 {strides = array<i32>} : memref<1x2x16x32xf32, #tpu.memory_space<vmem>>, vector<1x2x16x32xf32>,
    return
  }
  func.func @transform_0(%arg0: i32, %arg1: i32) -> (i32, i32, i32, i32) {
    %c0_i32 = arith.constant 0 : i32
    %c0_i32_0 = arith.constant 0 : i32
    %c0_i32_1 = arith.constant 0 : i32
    return %arg1, %arg0, %c0_i32, %c0_i32_0 : i32, i32, i32, i32
  }
  func.func @transform_1(%arg0: i32, %arg1: i32) -> (i32, i32, i32) {
    %c0_i32 = arith.constant 0 : i32
    %c0_i32_0 = arith.constant 0 : i32
    %c0_i32_1 = arith.constant 0 : i32
    return %arg0, %c0_i32, %c0_i32_0 : i32, i32, i32
  }
  func.func @transform_2(%arg0: i32, %arg1: i32) -> (i32, i32, i32, i32) {
    %c0_i32 = arith.constant 0 : i32
    %c0_i32_0 = arith.constant 0 : i32
    %c0_i32_1 = arith.constant 0 : i32
    return %arg1, %arg0, %c0_i32, %c0_i32_0 : i32, i32, i32, i32
  }
  func.func @transform_3(%arg0: i32, %arg1: i32) -> (i32, i32) {
    %c0_i32 = arith.constant 0 : i32
    %c0_i32_0 = arith.constant 0 : i32
    %c0_i32_1 = arith.constant 0 : i32
    return %c0_i32, %c0_i32_0 : i32, i32
  }
  func.func @transform_4(%arg0: i32, %arg1: i32) -> (i32, i32) {
    %c0_i32 = arith.constant 0 : i32
    %c0_i32_0 = arith.constant 0 : i32
    %c0_i32_1 = arith.constant 0 : i32
    return %c0_i32, %c0_i32_0 : i32, i32
  }
  func.func @transform_5(%arg0: i32, %arg1: i32) -> (i32, i32) {
    %c0_i32 = arith.constant 0 : i32
    %c0_i32_0 = arith.constant 0 : i32
    %c0_i32_1 = arith.constant 0 : i32
    return %c0_i32, %c0_i32_0 : i32, i32
  }
  func.func @transform_6(%arg0: i32, %arg1: i32) -> (i32, i32) {
    %c0_i32 = arith.constant 0 : i32
    %c0_i32_0 = arith.constant 0 : i32
    %c0_i32_1 = arith.constant 0 : i32
    return %c0_i32, %c0_i32_0 : i32, i32
  }
  func.func @transform_7(%arg0: i32, %arg1: i32) -> (i32, i32) {
    %c0_i32 = arith.constant 0 : i32
    %c0_i32_0 = arith.constant 0 : i32
    %c0_i32_1 = arith.constant 0 : i32
    return %c0_i32, %c0_i32_0 : i32, i32
  }
  func.func @transform_8(%arg0: i32, %arg1: i32) -> (i32, i32) {
    %c0_i32 = arith.constant 0 : i32
    %c0_i32_0 = arith.constant 0 : i32
    %c0_i32_1 = arith.constant 0 : i32
    return %c0_i32, %c0_i32_0 : i32, i32
  }
  func.func @transform_9(%arg0: i32, %arg1: i32) -> (i32, i32) {
    %c0_i32 = arith.constant 0 : i32
    %c0_i32_0 = arith.constant 0 : i32
    %c0_i32_1 = arith.constant 0 : i32
    return %c0_i32, %c0_i32_0 : i32, i32
  }
  func.func @transform_10(%arg0: i32, %arg1: i32) -> (i32, i32) {
    %c0_i32 = arith.constant 0 : i32
    %c0_i32_0 = arith.constant 0 : i32
    %c0_i32_1 = arith.constant 0 : i32
    return %c0_i32, %c0_i32_0 : i32, i32
  }
  func.func @transform_11(%arg0: i32, %arg1: i32) -> (i32, i32) {
    %c0_i32 = arith.constant 0 : i32
    %c0_i32_0 = arith.constant 0 : i32
    %c0_i32_1 = arith.constant 0 : i32
    return %c0_i32, %c0_i32_0 : i32, i32
  }
  func.func @transform_12(%arg0: i32, %arg1: i32) -> (i32, i32) {
    %c0_i32 = arith.constant 0 : i32
    %c0_i32_0 = arith.constant 0 : i32
    %c0_i32_1 = arith.constant 0 : i32
    return %c0_i32, %c0_i32_0 : i32, i32
  }
  func.func @transform_13(%arg0: i32, %arg1: i32) -> (i32, i32) {
    %c0_i32 = arith.constant 0 : i32
    %c0_i32_0 = arith.constant 0 : i32
    %c0_i32_1 = arith.constant 0 : i32
    return %c0_i32, %c0_i32_0 : i32, i32
  }
  func.func @transform_14(%arg0: i32, %arg1: i32) -> (i32, i32) {
    %c0_i32 = arith.constant 0 : i32
    %c0_i32_0 = arith.constant 0 : i32
    %c0_i32_1 = arith.constant 0 : i32
    return %c0_i32, %c0_i32_0 : i32, i32
  }
  func.func @transform_15(%arg0: i32, %arg1: i32) -> (i32, i32) {
    %c0_i32 = arith.constant 0 : i32
    %c0_i32_0 = arith.constant 0 : i32
    %c0_i32_1 = arith.constant 0 : i32
    return %c0_i32, %c0_i32_0 : i32, i32
  }
  func.func @transform_16(%arg0: i32, %arg1: i32) -> (i32, i32) {
    %c0_i32 = arith.constant 0 : i32
    %c0_i32_0 = arith.constant 0 : i32
    %c0_i32_1 = arith.constant 0 : i32
    return %c0_i32, %c0_i32_0 : i32, i32
  }
  func.func @transform_17(%arg0: i32, %arg1: i32) -> (i32, i32) {
    %c0_i32 = arith.constant 0 : i32
    %c0_i32_0 = arith.constant 0 : i32
    %c0_i32_1 = arith.constant 0 : i32
    return %c0_i32, %c0_i32_0 : i32, i32
  }
  func.func @transform_18(%arg0: i32, %arg1: i32) -> (i32, i32) {
    %c0_i32 = arith.constant 0 : i32
    %c0_i32_0 = arith.constant 0 : i32
    %c0_i32_1 = arith.constant 0 : i32
    return %c0_i32, %c0_i32_0 : i32, i32
  }
  func.func @transform_19(%arg0: i32, %arg1: i32) -> (i32, i32) {
    %c0_i32 = arith.constant 0 : i32
    %c0_i32_0 = arith.constant 0 : i32
    %c0_i32_1 = arith.constant 0 : i32
    return %c0_i32, %c0_i32_0 : i32, i32
  }
  func.func @transform_20(%arg0: i32, %arg1: i32) -> (i32, i32) {
    %c0_i32 = arith.constant 0 : i32
    %c0_i32_0 = arith.constant 0 : i32
    %c0_i32_1 = arith.constant 0 : i32
    return %c0_i32, %c0_i32_0 : i32, i32
  }
  func.func @transform_21(%arg0: i32, %arg1: i32) -> (i32, i32) {
    %c0_i32 = arith.constant 0 : i32
    %c0_i32_0 = arith.constant 0 : i32
    %c0_i32_1 = arith.constant 0 : i32
    return %c0_i32, %c0_i32_0 : i32, i32
  }
  func.func @transform_22(%arg0: i32, %arg1: i32) -> (i32, i32) {
    %c0_i32 = arith.constant 0 : i32
    %c0_i32_0 = arith.constant 0 : i32
    %c0_i32_1 = arith.constant 0 : i32
    return %c0_i32, %c0_i32_0 : i32, i32
  }
  func.func @transform_23(%arg0: i32, %arg1: i32) -> (i32, i32) {
    %c0_i32 = arith.constant 0 : i32
    %c0_i32_0 = arith.constant 0 : i32
    %c0_i32_1 = arith.constant 0 : i32
    return %c0_i32, %c0_i32_0 : i32, i32
  }
  func.func @transform_24(%arg0: i32, %arg1: i32) -> (i32, i32) {
    %c0_i32 = arith.constant 0 : i32
    %c0_i32_0 = arith.constant 0 : i32
    %c0_i32_1 = arith.constant 0 : i32
    return %c0_i32, %c0_i32_0 : i32, i32
  }
  func.func @transform_25(%arg0: i32, %arg1: i32) -> (i32, i32) {
    %c0_i32 = arith.constant 0 : i32
    %c0_i32_0 = arith.constant 0 : i32
    %c0_i32_1 = arith.constant 0 : i32
    return %c0_i32, %c0_i32_0 : i32, i32
  }
  func.func @transform_26(%arg0: i32, %arg1: i32) -> (i32, i32, i32, i32) {
    %c0_i32 = arith.constant 0 : i32
    %c0_i32_0 = arith.constant 0 : i32
    %c0_i32_1 = arith.constant 0 : i32
    return %arg1, %arg0, %c0_i32, %c0_i32_0 : i32, i32, i32, i32
  }
}

</mosaic_0001>

<llo_original>
// kernel: dgcrm_forward.1
$region0: #{dgcrm_forward.1}
  #allocation0 [shape = 'u32[]', space=smem, size = 0x4, offset = 0x4, fixed_abs, tag = 'smem constant byte address 0x4 - core index']
  #allocation1 [shape = 'u32[144,128]{1,0:T(1,128)}', space=vmem, size = 0x12000, scoped, tag = 'internal scratch']
  #allocation2 [shape = 'f32[2,16,32]{2,1,0:T(8,128)}', space=vmem, size = 0x4000, scoped, tag = 'scratch operand']
  %s0 = inlined_call_operand.vmem [shape: f32[8,2,16,2], index: 0, kind: input, shape index: {}]
  %s1 = inlined_call_operand.vmem [shape: f32[2,16,32], index: 1, kind: input, shape index: {}]
  %s2 = inlined_call_operand.vmem [shape: f32[8,2,16,8], index: 2, kind: input, shape index: {}]
  %s3 = inlined_call_operand.vmem [shape: f32[32,256], index: 3, kind: input, shape index: {}]
  %s4 = inlined_call_operand.vmem [shape: f32[256,32], index: 4, kind: input, shape index: {}]
  %s5 = inlined_call_operand.vmem [shape: f32[34,16], index: 5, kind: input, shape index: {}]
  %s6 = inlined_call_operand.vmem [shape: f32[1,16], index: 6, kind: input, shape index: {}]
  %s7 = inlined_call_operand.vmem [shape: f32[16,2], index: 7, kind: input, shape index: {}]
  %s8 = inlined_call_operand.vmem [shape: f32[1,2], index: 8, kind: input, shape index: {}]
  %s9 = inlined_call_operand.vmem [shape: f32[2,8], index: 9, kind: input, shape index: {}]
  %s10 = inlined_call_operand.vmem [shape: f32[1,8], index: 10, kind: input, shape index: {}]
  %s11 = inlined_call_operand.vmem [shape: bf16[34,256], index: 11, kind: input, shape index: {}]
  %s12 = inlined_call_operand.vmem [shape: bf16[34,256], index: 12, kind: input, shape index: {}]
  %s13 = inlined_call_operand.vmem [shape: f32[32,32], index: 13, kind: input, shape index: {}]
  %s14 = inlined_call_operand.vmem [shape: bf16[34,256], index: 14, kind: input, shape index: {}]
  %s15 = inlined_call_operand.vmem [shape: bf16[34,256], index: 15, kind: input, shape index: {}]
  %s16 = inlined_call_operand.vmem [shape: f32[32,32], index: 16, kind: input, shape index: {}]
  %s17 = inlined_call_operand.vmem [shape: f32[34,16], index: 17, kind: input, shape index: {}]
  %s18 = inlined_call_operand.vmem [shape: f32[1,16], index: 18, kind: input, shape index: {}]
  %s19 = inlined_call_operand.vmem [shape: f32[16,2], index: 19, kind: input, shape index: {}]
  %s20 = inlined_call_operand.vmem [shape: f32[1,2], index: 20, kind: input, shape index: {}]
  %s21 = inlined_call_operand.vmem [shape: f32[2,8], index: 21, kind: input, shape index: {}]
  %s22 = inlined_call_operand.vmem [shape: f32[1,8], index: 22, kind: input, shape index: {}]
  %s23 = inlined_call_operand.vmem [shape: bf16[34,256], index: 23, kind: input, shape index: {}]
  %s24 = inlined_call_operand.vmem [shape: bf16[34,256], index: 24, kind: input, shape index: {}]
  %s25 = inlined_call_operand.vmem [shape: f32[32,32], index: 25, kind: input, shape index: {}]
  %s26 = inlined_call_operand.vmem [shape: f32[8,2,16,32], index: 26, kind: output, shape index: {}]
  %s27 = sld [smem:[#allocation0]]
  $region141: #{dgcrm_forward.1} parent=0
    _
  %s29 = ssub.s32 1, %s27
  %s30 = scalar_select 0, %s29, %s27
  loop: start=0, step=1, limit=10
  $region2: #{dgcrm_forward.1} parent=0 // loop_pre_header
    _
  $region3: #{dgcrm_forward.1} parent=0 // loop_header
    %s32 = sphi 0, %s36
    %p33 = scmp.ge.s32.totalorder %s32, 10
    %s39 = sphi 0, %s51
    %s40 = sphi 0, %s47
    %s41 = sphi 0, %s39
    %s42 = sphi 0, %s40
    %s43 = sphi 0, %s41
    %s44 = sphi 0, %s42
    %s56 = sphi 0, %s58
    %s59 = sphi 0, %s56
    %s60 = sphi 0, %s59
    %s76 = sphi 0, %s60
    %s82 = sphi 0, %s84
    %s85 = sphi 0, %s82
    %s86 = sphi 0, %s85
    %s102 = sphi 0, %s86
    %s110 = sphi 0, %s112
    %s113 = sphi 0, %s110
    %s114 = sphi 0, %s113
    %s130 = sphi 0, %s114
    %s134 = sphi 0, %s134
    %s136 = sphi 0, %s134
    %s137 = sphi 0, %s136
    %s151 = sphi 0, %s137
    %s155 = sphi 0, %s155
    %s157 = sphi 0, %s155
    %s158 = sphi 0, %s157
    %s172 = sphi 0, %s158
    %s176 = sphi 0, %s176
    %s178 = sphi 0, %s176
    %s179 = sphi 0, %s178
    %s193 = sphi 0, %s179
    %s197 = sphi 0, %s197
    %s199 = sphi 0, %s197
    %s200 = sphi 0, %s199
    %s214 = sphi 0, %s200
    %s218 = sphi 0, %s218
    %s220 = sphi 0, %s218
    %s221 = sphi 0, %s220
    %s235 = sphi 0, %s221
    %s239 = sphi 0, %s239
    %s241 = sphi 0, %s239
    %s242 = sphi 0, %s241
    %s256 = sphi 0, %s242
    %s260 = sphi 0, %s260
    %s262 = sphi 0, %s260
    %s263 = sphi 0, %s262
    %s277 = sphi 0, %s263
    %s281 = sphi 0, %s281
    %s283 = sphi 0, %s281
    %s284 = sphi 0, %s283
    %s298 = sphi 0, %s284
    %s302 = sphi 0, %s302
    %s304 = sphi 0, %s302
    %s305 = sphi 0, %s304
    %s319 = sphi 0, %s305
    %s323 = sphi 0, %s323
    %s325 = sphi 0, %s323
    %s326 = sphi 0, %s325
    %s340 = sphi 0, %s326
    %s344 = sphi 0, %s344
    %s346 = sphi 0, %s344
    %s347 = sphi 0, %s346
    %s361 = sphi 0, %s347
    %s365 = sphi 0, %s365
    %s367 = sphi 0, %s365
    %s368 = sphi 0, %s367
    %s382 = sphi 0, %s368
    %s386 = sphi 0, %s386
    %s388 = sphi 0, %s386
    %s389 = sphi 0, %s388
    %s403 = sphi 0, %s389
    %s407 = sphi 0, %s407
    %s409 = sphi 0, %s407
    %s410 = sphi 0, %s409
    %s424 = sphi 0, %s410
    %s428 = sphi 0, %s428
    %s430 = sphi 0, %s428
    %s431 = sphi 0, %s430
    %s445 = sphi 0, %s431
    %s449 = sphi 0, %s449
    %s451 = sphi 0, %s449
    %s452 = sphi 0, %s451
    %s466 = sphi 0, %s452
    %s470 = sphi 0, %s470
    %s472 = sphi 0, %s470
    %s473 = sphi 0, %s472
    %s487 = sphi 0, %s473
    %s491 = sphi 0, %s491
    %s493 = sphi 0, %s491
    %s494 = sphi 0, %s493
    %s508 = sphi 0, %s494
    %s512 = sphi 0, %s512
    %s514 = sphi 0, %s512
    %s515 = sphi 0, %s514
    %s529 = sphi 0, %s515
    %s533 = sphi 0, %s533
    %s535 = sphi 0, %s533
    %s536 = sphi 0, %s535
    %s550 = sphi 0, %s536
    %s554 = sphi 0, %s554
    %s556 = sphi 0, %s554
    %s557 = sphi 0, %s556
    %s571 = sphi 0, %s557
    %s575 = sphi 0, %s575
    %s577 = sphi 0, %s575
    %s578 = sphi 0, %s577
    %s592 = sphi 0, %s578
    %s596 = sphi 0, %s596
    %s598 = sphi 0, %s596
    %s599 = sphi 0, %s598
    %s613 = sphi 0, %s599
    %s621 = sphi 0, %s623
    %s624 = sphi 0, %s621
    %s625 = sphi 0, %s624
    %s641 = sphi 0, %s625
  $region4: #{dgcrm_forward.1} parent=0 // loop_header_branch
    %35 = sbr.rel (%p33) target = $region8
  $region5: #{dgcrm_forward.1} parent=0 // loop_body
    %s37 = ssub.s32 %s32, 1
    %s38 = ssub.s32 %s32, 2
    %s45 = sadd.s32 1, %s40
    %p46 = scmp.ge.s32.totalorder %s45, 8
    %s47 = scalar_select %p46, 0, %s45
    %s48 = sadd.s32 1, %s39
    %s49 = scalar_select %p46, %s48, %s39
    %p50 = scmp.ge.s32.totalorder %s49, 1
    %s51 = scalar_select %p50, 0, %s49
    %s52 = ssub.s32 %s40, %s47
    %s53 = ssub.s32 %s39, %s51
    %s54 = sor.u32 %s52, %s53
    %p55 = scmp.eq.s32.totalorder %s54, 0
    %s57 = sadd.s32 %s56, 1
    %s58 = scalar_select %p55, %s56, %s57
    %p61 = pneg %p55
    %p62 = scmp.eq.s32.totalorder %s32, 7
    %p63 = por %p61, %p62
    %p64 = scmp.ne.s32.totalorder %s56, %s59
    %p65 = scmp.eq.s32.totalorder %s32, 0
    %p66 = por %p64, %p65
    %p67 = scmp.ne.s32.totalorder %s56, %s59
    %p68 = scmp.eq.s32.totalorder %s37, 7
    %p69 = por %p67, %p68
    %p70 = scmp.ne.s32.totalorder %s59, %s60
    %p71 = scmp.eq.s32.totalorder %s37, 0
    %p72 = por %p70, %p71
    %p73 = scmp.ne.s32.totalorder %s59, %s60
    %p74 = scmp.eq.s32.totalorder %s38, 7
    %p75 = por %p73, %p74
    %p77 = scmp.ne.s32.totalorder %s60, %s76
    %p78 = scmp.eq.s32.totalorder %s38, 0
    %p79 = por %p77, %p78
    %s80 = ssub.s32 %s39, %s51
    %p81 = scmp.eq.s32.totalorder %s80, 0
    %s83 = sadd.s32 %s82, 1
    %s84 = scalar_select %p81, %s82, %s83
    %p87 = pneg %p81
    %p88 = scmp.eq.s32.totalorder %s32, 7
    %p89 = por %p87, %p88
    %p90 = scmp.ne.s32.totalorder %s82, %s85
    %p91 = scmp.eq.s32.totalorder %s32, 0
    %p92 = por %p90, %p91
    %p93 = scmp.ne.s32.totalorder %s82, %s85
    %p94 = scmp.eq.s32.totalorder %s37, 7
    %p95 = por %p93, %p94
    %p96 = scmp.ne.s32.totalorder %s85, %s86
    %p97 = scmp.eq.s32.totalorder %s37, 0
    %p98 = por %p96, %p97
    %p99 = scmp.ne.s32.totalorder %s85, %s86
    %p100 = scmp.eq.s32.totalorder %s38, 7
    %p101 = por %p99, %p100
    %p103 = scmp.ne.s32.totalorder %s86, %s102
    %p104 = scmp.eq.s32.totalorder %s38, 0
    %p105 = por %p103, %p104
    %s106 = ssub.s32 %s40, %s47
    %s107 = ssub.s32 %s39, %s51
    %s108 = sor.u32 %s106, %s107
    %p109 = scmp.eq.s32.totalorder %s108, 0
    %s111 = sadd.s32 %s110, 1
    %s112 = scalar_select %p109, %s110, %s111
    %p115 = pneg %p109
    %p116 = scmp.eq.s32.totalorder %s32, 7
    %p117 = por %p115, %p116
    %p118 = scmp.ne.s32.totalorder %s110, %s113
    %p119 = scmp.eq.s32.totalorder %s32, 0
    %p120 = por %p118, %p119
    %p121 = scmp.ne.s32.totalorder %s110, %s113
    %p122 = scmp.eq.s32.totalorder %s37, 7
    %p123 = por %p121, %p122
    %p124 = scmp.ne.s32.totalorder %s113, %s114
    %p125 = scmp.eq.s32.totalorder %s37, 0
    %p126 = por %p124, %p125
    %p127 = scmp.ne.s32.totalorder %s113, %s114
    %p128 = scmp.eq.s32.totalorder %s38, 7
    %p129 = por %p127, %p128
    %p131 = scmp.ne.s32.totalorder %s114, %s130
    %p132 = scmp.eq.s32.totalorder %s38, 0
    %p133 = por %p131, %p132
    %s135 = sadd.s32 %s134, 1
    %p138 = scmp.eq.s32.totalorder %s32, 7
    %p139 = scmp.ne.s32.totalorder %s134, %s136
    %p140 = scmp.eq.s32.totalorder %s32, 0
    %p141 = por %p139, %p140
    %p142 = scmp.ne.s32.totalorder %s134, %s136
    %p143 = scmp.eq.s32.totalorder %s37, 7
    %p144 = por %p142, %p143
    %p145 = scmp.ne.s32.totalorder %s136, %s137
    %p146 = scmp.eq.s32.totalorder %s37, 0
    %p147 = por %p145, %p146
    %p148 = scmp.ne.s32.totalorder %s136, %s137
    %p149 = scmp.eq.s32.totalorder %s38, 7
    %p150 = por %p148, %p149
    %p152 = scmp.ne.s32.totalorder %s137, %s151
    %p153 = scmp.eq.s32.totalorder %s38, 0
    %p154 = por %p152, %p153
    %s156 = sadd.s32 %s155, 1
    %p159 = scmp.eq.s32.totalorder %s32, 7
    %p160 = scmp.ne.s32.totalorder %s155, %s157
    %p161 = scmp.eq.s32.totalorder %s32, 0
    %p162 = por %p160, %p161
    %p163 = scmp.ne.s32.totalorder %s155, %s157
    %p164 = scmp.eq.s32.totalorder %s37, 7
    %p165 = por %p163, %p164
    %p166 = scmp.ne.s32.totalorder %s157, %s158
    %p167 = scmp.eq.s32.totalorder %s37, 0
    %p168 = por %p166, %p167
    %p169 = scmp.ne.s32.totalorder %s157, %s158
    %p170 = scmp.eq.s32.totalorder %s38, 7
    %p171 = por %p169, %p170
    %p173 = scmp.ne.s32.totalorder %s158, %s172
    %p174 = scmp.eq.s32.totalorder %s38, 0
    %p175 = por %p173, %p174
    %s177 = sadd.s32 %s176, 1
    %p180 = scmp.eq.s32.totalorder %s32, 7
    %p181 = scmp.ne.s32.totalorder %s176, %s178
    %p182 = scmp.eq.s32.totalorder %s32, 0
    %p183 = por %p181, %p182
    %p184 = scmp.ne.s32.totalorder %s176, %s178
    %p185 = scmp.eq.s32.totalorder %s37, 7
    %p186 = por %p184, %p185
    %p187 = scmp.ne.s32.totalorder %s178, %s179
    %p188 = scmp.eq.s32.totalorder %s37, 0
    %p189 = por %p187, %p188
    %p190 = scmp.ne.s32.totalorder %s178, %s179
    %p191 = scmp.eq.s32.totalorder %s38, 7
    %p192 = por %p190, %p191
    %p194 = scmp.ne.s32.totalorder %s179, %s193
    %p195 = scmp.eq.s32.totalorder %s38, 0
    %p196 = por %p194, %p195
    %s198 = sadd.s32 %s197, 1
    %p201 = scmp.eq.s32.totalorder %s32, 7
    %p202 = scmp.ne.s32.totalorder %s197, %s199
    %p203 = scmp.eq.s32.totalorder %s32, 0
    %p204 = por %p202, %p203
    %p205 = scmp.ne.s32.totalorder %s197, %s199
    %p206 = scmp.eq.s32.totalorder %s37, 7
    %p207 = por %p205, %p206
    %p208 = scmp.ne.s32.totalorder %s199, %s200
    %p209 = scmp.eq.s32.totalorder %s37, 0
    %p210 = por %p208, %p209
    %p211 = scmp.ne.s32.totalorder %s199, %s200
    %p212 = scmp.eq.s32.totalorder %s38, 7
    %p213 = por %p211, %p212
    %p215 = scmp.ne.s32.totalorder %s200, %s214
    %p216 = scmp.eq.s32.totalorder %s38, 0
    %p217 = por %p215, %p216
    %s219 = sadd.s32 %s218, 1
    %p222 = scmp.eq.s32.totalorder %s32, 7
    %p223 = scmp.ne.s32.totalorder %s218, %s220
    %p224 = scmp.eq.s32.totalorder %s32, 0
    %p225 = por %p223, %p224
    %p226 = scmp.ne.s32.totalorder %s218, %s220
    %p227 = scmp.eq.s32.totalorder %s37, 7
    %p228 = por %p226, %p227
    %p229 = scmp.ne.s32.totalorder %s220, %s221
    %p230 = scmp.eq.s32.totalorder %s37, 0
    %p231 = por %p229, %p230
    %p232 = scmp.ne.s32.totalorder %s220, %s221
    %p233 = scmp.eq.s32.totalorder %s38, 7
    %p234 = por %p232, %p233
    %p236 = scmp.ne.s32.totalorder %s221, %s235
    %p237 = scmp.eq.s32.totalorder %s38, 0
    %p238 = por %p236, %p237
    %s240 = sadd.s32 %s239, 1
    %p243 = scmp.eq.s32.totalorder %s32, 7
    %p244 = scmp.ne.s32.totalorder %s239, %s241
    %p245 = scmp.eq.s32.totalorder %s32, 0
    %p246 = por %p244, %p245
    %p247 = scmp.ne.s32.totalorder %s239, %s241
    %p248 = scmp.eq.s32.totalorder %s37, 7
    %p249 = por %p247, %p248
    %p250 = scmp.ne.s32.totalorder %s241, %s242
    %p251 = scmp.eq.s32.totalorder %s37, 0
    %p252 = por %p250, %p251
    %p253 = scmp.ne.s32.totalorder %s241, %s242
    %p254 = scmp.eq.s32.totalorder %s38, 7
    %p255 = por %p253, %p254
    %p257 = scmp.ne.s32.totalorder %s242, %s256
    %p258 = scmp.eq.s32.totalorder %s38, 0
    %p259 = por %p257, %p258
    %s261 = sadd.s32 %s260, 1
    %p264 = scmp.eq.s32.totalorder %s32, 7
    %p265 = scmp.ne.s32.totalorder %s260, %s262
    %p266 = scmp.eq.s32.totalorder %s32, 0
    %p267 = por %p265, %p266
    %p268 = scmp.ne.s32.totalorder %s260, %s262
    %p269 = scmp.eq.s32.totalorder %s37, 7
    %p270 = por %p268, %p269
    %p271 = scmp.ne.s32.totalorder %s262, %s263
    %p272 = scmp.eq.s32.totalorder %s37, 0
    %p273 = por %p271, %p272
    %p274 = scmp.ne.s32.totalorder %s262, %s263
    %p275 = scmp.eq.s32.totalorder %s38, 7
    %p276 = por %p274, %p275
    %p278 = scmp.ne.s32.totalorder %s263, %s277
    %p279 = scmp.eq.s32.totalorder %s38, 0
    %p280 = por %p278, %p279
    %s282 = sadd.s32 %s281, 1
    %p285 = scmp.eq.s32.totalorder %s32, 7
    %p286 = scmp.ne.s32.totalorder %s281, %s283
    %p287 = scmp.eq.s32.totalorder %s32, 0
    %p288 = por %p286, %p287
    %p289 = scmp.ne.s32.totalorder %s281, %s283
    %p290 = scmp.eq.s32.totalorder %s37, 7
    %p291 = por %p289, %p290
    %p292 = scmp.ne.s32.totalorder %s283, %s284
    %p293 = scmp.eq.s32.totalorder %s37, 0
    %p294 = por %p292, %p293
    %p295 = scmp.ne.s32.totalorder %s283, %s284
    %p296 = scmp.eq.s32.totalorder %s38, 7
    %p297 = por %p295, %p296
    %p299 = scmp.ne.s32.totalorder %s284, %s298
    %p300 = scmp.eq.s32.totalorder %s38, 0
    %p301 = por %p299, %p300
    %s303 = sadd.s32 %s302, 1
    %p306 = scmp.eq.s32.totalorder %s32, 7
    %p307 = scmp.ne.s32.totalorder %s302, %s304
    %p308 = scmp.eq.s32.totalorder %s32, 0
    %p309 = por %p307, %p308
    %p310 = scmp.ne.s32.totalorder %s302, %s304
    %p311 = scmp.eq.s32.totalorder %s37, 7
    %p312 = por %p310, %p311
    %p313 = scmp.ne.s32.totalorder %s304, %s305
    %p314 = scmp.eq.s32.totalorder %s37, 0
    %p315 = por %p313, %p314
    %p316 = scmp.ne.s32.totalorder %s304, %s305
    %p317 = scmp.eq.s32.totalorder %s38, 7
    %p318 = por %p316, %p317
    %p320 = scmp.ne.s32.totalorder %s305, %s319
    %p321 = scmp.eq.s32.totalorder %s38, 0
    %p322 = por %p320, %p321
    %s324 = sadd.s32 %s323, 1
    %p327 = scmp.eq.s32.totalorder %s32, 7
    %p328 = scmp.ne.s32.totalorder %s323, %s325
    %p329 = scmp.eq.s32.totalorder %s32, 0
    %p330 = por %p328, %p329
    %p331 = scmp.ne.s32.totalorder %s323, %s325
    %p332 = scmp.eq.s32.totalorder %s37, 7
    %p333 = por %p331, %p332
    %p334 = scmp.ne.s32.totalorder %s325, %s326
    %p335 = scmp.eq.s32.totalorder %s37, 0
    %p336 = por %p334, %p335
    %p337 = scmp.ne.s32.totalorder %s325, %s326
    %p338 = scmp.eq.s32.totalorder %s38, 7
    %p339 = por %p337, %p338
    %p341 = scmp.ne.s32.totalorder %s326, %s340
    %p342 = scmp.eq.s32.totalorder %s38, 0
    %p343 = por %p341, %p342
    %s345 = sadd.s32 %s344, 1
    %p348 = scmp.eq.s32.totalorder %s32, 7
    %p349 = scmp.ne.s32.totalorder %s344, %s346
    %p350 = scmp.eq.s32.totalorder %s32, 0
    %p351 = por %p349, %p350
    %p352 = scmp.ne.s32.totalorder %s344, %s346
    %p353 = scmp.eq.s32.totalorder %s37, 7
    %p354 = por %p352, %p353
    %p355 = scmp.ne.s32.totalorder %s346, %s347
    %p356 = scmp.eq.s32.totalorder %s37, 0
    %p357 = por %p355, %p356
    %p358 = scmp.ne.s32.totalorder %s346, %s347
    %p359 = scmp.eq.s32.totalorder %s38, 7
    %p360 = por %p358, %p359
    %p362 = scmp.ne.s32.totalorder %s347, %s361
    %p363 = scmp.eq.s32.totalorder %s38, 0
    %p364 = por %p362, %p363
    %s366 = sadd.s32 %s365, 1
    %p369 = scmp.eq.s32.totalorder %s32, 7
    %p370 = scmp.ne.s32.totalorder %s365, %s367
    %p371 = scmp.eq.s32.totalorder %s32, 0
    %p372 = por %p370, %p371
    %p373 = scmp.ne.s32.totalorder %s365, %s367
    %p374 = scmp.eq.s32.totalorder %s37, 7
    %p375 = por %p373, %p374
    %p376 = scmp.ne.s32.totalorder %s367, %s368
    %p377 = scmp.eq.s32.totalorder %s37, 0
    %p378 = por %p376, %p377
    %p379 = scmp.ne.s32.totalorder %s367, %s368
    %p380 = scmp.eq.s32.totalorder %s38, 7
    %p381 = por %p379, %p380
    %p383 = scmp.ne.s32.totalorder %s368, %s382
    %p384 = scmp.eq.s32.totalorder %s38, 0
    %p385 = por %p383, %p384
    %s387 = sadd.s32 %s386, 1
    %p390 = scmp.eq.s32.totalorder %s32, 7
    %p391 = scmp.ne.s32.totalorder %s386, %s388
    %p392 = scmp.eq.s32.totalorder %s32, 0
    %p393 = por %p391, %p392
    %p394 = scmp.ne.s32.totalorder %s386, %s388
    %p395 = scmp.eq.s32.totalorder %s37, 7
    %p396 = por %p394, %p395
    %p397 = scmp.ne.s32.totalorder %s388, %s389
    %p398 = scmp.eq.s32.totalorder %s37, 0
    %p399 = por %p397, %p398
    %p400 = scmp.ne.s32.totalorder %s388, %s389
    %p401 = scmp.eq.s32.totalorder %s38, 7
    %p402 = por %p400, %p401
    %p404 = scmp.ne.s32.totalorder %s389, %s403
    %p405 = scmp.eq.s32.totalorder %s38, 0
    %p406 = por %p404, %p405
    %s408 = sadd.s32 %s407, 1
    %p411 = scmp.eq.s32.totalorder %s32, 7
    %p412 = scmp.ne.s32.totalorder %s407, %s409
    %p413 = scmp.eq.s32.totalorder %s32, 0
    %p414 = por %p412, %p413
    %p415 = scmp.ne.s32.totalorder %s407, %s409
    %p416 = scmp.eq.s32.totalorder %s37, 7
    %p417 = por %p415, %p416
    %p418 = scmp.ne.s32.totalorder %s409, %s410
    %p419 = scmp.eq.s32.totalorder %s37, 0
    %p420 = por %p418, %p419
    %p421 = scmp.ne.s32.totalorder %s409, %s410
    %p422 = scmp.eq.s32.totalorder %s38, 7
    %p423 = por %p421, %p422
    %p425 = scmp.ne.s32.totalorder %s410, %s424
    %p426 = scmp.eq.s32.totalorder %s38, 0
    %p427 = por %p425, %p426
    %s429 = sadd.s32 %s428, 1
    %p432 = scmp.eq.s32.totalorder %s32, 7
    %p433 = scmp.ne.s32.totalorder %s428, %s430
    %p434 = scmp.eq.s32.totalorder %s32, 0
    %p435 = por %p433, %p434
    %p436 = scmp.ne.s32.totalorder %s428, %s430
    %p437 = scmp.eq.s32.totalorder %s37, 7
    %p438 = por %p436, %p437
    %p439 = scmp.ne.s32.totalorder %s430, %s431
    %p440 = scmp.eq.s32.totalorder %s37, 0
    %p441 = por %p439, %p440
    %p442 = scmp.ne.s32.totalorder %s430, %s431
    %p443 = scmp.eq.s32.totalorder %s38, 7
    %p444 = por %p442, %p443
    %p446 = scmp.ne.s32.totalorder %s431, %s445
    %p447 = scmp.eq.s32.totalorder %s38, 0
    %p448 = por %p446, %p447
    %s450 = sadd.s32 %s449, 1
    %p453 = scmp.eq.s32.totalorder %s32, 7
    %p454 = scmp.ne.s32.totalorder %s449, %s451
    %p455 = scmp.eq.s32.totalorder %s32, 0
    %p456 = por %p454, %p455
    %p457 = scmp.ne.s32.totalorder %s449, %s451
    %p458 = scmp.eq.s32.totalorder %s37, 7
    %p459 = por %p457, %p458
    %p460 = scmp.ne.s32.totalorder %s451, %s452
    %p461 = scmp.eq.s32.totalorder %s37, 0
    %p462 = por %p460, %p461
    %p463 = scmp.ne.s32.totalorder %s451, %s452
    %p464 = scmp.eq.s32.totalorder %s38, 7
    %p465 = por %p463, %p464
    %p467 = scmp.ne.s32.totalorder %s452, %s466
    %p468 = scmp.eq.s32.totalorder %s38, 0
    %p469 = por %p467, %p468
    %s471 = sadd.s32 %s470, 1
    %p474 = scmp.eq.s32.totalorder %s32, 7
    %p475 = scmp.ne.s32.totalorder %s470, %s472
    %p476 = scmp.eq.s32.totalorder %s32, 0
    %p477 = por %p475, %p476
    %p478 = scmp.ne.s32.totalorder %s470, %s472
    %p479 = scmp.eq.s32.totalorder %s37, 7
    %p480 = por %p478, %p479
    %p481 = scmp.ne.s32.totalorder %s472, %s473
    %p482 = scmp.eq.s32.totalorder %s37, 0
    %p483 = por %p481, %p482
    %p484 = scmp.ne.s32.totalorder %s472, %s473
    %p485 = scmp.eq.s32.totalorder %s38, 7
    %p486 = por %p484, %p485
    %p488 = scmp.ne.s32.totalorder %s473, %s487
    %p489 = scmp.eq.s32.totalorder %s38, 0
    %p490 = por %p488, %p489
    %s492 = sadd.s32 %s491, 1
    %p495 = scmp.eq.s32.totalorder %s32, 7
    %p496 = scmp.ne.s32.totalorder %s491, %s493
    %p497 = scmp.eq.s32.totalorder %s32, 0
    %p498 = por %p496, %p497
    %p499 = scmp.ne.s32.totalorder %s491, %s493
    %p500 = scmp.eq.s32.totalorder %s37, 7
    %p501 = por %p499, %p500
    %p502 = scmp.ne.s32.totalorder %s493, %s494
    %p503 = scmp.eq.s32.totalorder %s37, 0
    %p504 = por %p502, %p503
    %p505 = scmp.ne.s32.totalorder %s493, %s494
    %p506 = scmp.eq.s32.totalorder %s38, 7
    %p507 = por %p505, %p506
    %p509 = scmp.ne.s32.totalorder %s494, %s508
    %p510 = scmp.eq.s32.totalorder %s38, 0
    %p511 = por %p509, %p510
    %s513 = sadd.s32 %s512, 1
    %p516 = scmp.eq.s32.totalorder %s32, 7
    %p517 = scmp.ne.s32.totalorder %s512, %s514
    %p518 = scmp.eq.s32.totalorder %s32, 0
    %p519 = por %p517, %p518
    %p520 = scmp.ne.s32.totalorder %s512, %s514
    %p521 = scmp.eq.s32.totalorder %s37, 7
    %p522 = por %p520, %p521
    %p523 = scmp.ne.s32.totalorder %s514, %s515
    %p524 = scmp.eq.s32.totalorder %s37, 0
    %p525 = por %p523, %p524
    %p526 = scmp.ne.s32.totalorder %s514, %s515
    %p527 = scmp.eq.s32.totalorder %s38, 7
    %p528 = por %p526, %p527
    %p530 = scmp.ne.s32.totalorder %s515, %s529
    %p531 = scmp.eq.s32.totalorder %s38, 0
    %p532 = por %p530, %p531
    %s534 = sadd.s32 %s533, 1
    %p537 = scmp.eq.s32.totalorder %s32, 7
    %p538 = scmp.ne.s32.totalorder %s533, %s535
    %p539 = scmp.eq.s32.totalorder %s32, 0
    %p540 = por %p538, %p539
    %p541 = scmp.ne.s32.totalorder %s533, %s535
    %p542 = scmp.eq.s32.totalorder %s37, 7
    %p543 = por %p541, %p542
    %p544 = scmp.ne.s32.totalorder %s535, %s536
    %p545 = scmp.eq.s32.totalorder %s37, 0
    %p546 = por %p544, %p545
    %p547 = scmp.ne.s32.totalorder %s535, %s536
    %p548 = scmp.eq.s32.totalorder %s38, 7
    %p549 = por %p547, %p548
    %p551 = scmp.ne.s32.totalorder %s536, %s550
    %p552 = scmp.eq.s32.totalorder %s38, 0
    %p553 = por %p551, %p552
    %s555 = sadd.s32 %s554, 1
    %p558 = scmp.eq.s32.totalorder %s32, 7
    %p559 = scmp.ne.s32.totalorder %s554, %s556
    %p560 = scmp.eq.s32.totalorder %s32, 0
    %p561 = por %p559, %p560
    %p562 = scmp.ne.s32.totalorder %s554, %s556
    %p563 = scmp.eq.s32.totalorder %s37, 7
    %p564 = por %p562, %p563
    %p565 = scmp.ne.s32.totalorder %s556, %s557
    %p566 = scmp.eq.s32.totalorder %s37, 0
    %p567 = por %p565, %p566
    %p568 = scmp.ne.s32.totalorder %s556, %s557
    %p569 = scmp.eq.s32.totalorder %s38, 7
    %p570 = por %p568, %p569
    %p572 = scmp.ne.s32.totalorder %s557, %s571
    %p573 = scmp.eq.s32.totalorder %s38, 0
    %p574 = por %p572, %p573
    %s576 = sadd.s32 %s575, 1
    %p579 = scmp.eq.s32.totalorder %s32, 7
    %p580 = scmp.ne.s32.totalorder %s575, %s577
    %p581 = scmp.eq.s32.totalorder %s32, 0
    %p582 = por %p580, %p581
    %p583 = scmp.ne.s32.totalorder %s575, %s577
    %p584 = scmp.eq.s32.totalorder %s37, 7
    %p585 = por %p583, %p584
    %p586 = scmp.ne.s32.totalorder %s577, %s578
    %p587 = scmp.eq.s32.totalorder %s37, 0
    %p588 = por %p586, %p587
    %p589 = scmp.ne.s32.totalorder %s577, %s578
    %p590 = scmp.eq.s32.totalorder %s38, 7
    %p591 = por %p589, %p590
    %p593 = scmp.ne.s32.totalorder %s578, %s592
    %p594 = scmp.eq.s32.totalorder %s38, 0
    %p595 = por %p593, %p594
    %s597 = sadd.s32 %s596, 1
    %p600 = scmp.eq.s32.totalorder %s32, 7
    %p601 = scmp.ne.s32.totalorder %s596, %s598
    %p602 = scmp.eq.s32.totalorder %s32, 0
    %p603 = por %p601, %p602
    %p604 = scmp.ne.s32.totalorder %s596, %s598
    %p605 = scmp.eq.s32.totalorder %s37, 7
    %p606 = por %p604, %p605
    %p607 = scmp.ne.s32.totalorder %s598, %s599
    %p608 = scmp.eq.s32.totalorder %s37, 0
    %p609 = por %p607, %p608
    %p610 = scmp.ne.s32.totalorder %s598, %s599
    %p611 = scmp.eq.s32.totalorder %s38, 7
    %p612 = por %p610, %p611
    %p614 = scmp.ne.s32.totalorder %s599, %s613
    %p615 = scmp.eq.s32.totalorder %s38, 0
    %p616 = por %p614, %p615
    %s617 = ssub.s32 %s40, %s47
    %s618 = ssub.s32 %s39, %s51
    %s619 = sor.u32 %s617, %s618
    %p620 = scmp.eq.s32.totalorder %s619, 0
    %s622 = sadd.s32 %s621, 1
    %s623 = scalar_select %p620, %s621, %s622
    %p626 = pneg %p620
    %p627 = scmp.eq.s32.totalorder %s32, 7
    %p628 = por %p626, %p627
    %p629 = scmp.ne.s32.totalorder %s621, %s624
    %p630 = scmp.eq.s32.totalorder %s32, 0
    %p631 = por %p629, %p630
    %p632 = scmp.ne.s32.totalorder %s621, %s624
    %p633 = scmp.eq.s32.totalorder %s37, 7
    %p634 = por %p632, %p633
    %p635 = scmp.ne.s32.totalorder %s624, %s625
    %p636 = scmp.eq.s32.totalorder %s37, 0
    %p637 = por %p635, %p636
    %p638 = scmp.ne.s32.totalorder %s624, %s625
    %p639 = scmp.eq.s32.totalorder %s38, 7
    %p640 = por %p638, %p639
    %p642 = scmp.ne.s32.totalorder %s625, %s641
    %p643 = scmp.eq.s32.totalorder %s38, 0
    %p644 = por %p642, %p643
    %p645 = scmp.le.s32.totalorder 1, %s32
    %p646 = scmp.lt.s32.totalorder %s32, 9
    %p647 = pnand %p645, %p646
    %p648 = pneg %p647
    // Predicated region
    $region9: #{dgcrm_forward.1} parent=5 // pred_check
      _
    $region10: #{dgcrm_forward.1} parent=5 // pred_check_branch
      %650 = sbr.rel (%p647) target = $region12
    $region11: #{dgcrm_forward.1} parent=5 // pred_region
      %s651 = ssub.s32 %s32, 1
      // Predicated region
      $region13: #{dgcrm_forward.1} parent=11 // pred_check
        %p652 = pneg %p98
      $region14: #{dgcrm_forward.1} parent=11 // pred_check_branch
        %654 = sbr.rel (%p652) target = $region16
      $region15: #{dgcrm_forward.1} parent=11 // pred_region
        %s655 = smul.u32 2, %s41
        %p656 = scmp.lt.s32.totalorder %s655, 1
        %s657 = scalar_select %p656, %s655, 1
        %s658 = smul.addr %s657, 2
        %s659 = smul.addr %s658, 8
        %s660 = scalar_lea.vmem %s1, %s659
        %s661 = smul.u32 2, %s41
      $region16: #{dgcrm_forward.1} parent=11 // pred_fallthru
        _
      // Predicated region
      $region17: #{dgcrm_forward.1} parent=11 // pred_check
        %p662 = pneg %p147
      $region18: #{dgcrm_forward.1} parent=11 // pred_check_branch
        %664 = sbr.rel (%p662) target = $region20
      $region19: #{dgcrm_forward.1} parent=11 // pred_region
        _
      $region20: #{dgcrm_forward.1} parent=11 // pred_fallthru
        _
      // Predicated region
      $region21: #{dgcrm_forward.1} parent=11 // pred_check
        %p665 = pneg %p168
      $region22: #{dgcrm_forward.1} parent=11 // pred_check_branch
        %667 = sbr.rel (%p665) target = $region24
      $region23: #{dgcrm_forward.1} parent=11 // pred_region
        _
      $region24: #{dgcrm_forward.1} parent=11 // pred_fallthru
        _
      // Predicated region
      $region25: #{dgcrm_forward.1} parent=11 // pred_check
        %p668 = pneg %p189
      $region26: #{dgcrm_forward.1} parent=11 // pred_check_branch
        %670 = sbr.rel (%p668) target = $region28
      $region27: #{dgcrm_forward.1} parent=11 // pred_region
        _
      $region28: #{dgcrm_forward.1} parent=11 // pred_fallthru
        _
      // Predicated region
      $region29: #{dgcrm_forward.1} parent=11 // pred_check
        %p671 = pneg %p210
      $region30: #{dgcrm_forward.1} parent=11 // pred_check_branch
        %673 = sbr.rel (%p671) target = $region32
      $region31: #{dgcrm_forward.1} parent=11 // pred_region
        _
      $region32: #{dgcrm_forward.1} parent=11 // pred_fallthru
        _
      // Predicated region
      $region33: #{dgcrm_forward.1} parent=11 // pred_check
        %p674 = pneg %p231
      $region34: #{dgcrm_forward.1} parent=11 // pred_check_branch
        %676 = sbr.rel (%p674) target = $region36
      $region35: #{dgcrm_forward.1} parent=11 // pred_region
        _
      $region36: #{dgcrm_forward.1} parent=11 // pred_fallthru
        _
      // Predicated region
      $region37: #{dgcrm_forward.1} parent=11 // pred_check
        %p677 = pneg %p252
      $region38: #{dgcrm_forward.1} parent=11 // pred_check_branch
        %679 = sbr.rel (%p677) target = $region40
      $region39: #{dgcrm_forward.1} parent=11 // pred_region
        _
      $region40: #{dgcrm_forward.1} parent=11 // pred_fallthru
        _
      // Predicated region
      $region41: #{dgcrm_forward.1} parent=11 // pred_check
        %p680 = pneg %p273
      $region42: #{dgcrm_forward.1} parent=11 // pred_check_branch
        %682 = sbr.rel (%p680) target = $region44
      $region43: #{dgcrm_forward.1} parent=11 // pred_region
        _
      $region44: #{dgcrm_forward.1} parent=11 // pred_fallthru
        _
      // Predicated region
      $region45: #{dgcrm_forward.1} parent=11 // pred_check
        %p683 = pneg %p294
      $region46: #{dgcrm_forward.1} parent=11 // pred_check_branch
        %685 = sbr.rel (%p683) target = $region48
      $region47: #{dgcrm_forward.1} parent=11 // pred_region
        _
      $region48: #{dgcrm_forward.1} parent=11 // pred_fallthru
        _
      // Predicated region
      $region49: #{dgcrm_forward.1} parent=11 // pred_check
        %p686 = pneg %p315
      $region50: #{dgcrm_forward.1} parent=11 // pred_check_branch
        %688 = sbr.rel (%p686) target = $region52
      $region51: #{dgcrm_forward.1} parent=11 // pred_region
        _
      $region52: #{dgcrm_forward.1} parent=11 // pred_fallthru
        _
      // Predicated region
      $region53: #{dgcrm_forward.1} parent=11 // pred_check
        %p689 = pneg %p336
      $region54: #{dgcrm_forward.1} parent=11 // pred_check_branch
        %691 = sbr.rel (%p689) target = $region56
      $region55: #{dgcrm_forward.1} parent=11 // pred_region
        _
      $region56: #{dgcrm_forward.1} parent=11 // pred_fallthru
        _
      // Predicated region
      $region57: #{dgcrm_forward.1} parent=11 // pred_check
        %p692 = pneg %p357
      $region58: #{dgcrm_forward.1} parent=11 // pred_check_branch
        %694 = sbr.rel (%p692) target = $region60
      $region59: #{dgcrm_forward.1} parent=11 // pred_region
        _
      $region60: #{dgcrm_forward.1} parent=11 // pred_fallthru
        _
      // Predicated region
      $region61: #{dgcrm_forward.1} parent=11 // pred_check
        %p695 = pneg %p378
      $region62: #{dgcrm_forward.1} parent=11 // pred_check_branch
        %697 = sbr.rel (%p695) target = $region64
      $region63: #{dgcrm_forward.1} parent=11 // pred_region
        _
      $region64: #{dgcrm_forward.1} parent=11 // pred_fallthru
        _
      // Predicated region
      $region65: #{dgcrm_forward.1} parent=11 // pred_check
        %p698 = pneg %p399
      $region66: #{dgcrm_forward.1} parent=11 // pred_check_branch
        %700 = sbr.rel (%p698) target = $region68
      $region67: #{dgcrm_forward.1} parent=11 // pred_region
        _
      $region68: #{dgcrm_forward.1} parent=11 // pred_fallthru
        _
      // Predicated region
      $region69: #{dgcrm_forward.1} parent=11 // pred_check
        %p701 = pneg %p420
      $region70: #{dgcrm_forward.1} parent=11 // pred_check_branch
        %703 = sbr.rel (%p701) target = $region72
      $region71: #{dgcrm_forward.1} parent=11 // pred_region
        _
      $region72: #{dgcrm_forward.1} parent=11 // pred_fallthru
        _
      // Predicated region
      $region73: #{dgcrm_forward.1} parent=11 // pred_check
        %p704 = pneg %p441
      $region74: #{dgcrm_forward.1} parent=11 // pred_check_branch
        %706 = sbr.rel (%p704) target = $region76
      $region75: #{dgcrm_forward.1} parent=11 // pred_region
        _
      $region76: #{dgcrm_forward.1} parent=11 // pred_fallthru
        _
      // Predicated region
      $region77: #{dgcrm_forward.1} parent=11 // pred_check
        %p707 = pneg %p462
      $region78: #{dgcrm_forward.1} parent=11 // pred_check_branch
        %709 = sbr.rel (%p707) target = $region80
      $region79: #{dgcrm_forward.1} parent=11 // pred_region
        _
      $region80: #{dgcrm_forward.1} parent=11 // pred_fallthru
        _
      // Predicated region
      $region81: #{dgcrm_forward.1} parent=11 // pred_check
        %p710 = pneg %p483
      $region82: #{dgcrm_forward.1} parent=11 // pred_check_branch
        %712 = sbr.rel (%p710) target = $region84
      $region83: #{dgcrm_forward.1} parent=11 // pred_region
        _
      $region84: #{dgcrm_forward.1} parent=11 // pred_fallthru
        _
      // Predicated region
      $region85: #{dgcrm_forward.1} parent=11 // pred_check
        %p713 = pneg %p504
      $region86: #{dgcrm_forward.1} parent=11 // pred_check_branch
        %715 = sbr.rel (%p713) target = $region88
      $region87: #{dgcrm_forward.1} parent=11 // pred_region
        _
      $region88: #{dgcrm_forward.1} parent=11 // pred_fallthru
        _
      // Predicated region
      $region89: #{dgcrm_forward.1} parent=11 // pred_check
        %p716 = pneg %p525
      $region90: #{dgcrm_forward.1} parent=11 // pred_check_branch
        %718 = sbr.rel (%p716) target = $region92
      $region91: #{dgcrm_forward.1} parent=11 // pred_region
        _
      $region92: #{dgcrm_forward.1} parent=11 // pred_fallthru
        _
      // Predicated region
      $region93: #{dgcrm_forward.1} parent=11 // pred_check
        %p719 = pneg %p546
      $region94: #{dgcrm_forward.1} parent=11 // pred_check_branch
        %721 = sbr.rel (%p719) target = $region96
      $region95: #{dgcrm_forward.1} parent=11 // pred_region
        _
      $region96: #{dgcrm_forward.1} parent=11 // pred_fallthru
        _
      // Predicated region
      $region97: #{dgcrm_forward.1} parent=11 // pred_check
        %p722 = pneg %p567
      $region98: #{dgcrm_forward.1} parent=11 // pred_check_branch
        %724 = sbr.rel (%p722) target = $region100
      $region99: #{dgcrm_forward.1} parent=11 // pred_region
        _
      $region100: #{dgcrm_forward.1} parent=11 // pred_fallthru
        _
      // Predicated region
      $region101: #{dgcrm_forward.1} parent=11 // pred_check
        %p725 = pneg %p588
      $region102: #{dgcrm_forward.1} parent=11 // pred_check_branch
        %727 = sbr.rel (%p725) target = $region104
      $region103: #{dgcrm_forward.1} parent=11 // pred_region
        _
      $region104: #{dgcrm_forward.1} parent=11 // pred_fallthru
        _
      // Predicated region
      $region105: #{dgcrm_forward.1} parent=11 // pred_check
        %p728 = pneg %p609
      $region106: #{dgcrm_forward.1} parent=11 // pred_check_branch
        %730 = sbr.rel (%p728) target = $region108
      $region107: #{dgcrm_forward.1} parent=11 // pred_region
        _
      $region108: #{dgcrm_forward.1} parent=11 // pred_fallthru
        _
    $region12: #{dgcrm_forward.1} parent=5 // pred_fallthru
      _
    %p731 = scmp.lt.s32.totalorder %s32, 8
    // Predicated region
    $region109: #{dgcrm_forward.1} parent=5 // pred_check
      %p732 = pneg %p731
    $region110: #{dgcrm_forward.1} parent=5 // pred_check_branch
      %734 = sbr.rel (%p732) target = $region112
    $region111: #{dgcrm_forward.1} parent=5 // pred_region
      // Predicated region
      $region113: #{dgcrm_forward.1} parent=111 // pred_check
        %p735 = pneg %p66
      $region114: #{dgcrm_forward.1} parent=111 // pred_check_branch
        %737 = sbr.rel (%p735) target = $region116
      $region115: #{dgcrm_forward.1} parent=111 // pred_region
        %s738 = smul.u32 2, %s39
        %p739 = scmp.lt.s32.totalorder %s40, 7
        %s740 = scalar_select %p739, %s40, 7
        %p741 = scmp.lt.s32.totalorder %s738, 1
        %s742 = scalar_select %p741, %s738, 1
        %s743 = smul.addr %s742, 2
        %s744 = smul.addr %s740, 4
        %s745 = sadd.s32 %s743, %s744
        %s746 = smul.addr %s745, 8
        %s747 = scalar_lea.vmem %s0, %s746
        %s748 = smul.u32 2, %s39
      $region116: #{dgcrm_forward.1} parent=111 // pred_fallthru
        _
      // Predicated region
      $region117: #{dgcrm_forward.1} parent=111 // pred_check
        %p749 = pneg %p120
      $region118: #{dgcrm_forward.1} parent=111 // pred_check_branch
        %751 = sbr.rel (%p749) target = $region120
      $region119: #{dgcrm_forward.1} parent=111 // pred_region
        %s752 = smul.u32 2, %s39
        %p753 = scmp.lt.s32.totalorder %s40, 7
        %s754 = scalar_select %p753, %s40, 7
        %p755 = scmp.lt.s32.totalorder %s752, 1
        %s756 = scalar_select %p755, %s752, 1
        %s757 = smul.addr %s756, 2
        %s758 = smul.addr %s754, 4
        %s759 = sadd.s32 %s757, %s758
        %s760 = smul.addr %s759, 8
        %s761 = scalar_lea.vmem %s2, %s760
        %s762 = smul.u32 2, %s39
      $region120: #{dgcrm_forward.1} parent=111 // pred_fallthru
        _
    $region112: #{dgcrm_forward.1} parent=5 // pred_fallthru
      _
    %p763 = scmp.le.s32.totalorder 1, %s32
    %p764 = scmp.lt.s32.totalorder %s32, 9
    %p765 = pnand %p763, %p764
    %p766 = pneg %p765
    // Predicated region
    $region121: #{dgcrm_forward.1} parent=5 // pred_check
      _
    $region122: #{dgcrm_forward.1} parent=5 // pred_check_branch
      %768 = sbr.rel (%p765) target = $region124
    $region123: #{dgcrm_forward.1} parent=5 // pred_region
      %s769 = ssub.s32 %s32, 1
      %s770 = smul.u32 2, %s41
      %p771 = scmp.lt.s32.totalorder %s42, 7
      %s772 = scalar_select %p771, %s42, 7
      %p773 = scmp.lt.s32.totalorder %s770, 1
      %s774 = scalar_select %p773, %s770, 1
      %s775 = smul.addr %s774, 2
      %s776 = smul.addr %s772, 4
      %s777 = sadd.s32 %s775, %s776
      %s778 = smul.addr %s777, 8
      %s779 = scalar_lea.vmem %s0, %s778
      %p780 = pneg %p72
      %p781 = pneg %p69
      %s782 = smul.u32 2, %s41
      %p783 = scmp.lt.s32.totalorder %s782, 1
      %s784 = scalar_select %p783, %s782, 1
      %s785 = smul.addr %s784, 2
      %s786 = smul.addr %s785, 8
      %s787 = scalar_lea.vmem %s1, %s786
      %p788 = pneg %p98
      %p789 = pneg %p95
      %s790 = smul.u32 2, %s41
      %p791 = scmp.lt.s32.totalorder %s42, 7
      %s792 = scalar_select %p791, %s42, 7
      %p793 = scmp.lt.s32.totalorder %s790, 1
      %s794 = scalar_select %p793, %s790, 1
      %s795 = smul.addr %s794, 2
      %s796 = smul.addr %s792, 4
      %s797 = sadd.s32 %s795, %s796
      %s798 = smul.addr %s797, 8
      %s799 = scalar_lea.vmem %s2, %s798
      %p800 = pneg %p126
      %p801 = pneg %p123
      %p802 = pneg %p147
      %p803 = pneg %p144
      %p804 = pneg %p168
      %p805 = pneg %p165
      %p806 = pneg %p189
      %p807 = pneg %p186
      %p808 = pneg %p210
      %p809 = pneg %p207
      %p810 = pneg %p231
      %p811 = pneg %p228
      %p812 = pneg %p252
      %p813 = pneg %p249
      %p814 = pneg %p273
      %p815 = pneg %p270
      %p816 = pneg %p294
      %p817 = pneg %p291
      %p818 = pneg %p315
      %p819 = pneg %p312
      %p820 = pneg %p336
      %p821 = pneg %p333
      %p822 = pneg %p357
      %p823 = pneg %p354
      %p824 = pneg %p378
      %p825 = pneg %p375
      %p826 = pneg %p399
      %p827 = pneg %p396
      %p828 = pneg %p420
      %p829 = pneg %p417
      %p830 = pneg %p441
      %p831 = pneg %p438
      %p832 = pneg %p462
      %p833 = pneg %p459
      %p834 = pneg %p483
      %p835 = pneg %p480
      %p836 = pneg %p504
      %p837 = pneg %p501
      %p838 = pneg %p525
      %p839 = pneg %p522
      %p840 = pneg %p546
      %p841 = pneg %p543
      %p842 = pneg %p567
      %p843 = pneg %p564
      %p844 = pneg %p588
      %p845 = pneg %p585
      %p846 = pneg %p609
      %p847 = pneg %p606
      %p848 = pneg %p637
      %p849 = pneg %p634
      %s850 = smul.u32 2, %s41
      %p851 = scmp.lt.s32.totalorder %s42, 7
      %s852 = scalar_select %p851, %s42, 7
      %p853 = scmp.lt.s32.totalorder %s850, 1
      %s854 = scalar_select %p853, %s850, 1
      %s855 = smul.addr %s854, 2
      %s856 = smul.addr %s852, 4
      %s857 = sadd.s32 %s855, %s856
      %s858 = smul.addr %s857, 8
      %s859 = scalar_lea.vmem %s26, %s858
      %s860 = smul.u32 2, %s41
      %p861 = scmp.lt.s32.totalorder %s42, 7
      %s862 = scalar_select %p861, %s42, 7
      %p863 = scmp.lt.s32.totalorder %s860, 1
      %s864 = scalar_select %p863, %s860, 1
      %s865 = smul.addr %s864, 2
      %s866 = smul.addr %s862, 4
      %s867 = sadd.s32 %s865, %s866
      %s868 = smul.addr %s867, 8
      %s869 = scalar_lea.vmem %s0, %s868
      %s870 = smul.u32 2, %s41
      %s871 = smul.u32 2, %s41
      %p872 = scmp.lt.s32.totalorder %s871, 1
      %s873 = scalar_select %p872, %s871, 1
      %s874 = smul.addr %s873, 2
      %s875 = smul.addr %s874, 8
      %s876 = scalar_lea.vmem %s1, %s875
      %s877 = smul.u32 2, %s41
      %s878 = smul.u32 2, %s41
      %p879 = scmp.lt.s32.totalorder %s42, 7
      %s880 = scalar_select %p879, %s42, 7
      %p881 = scmp.lt.s32.totalorder %s878, 1
      %s882 = scalar_select %p881, %s878, 1
      %s883 = smul.addr %s882, 2
      %s884 = smul.addr %s880, 4
      %s885 = sadd.s32 %s883, %s884
      %s886 = smul.addr %s885, 8
      %s887 = scalar_lea.vmem %s2, %s886
      %s888 = smul.u32 2, %s41
      %s889 = smul.u32 2, %s41
      %p890 = scmp.lt.s32.totalorder %s42, 7
      %s891 = scalar_select %p890, %s42, 7
      %p892 = scmp.lt.s32.totalorder %s889, 1
      %s893 = scalar_select %p892, %s889, 1
      %s894 = smul.addr %s893, 2
      %s895 = smul.addr %s891, 4
      %s896 = sadd.s32 %s894, %s895
      %s897 = smul.addr %s896, 8
      %s898 = scalar_lea.vmem %s26, %s897
      %s899 = smul.u32 2, %s41
      %p901 = scmp.eq.s32.totalorder %s42, 0
      // Predicated region
      $region125: #{dgcrm_forward.1} parent=123 // pred_check
        %p902 = pneg %p901
      $region126: #{dgcrm_forward.1} parent=123 // pred_check_branch
        %904 = sbr.rel (%p902) target = $region128
      $region127: #{dgcrm_forward.1} parent=123 // pred_region
        %v905 = vld [vmem:[%s876] sm:$0xff]
        %v906 = vld [vmem:[%s876 + $0x8] sm:$0xff]
        %v907 = vld [vmem:[%s876 + $0x10] sm:$0xff]
        %v908 = vld [vmem:[%s876 + $0x18] sm:$0xff]
        %vm909 = vcmask 261120
        %910 = vst.msk [vmem:[#allocation2] sm:$0xff] %vm909, %v905
        %911 = vst.msk [vmem:[#allocation2 + $0x8] sm:$0xff] %vm909, %v906
        %912 = vst.msk [vmem:[#allocation2 + $0x10] sm:$0xff] %vm909, %v907
        %913 = vst.msk [vmem:[#allocation2 + $0x18] sm:$0xff] %vm909, %v908
      $region128: #{dgcrm_forward.1} parent=123 // pred_fallthru
        _
      %v914 = vld [vmem:[%s869] sm:$0xff]
      %v915 = vld [vmem:[%s869 + $0x8] sm:$0xff]
      %v916 = vld [vmem:[%s869 + $0x10] sm:$0xff]
      %v917 = vld [vmem:[%s869 + $0x18] sm:$0xff]
      %v918 = vld [vmem:[%s887] sm:$0xff]
      %v919 = vld [vmem:[%s887 + $0x8] sm:$0xff]
      %v920 = vld [vmem:[%s887 + $0x10] sm:$0xff]
      %v921 = vld [vmem:[%s887 + $0x18] sm:$0xff]
      %v922 = vld [vmem:[%s3] sm:$0xff]
      %v923 = vld [vmem:[%s3 + $0x8] sm:$0xff]
      %v924 = vld [vmem:[%s3 + $0x10] sm:$0xff]
      %v925 = vld [vmem:[%s3 + $0x18] sm:$0xff]
      %v926 = vld [vmem:[%s3 + $0x20] sm:$0xff]
      %v927 = vld [vmem:[%s3 + $0x28] sm:$0xff]
      %v928 = vld [vmem:[%s3 + $0x30] sm:$0xff]
      %v929 = vld [vmem:[%s3 + $0x38] sm:$0xff]
      %v930 = vld [vmem:[%s4] sm:$0xff]
      %v931 = vld [vmem:[%s4 + $0x8] sm:$0xff]
      %v932 = vld [vmem:[%s4 + $0x10] sm:$0xff]
      %v933 = vld [vmem:[%s4 + $0x18] sm:$0xff]
      %v934 = vld [vmem:[%s4 + $0x20] sm:$0xff]
      %v935 = vld [vmem:[%s4 + $0x28] sm:$0xff]
      %v936 = vld [vmem:[%s4 + $0x30] sm:$0xff]
      %v937 = vld [vmem:[%s4 + $0x38] sm:$0xff]
      %v938 = vld [vmem:[%s4 + $0x40] sm:$0xff]
      %v939 = vld [vmem:[%s4 + $0x48] sm:$0xff]
      %v940 = vld [vmem:[%s4 + $0x50] sm:$0xff]
      %v941 = vld [vmem:[%s4 + $0x58] sm:$0xff]
      %v942 = vld [vmem:[%s4 + $0x60] sm:$0xff]
      %v943 = vld [vmem:[%s4 + $0x68] sm:$0xff]
      %v944 = vld [vmem:[%s4 + $0x70] sm:$0xff]
      %v945 = vld [vmem:[%s4 + $0x78] sm:$0xff]
      %v946 = vld [vmem:[%s4 + $0x80] sm:$0xff]
      %v947 = vld [vmem:[%s4 + $0x88] sm:$0xff]
      %v948 = vld [vmem:[%s4 + $0x90] sm:$0xff]
      %v949 = vld [vmem:[%s4 + $0x98] sm:$0xff]
      %v950 = vld [vmem:[%s4 + $0xa0] sm:$0xff]
      %v951 = vld [vmem:[%s4 + $0xa8] sm:$0xff]
      %v952 = vld [vmem:[%s4 + $0xb0] sm:$0xff]
      %v953 = vld [vmem:[%s4 + $0xb8] sm:$0xff]
      %v954 = vld [vmem:[%s4 + $0xc0] sm:$0xff]
      %v955 = vld [vmem:[%s4 + $0xc8] sm:$0xff]
      %v956 = vld [vmem:[%s4 + $0xd0] sm:$0xff]
      %v957 = vld [vmem:[%s4 + $0xd8] sm:$0xff]
      %v958 = vld [vmem:[%s4 + $0xe0] sm:$0xff]
      %v959 = vld [vmem:[%s4 + $0xe8] sm:$0xff]
      %v960 = vld [vmem:[%s4 + $0xf0] sm:$0xff]
      %v961 = vld [vmem:[%s4 + $0xf8] sm:$0xff]
      %v962 = vld [vmem:[#allocation2] sm:$0xff]
      %v963 = vld [vmem:[#allocation2 + $0x8] sm:$0xff]
      %v964 = vld [vmem:[#allocation2 + $0x10] sm:$0xff]
      %v965 = vld [vmem:[#allocation2 + $0x18] sm:$0xff]
      %970 = vrot.lane.b32.xlu0 %v962, 2
      %v971 = vpop.permute.xlu0 %970
      %972 = vrot.lane.b32.xlu0 %v963, 2
      %v973 = vpop.permute.xlu0 %972
      %974 = vrot.lane.b32.xlu0 %v964, 2
      %v975 = vpop.permute.xlu0 %974
      %976 = vrot.lane.b32.xlu0 %v965, 2
      %v977 = vpop.permute.xlu0 %976
      %vm982 = vcmask 15360
      %v983 = vsel %vm982, %v914, %v971
      %v984 = vsel %vm982, %v915, %v973
      %v985 = vsel %vm982, %v916, %v975
      %v986 = vsel %vm982, %v917, %v977
      %v987 = vld [vmem:[%s5] sm:$0xff]
      %v988 = vld [vmem:[%s5 + $0x8] sm:$0xff]
      %v989 = vld [vmem:[%s5 + $0x10] sm:$0xff]
      %v990 = vld [vmem:[%s5 + $0x18] sm:$0xff]
      %v991 = vld [vmem:[%s5 + $0x20] sm:$0x3]
      %v992 = vld [vmem:[%s6] sm:$0x1]
      %v994 = vlaneseq
      %v995 = vshrl.u32 %v994, 7
      %v996 = vsub.s32 0, %v995
      %v997 = vrot.slane %v992, %v996
      %vm999 = vcmask 277504
      %v1001 = vsel %vm999, %v983, 0
      %v1004 = vsel %vm999, %v984, 0
      %v1007 = vsel %vm999, %v985, 0
      %v1010 = vsel %vm999, %v986, 0
      %vm1012 = vcmask 1041408
      %v1014 = vsel %vm1012, %v991, 0
      %1016 = vmatprep.subr.mxu0 0.0
      %1017 = vmatpush1.msra.mxu0 0.0
      %1018 = vmatprep.subr.mxu0 0.0
      %1019 = vmatpush1.msra.mxu0 0.0
      %1020 = vmatprep.subr.mxu0 0.0
      %1021 = vmatpush1.msra.mxu0 0.0
      %1022 = vmatprep.subr.mxu0 0.0
      %1023 = vmatpush1.msra.mxu0 0.0
      %1024 = vmatprep.subr.mxu0 0.0
      %1025 = vmatpush1.msra.mxu0 0.0
      %1026 = vmatprep.subr.mxu0 0.0
      %1027 = vmatpush1.msra.mxu0 0.0
      %1028 = vmatprep.subr.mxu0 0.0
      %1029 = vmatpush1.msra.mxu0 0.0
      %1030 = vmatprep.subr.mxu0 0.0
      %1031 = vmatpush1.msra.mxu0 0.0
      %1032 = vmatprep.subr.mxu0 0.0
      %1033 = vmatpush1.msra.mxu0 0.0
      %1034 = vmatprep.subr.mxu0 0.0
      %1035 = vmatpush1.msra.mxu0 0.0
      %1036 = vmatprep.subr.mxu0 0.0
      %1037 = vmatpush1.msra.mxu0 0.0
      %1038 = vmatprep.subr.mxu0 0.0
      %1039 = vmatpush1.msra.mxu0 %v1014
      %1040 = vmatprep.subr.mxu0 0.0
      %1041 = vmatpush1.msra.mxu0 %v990
      %1042 = vmatprep.subr.mxu0 0.0
      %1043 = vmatpush1.msra.mxu0 %v989
      %1044 = vmatprep.subr.mxu0 0.0
      %1045 = vmatpush1.msra.mxu0 %v988
      %1046 = vmatprep.subr.mxu0 0.0
      %1047 = vmatpush1.msra.mxu0 %v987
      %1048 = vmatprep.subr.mxu0 0.0
      %1049 = vmatpush2.msra.mxu0 0.0
      %1050 = vmatprep.subr.mxu0 0.0
      %1051 = vmatpush2.msra.mxu0 0.0
      %1052 = vmatprep.subr.mxu0 0.0
      %1053 = vmatpush2.msra.mxu0 0.0
      %1054 = vmatprep.subr.mxu0 0.0
      %1055 = vmatpush2.msra.mxu0 0.0
      %1056 = vmatprep.subr.mxu0 0.0
      %1057 = vmatpush2.msra.mxu0 0.0
      %1058 = vmatprep.subr.mxu0 0.0
      %1059 = vmatpush2.msra.mxu0 0.0
      %1060 = vmatprep.subr.mxu0 0.0
      %1061 = vmatpush2.msra.mxu0 0.0
      %1062 = vmatprep.subr.mxu0 0.0
      %1063 = vmatpush2.msra.mxu0 0.0
      %1064 = vmatprep.subr.mxu0 0.0
      %1065 = vmatpush2.msra.mxu0 0.0
      %1066 = vmatprep.subr.mxu0 0.0
      %1067 = vmatpush2.msra.mxu0 0.0
      %1068 = vmatprep.subr.mxu0 0.0
      %1069 = vmatpush2.msra.mxu0 0.0
      %1070 = vmatprep.subr.mxu0 0.0
      %1071 = vmatpush2.msra.mxu0 0.0
      %1072 = vmatprep.subr.mxu0 0.0
      %1073 = vmatpush2.msra.mxu0 0.0
      %1074 = vmatprep.subr.mxu0 0.0
      %1075 = vmatpush2.msra.mxu0 0.0
      %1076 = vmatprep.subr.mxu0 0.0
      %1077 = vmatpush2.msra.mxu0 0.0
      %1078 = vmatprep.subr.mxu0 0.0
      %1079 = vmatpush2.msra.mxu0 0.0
      %1080 = vmatprep.mubr.f32.mxu0 0.0
      %1081 = vmatmul.mubr.f32.gmra.mxu0 %v1001
      %v1082 = vpop.f32.mrf.mxu0
      %v1083 = vadd.f32 %v997, %v1082
      %v1084 = vpop.f32.mrf.mxu0
      %1085 = vmatprep.mubr.f32.mxu0 0.0
      %1086 = vmatmul.mubr.f32.gmra.mxu0 %v1004
      %v1087 = vpop.f32.mrf.mxu0
      %v1088 = vadd.f32 %v997, %v1087
      %v1089 = vpop.f32.mrf.mxu0
      %1090 = vmatprep.mubr.f32.mxu0 0.0
      %1091 = vmatmul.mubr.f32.gmra.mxu0 %v1007
      %v1092 = vpop.f32.mrf.mxu0
      %v1093 = vadd.f32 %v997, %v1092
      %v1094 = vpop.f32.mrf.mxu0
      %1095 = vmatprep.mubr.f32.mxu0 0.0
      %1096 = vmatmul.mubr.f32.gmra.mxu0 %v1010
      %v1097 = vpop.f32.mrf.mxu0
      %v1098 = vadd.f32 %v997, %v1097
      %v1099 = vpop.f32.mrf.mxu0
      %1100 = vdwg.mxu0
      %v1101 = vxor.u32 %v1083, 2147483648
      %v1102 = vxor.u32 %v1088, 2147483648
      %v1103 = vxor.u32 %v1093, 2147483648
      %v1104 = vxor.u32 %v1098, 2147483648
      %v1105 = vmul.f32 %v1101, 1.442695
      %v1106 = vpow.pop %v1105
      %v1107 = vmul.f32 %v1102, 1.442695
      %v1108 = vpow.pop %v1107
      %v1109 = vmul.f32 %v1103, 1.442695
      %v1110 = vpow.pop %v1109
      %v1111 = vmul.f32 %v1104, 1.442695
      %v1112 = vpow.pop %v1111
      %v1113 = vadd.f32 %v1106, 1.0
      %v1114 = vadd.f32 %v1108, 1.0
      %v1115 = vadd.f32 %v1110, 1.0
      %v1116 = vadd.f32 %v1112, 1.0
      %v1117 = vrcp.pop %v1113
      %v1118 = vmul.f32 1.0, %v1117
      %v1119 = vrcp.pop %v1114
      %v1120 = vmul.f32 1.0, %v1119
      %v1121 = vrcp.pop %v1115
      %v1122 = vmul.f32 1.0, %v1121
      %v1123 = vrcp.pop %v1116
      %v1124 = vmul.f32 1.0, %v1123
      %v1125 = vld [vmem:[%s7] sm:$0xff]
      %v1126 = vld [vmem:[%s7 + $0x8] sm:$0xff]
      %v1127 = vld [vmem:[%s8] sm:$0x1]
      %v1129 = vlaneseq
      %v1130 = vshrl.u32 %v1129, 7
      %v1131 = vsub.s32 0, %v1130
      %v1132 = vrot.slane %v1127, %v1131
      %vm1134 = vcmask 130048
      %v1136 = vsel %vm1134, %v1118, 0
      %v1139 = vsel %vm1134, %v1120, 0
      %v1142 = vsel %vm1134, %v1122, 0
      %v1145 = vsel %vm1134, %v1124, 0
      %1147 = vmatprep.subr.mxu0 0.0
      %1148 = vmatpush1.msra.mxu0 0.0
      %1149 = vmatprep.subr.mxu0 0.0
      %1150 = vmatpush1.msra.mxu0 0.0
      %1151 = vmatprep.subr.mxu0 0.0
      %1152 = vmatpush1.msra.mxu0 0.0
      %1153 = vmatprep.subr.mxu0 0.0
      %1154 = vmatpush1.msra.mxu0 0.0
      %1155 = vmatprep.subr.mxu0 0.0
      %1156 = vmatpush1.msra.mxu0 0.0
      %1157 = vmatprep.subr.mxu0 0.0
      %1158 = vmatpush1.msra.mxu0 0.0
      %1159 = vmatprep.subr.mxu0 0.0
      %1160 = vmatpush1.msra.mxu0 0.0
      %1161 = vmatprep.subr.mxu0 0.0
      %1162 = vmatpush1.msra.mxu0 0.0
      %1163 = vmatprep.subr.mxu0 0.0
      %1164 = vmatpush1.msra.mxu0 0.0
      %1165 = vmatprep.subr.mxu0 0.0
      %1166 = vmatpush1.msra.mxu0 0.0
      %1167 = vmatprep.subr.mxu0 0.0
      %1168 = vmatpush1.msra.mxu0 0.0
      %1169 = vmatprep.subr.mxu0 0.0
      %1170 = vmatpush1.msra.mxu0 0.0
      %1171 = vmatprep.subr.mxu0 0.0
      %1172 = vmatpush1.msra.mxu0 0.0
      %1173 = vmatprep.subr.mxu0 0.0
      %1174 = vmatpush1.msra.mxu0 0.0
      %1175 = vmatprep.subr.mxu0 0.0
      %1176 = vmatpush1.msra.mxu0 %v1126
      %1177 = vmatprep.subr.mxu0 0.0
      %1178 = vmatpush1.msra.mxu0 %v1125
      %1179 = vmatprep.subr.mxu0 0.0
      %1180 = vmatpush2.msra.mxu0 0.0
      %1181 = vmatprep.subr.mxu0 0.0
      %1182 = vmatpush2.msra.mxu0 0.0
      %1183 = vmatprep.subr.mxu0 0.0
      %1184 = vmatpush2.msra.mxu0 0.0
      %1185 = vmatprep.subr.mxu0 0.0
      %1186 = vmatpush2.msra.mxu0 0.0
      %1187 = vmatprep.subr.mxu0 0.0
      %1188 = vmatpush2.msra.mxu0 0.0
      %1189 = vmatprep.subr.mxu0 0.0
      %1190 = vmatpush2.msra.mxu0 0.0
      %1191 = vmatprep.subr.mxu0 0.0
      %1192 = vmatpush2.msra.mxu0 0.0
      %1193 = vmatprep.subr.mxu0 0.0
      %1194 = vmatpush2.msra.mxu0 0.0
      %1195 = vmatprep.subr.mxu0 0.0
      %1196 = vmatpush2.msra.mxu0 0.0
      %1197 = vmatprep.subr.mxu0 0.0
      %1198 = vmatpush2.msra.mxu0 0.0
      %1199 = vmatprep.subr.mxu0 0.0
      %1200 = vmatpush2.msra.mxu0 0.0
      %1201 = vmatprep.subr.mxu0 0.0
      %1202 = vmatpush2.msra.mxu0 0.0
      %1203 = vmatprep.subr.mxu0 0.0
      %1204 = vmatpush2.msra.mxu0 0.0
      %1205 = vmatprep.subr.mxu0 0.0
      %1206 = vmatpush2.msra.mxu0 0.0
      %1207 = vmatprep.subr.mxu0 0.0
      %1208 = vmatpush2.msra.mxu0 0.0
      %1209 = vmatprep.subr.mxu0 0.0
      %1210 = vmatpush2.msra.mxu0 0.0
      %1211 = vmatprep.mubr.f32.mxu0 0.0
      %1212 = vmatmul.mubr.f32.gmra.mxu0 %v1136
      %v1213 = vpop.f32.mrf.mxu0
      %v1214 = vadd.f32 %v1132, %v1213
      %v1215 = vpop.f32.mrf.mxu0
      %1216 = vmatprep.mubr.f32.mxu0 0.0
      %1217 = vmatmul.mubr.f32.gmra.mxu0 %v1139
      %v1218 = vpop.f32.mrf.mxu0
      %v1219 = vadd.f32 %v1132, %v1218
      %v1220 = vpop.f32.mrf.mxu0
      %1221 = vmatprep.mubr.f32.mxu0 0.0
      %1222 = vmatmul.mubr.f32.gmra.mxu0 %v1142
      %v1223 = vpop.f32.mrf.mxu0
      %v1224 = vadd.f32 %v1132, %v1223
      %v1225 = vpop.f32.mrf.mxu0
      %1226 = vmatprep.mubr.f32.mxu0 0.0
      %1227 = vmatmul.mubr.f32.gmra.mxu0 %v1145
      %v1228 = vpop.f32.mrf.mxu0
      %v1229 = vadd.f32 %v1132, %v1228
      %v1230 = vpop.f32.mrf.mxu0
      %1231 = vdwg.mxu0
      %v1232 = vxor.u32 %v1214, 2147483648
      %v1233 = vxor.u32 %v1219, 2147483648
      %v1234 = vxor.u32 %v1224, 2147483648
      %v1235 = vxor.u32 %v1229, 2147483648
      %v1236 = vmul.f32 %v1232, 1.442695
      %v1237 = vpow.pop %v1236
      %v1238 = vmul.f32 %v1233, 1.442695
      %v1239 = vpow.pop %v1238
      %v1240 = vmul.f32 %v1234, 1.442695
      %v1241 = vpow.pop %v1240
      %v1242 = vmul.f32 %v1235, 1.442695
      %v1243 = vpow.pop %v1242
      %v1244 = vadd.f32 %v1237, 1.0
      %v1245 = vadd.f32 %v1239, 1.0
      %v1246 = vadd.f32 %v1241, 1.0
      %v1247 = vadd.f32 %v1243, 1.0
      %v1248 = vrcp.pop %v1244
      %v1249 = vmul.f32 1.0, %v1248
      %v1250 = vrcp.pop %v1245
      %v1251 = vmul.f32 1.0, %v1250
      %v1252 = vrcp.pop %v1246
      %v1253 = vmul.f32 1.0, %v1252
      %v1254 = vrcp.pop %v1247
      %v1255 = vmul.f32 1.0, %v1254
      %v1256 = vld [vmem:[%s9] sm:$0x3]
      %v1257 = vld [vmem:[%s10] sm:$0x1]
      %v1259 = vlaneseq
      %v1260 = vshrl.u32 %v1259, 7
      %v1261 = vsub.s32 0, %v1260
      %v1262 = vrot.slane %v1257, %v1261
      %v1265 = vsel %vm982, %v1249, 0
      %v1268 = vsel %vm982, %v1251, 0
      %v1271 = vsel %vm982, %v1253, 0
      %v1274 = vsel %vm982, %v1255, 0
      %v1277 = vsel %vm1012, %v1256, 0
      %1279 = vmatprep.subr.mxu0 0.0
      %1280 = vmatpush1.msra.mxu0 0.0
      %1281 = vmatprep.subr.mxu0 0.0
      %1282 = vmatpush1.msra.mxu0 0.0
      %1283 = vmatprep.subr.mxu0 0.0
      %1284 = vmatpush1.msra.mxu0 0.0
      %1285 = vmatprep.subr.mxu0 0.0
      %1286 = vmatpush1.msra.mxu0 0.0
      %1287 = vmatprep.subr.mxu0 0.0
      %1288 = vmatpush1.msra.mxu0 0.0
      %1289 = vmatprep.subr.mxu0 0.0
      %1290 = vmatpush1.msra.mxu0 0.0
      %1291 = vmatprep.subr.mxu0 0.0
      %1292 = vmatpush1.msra.mxu0 0.0
      %1293 = vmatprep.subr.mxu0 0.0
      %1294 = vmatpush1.msra.mxu0 0.0
      %1295 = vmatprep.subr.mxu0 0.0
      %1296 = vmatpush1.msra.mxu0 0.0
      %1297 = vmatprep.subr.mxu0 0.0
      %1298 = vmatpush1.msra.mxu0 0.0
      %1299 = vmatprep.subr.mxu0 0.0
      %1300 = vmatpush1.msra.mxu0 0.0
      %1301 = vmatprep.subr.mxu0 0.0
      %1302 = vmatpush1.msra.mxu0 0.0
      %1303 = vmatprep.subr.mxu0 0.0
      %1304 = vmatpush1.msra.mxu0 0.0
      %1305 = vmatprep.subr.mxu0 0.0
      %1306 = vmatpush1.msra.mxu0 0.0
      %1307 = vmatprep.subr.mxu0 0.0
      %1308 = vmatpush1.msra.mxu0 0.0
      %1309 = vmatprep.subr.mxu0 0.0
      %1310 = vmatpush1.msra.mxu0 %v1277
      %1311 = vmatprep.subr.mxu0 0.0
      %1312 = vmatpush2.msra.mxu0 0.0
      %1313 = vmatprep.subr.mxu0 0.0
      %1314 = vmatpush2.msra.mxu0 0.0
      %1315 = vmatprep.subr.mxu0 0.0
      %1316 = vmatpush2.msra.mxu0 0.0
      %1317 = vmatprep.subr.mxu0 0.0
      %1318 = vmatpush2.msra.mxu0 0.0
      %1319 = vmatprep.subr.mxu0 0.0
      %1320 = vmatpush2.msra.mxu0 0.0
      %1321 = vmatprep.subr.mxu0 0.0
      %1322 = vmatpush2.msra.mxu0 0.0
      %1323 = vmatprep.subr.mxu0 0.0
      %1324 = vmatpush2.msra.mxu0 0.0
      %1325 = vmatprep.subr.mxu0 0.0
      %1326 = vmatpush2.msra.mxu0 0.0
      %1327 = vmatprep.subr.mxu0 0.0
      %1328 = vmatpush2.msra.mxu0 0.0
      %1329 = vmatprep.subr.mxu0 0.0
      %1330 = vmatpush2.msra.mxu0 0.0
      %1331 = vmatprep.subr.mxu0 0.0
      %1332 = vmatpush2.msra.mxu0 0.0
      %1333 = vmatprep.subr.mxu0 0.0
      %1334 = vmatpush2.msra.mxu0 0.0
      %1335 = vmatprep.subr.mxu0 0.0
      %1336 = vmatpush2.msra.mxu0 0.0
      %1337 = vmatprep.subr.mxu0 0.0
      %1338 = vmatpush2.msra.mxu0 0.0
      %1339 = vmatprep.subr.mxu0 0.0
      %1340 = vmatpush2.msra.mxu0 0.0
      %1341 = vmatprep.subr.mxu0 0.0
      %1342 = vmatpush2.msra.mxu0 0.0
      %1343 = vmatprep.mubr.f32.mxu0 0.0
      %1344 = vmatmul.mubr.f32.gmra.mxu0 %v1265
      %v1345 = vpop.f32.mrf.mxu0
      %v1346 = vadd.f32 %v1262, %v1345
      %v1347 = vpop.f32.mrf.mxu0
      %1348 = vmatprep.mubr.f32.mxu0 0.0
      %1349 = vmatmul.mubr.f32.gmra.mxu0 %v1268
      %v1350 = vpop.f32.mrf.mxu0
      %v1351 = vadd.f32 %v1262, %v1350
      %v1352 = vpop.f32.mrf.mxu0
      %1353 = vmatprep.mubr.f32.mxu0 0.0
      %1354 = vmatmul.mubr.f32.gmra.mxu0 %v1271
      %v1355 = vpop.f32.mrf.mxu0
      %v1356 = vadd.f32 %v1262, %v1355
      %v1357 = vpop.f32.mrf.mxu0
      %1358 = vmatprep.mubr.f32.mxu0 0.0
      %1359 = vmatmul.mubr.f32.gmra.mxu0 %v1274
      %v1360 = vpop.f32.mrf.mxu0
      %v1361 = vadd.f32 %v1262, %v1360
      %v1362 = vpop.f32.mrf.mxu0
      %1363 = vdwg.mxu0
      %v1364 = vmul.f32 %v918, %v1346
      %v1365 = vmul.f32 %v919, %v1351
      %v1366 = vmul.f32 %v920, %v1356
      %v1367 = vmul.f32 %v921, %v1361
      %v1368 = vtanh.pop %v1364
      %v1369 = vtanh.pop %v1365
      %v1370 = vtanh.pop %v1366
      %v1371 = vtanh.pop %v1367
      %v1372 = vpack.c.bf16 %v1369, %v1368
      %v1373 = vpack.c.bf16 %v1371, %v1370
      %vm1374 = vcmask 64512
      %v1376 = vsel %vm1374, %v1372, 0
      %1378 = vmatprep.subr.bf16.mxu0 0
      %1379 = vmatpush1.bf16.xpose.msra.mxu0 0
      %1380 = vmatprep.subr.bf16.mxu0 0
      %1381 = vmatpush1.bf16.xpose.msra.mxu0 0
      %1382 = vmatprep.subr.bf16.mxu0 0
      %1383 = vmatpush1.bf16.xpose.msra.mxu0 0
      %1384 = vmatprep.subr.bf16.mxu0 0
      %1385 = vmatpush1.bf16.xpose.msra.mxu0 0
      %1386 = vmatprep.subr.bf16.mxu0 0
      %1387 = vmatpush1.bf16.xpose.msra.mxu0 0
      %1388 = vmatprep.subr.bf16.mxu0 0
      %1389 = vmatpush1.bf16.xpose.msra.mxu0 0
      %1390 = vmatprep.subr.bf16.mxu0 0
      %1391 = vmatpush1.bf16.xpose.msra.mxu0 0
      %1392 = vmatprep.subr.bf16.mxu0 0
      %1393 = vmatpush1.bf16.xpose.msra.mxu0 %v1376
      %1394 = vmatprep.subr.bf16.mxu0 0
      %1395 = vmatpush2.bf16.xpose.msra.mxu0 0
      %1396 = vmatprep.subr.bf16.mxu0 0
      %1397 = vmatpush2.bf16.xpose.msra.mxu0 0
      %1398 = vmatprep.subr.bf16.mxu0 0
      %1399 = vmatpush2.bf16.xpose.msra.mxu0 0
      %1400 = vmatprep.subr.bf16.mxu0 0
      %1401 = vmatpush2.bf16.xpose.msra.mxu0 0
      %1402 = vmatprep.subr.bf16.mxu0 0
      %1403 = vmatpush2.bf16.xpose.msra.mxu0 0
      %1404 = vmatprep.subr.bf16.mxu0 0
      %1405 = vmatpush2.bf16.xpose.msra.mxu0 0
      %1406 = vmatprep.subr.bf16.mxu0 0
      %1407 = vmatpush2.bf16.xpose.msra.mxu0 0
      %1408 = vmatprep.subr.bf16.mxu0 0
      %1409 = vmatpush2.bf16.xpose.msra.mxu0 0
      %1410 = vmatprep.mubr.bf16.mxu0 0
      %1411 = vmatmul.mubr.bf16.gmra.mxu0 %v1376
      %v1412 = vpop.f32.mrf.mxu0
      %v1413 = vadd.f32 0.0, %v1412
      %v1414 = vpop.f32.mrf.mxu0
      %v1415 = vpop.f32.mrf.mxu0
      %v1416 = vadd.f32 0.0, %v1415
      %v1417 = vpop.f32.mrf.mxu0
      %1418 = vdwg.mxu0
      %v1420 = vsel %vm1374, %v1373, 0
      %1422 = vmatprep.subr.bf16.mxu0 0
      %1423 = vmatpush1.bf16.xpose.msra.mxu0 0
      %1424 = vmatprep.subr.bf16.mxu0 0
      %1425 = vmatpush1.bf16.xpose.msra.mxu0 0
      %1426 = vmatprep.subr.bf16.mxu0 0
      %1427 = vmatpush1.bf16.xpose.msra.mxu0 0
      %1428 = vmatprep.subr.bf16.mxu0 0
      %1429 = vmatpush1.bf16.xpose.msra.mxu0 0
      %1430 = vmatprep.subr.bf16.mxu0 0
      %1431 = vmatpush1.bf16.xpose.msra.mxu0 0
      %1432 = vmatprep.subr.bf16.mxu0 0
      %1433 = vmatpush1.bf16.xpose.msra.mxu0 0
      %1434 = vmatprep.subr.bf16.mxu0 0
      %1435 = vmatpush1.bf16.xpose.msra.mxu0 0
      %1436 = vmatprep.subr.bf16.mxu0 0
      %1437 = vmatpush1.bf16.xpose.msra.mxu0 %v1420
      %1438 = vmatprep.subr.bf16.mxu0 0
      %1439 = vmatpush2.bf16.xpose.msra.mxu0 0
      %1440 = vmatprep.subr.bf16.mxu0 0
      %1441 = vmatpush2.bf16.xpose.msra.mxu0 0
      %1442 = vmatprep.subr.bf16.mxu0 0
      %1443 = vmatpush2.bf16.xpose.msra.mxu0 0
      %1444 = vmatprep.subr.bf16.mxu0 0
      %1445 = vmatpush2.bf16.xpose.msra.mxu0 0
      %1446 = vmatprep.subr.bf16.mxu0 0
      %1447 = vmatpush2.bf16.xpose.msra.mxu0 0
      %1448 = vmatprep.subr.bf16.mxu0 0
      %1449 = vmatpush2.bf16.xpose.msra.mxu0 0
      %1450 = vmatprep.subr.bf16.mxu0 0
      %1451 = vmatpush2.bf16.xpose.msra.mxu0 0
      %1452 = vmatprep.subr.bf16.mxu0 0
      %1453 = vmatpush2.bf16.xpose.msra.mxu0 0
      %1454 = vmatprep.mubr.bf16.mxu0 0
      %1455 = vmatmul.mubr.bf16.gmra.mxu0 %v1420
      %v1456 = vpop.f32.mrf.mxu0
      %v1457 = vadd.f32 0.0, %v1456
      %v1458 = vpop.f32.mrf.mxu0
      %v1459 = vpop.f32.mrf.mxu0
      %v1460 = vadd.f32 0.0, %v1459
      %v1461 = vpop.f32.mrf.mxu0
      %1462 = vdwg.mxu0
      %v1463 = vmax.f32 %v1413, 0.0
      %v1464 = vmax.f32 %v1416, 0.0
      %v1465 = vmax.f32 %v1457, 0.0
      %v1466 = vmax.f32 %v1460, 0.0
      %v1467 = vsel %vm1134, %v1463, 0.0
      %1468 = vadd.xlane.f32.xlu0 %v1467
      %v1469 = vpop.xlane.xlu0 %1468
      %v1470 = vsel %vm1134, %v1464, 0.0
      %1471 = vadd.xlane.f32.xlu0 %v1470
      %v1472 = vpop.xlane.xlu0 %1471
      %v1473 = vsel %vm1134, %v1465, 0.0
      %1474 = vadd.xlane.f32.xlu0 %v1473
      %v1475 = vpop.xlane.xlu0 %1474
      %v1476 = vsel %vm1134, %v1466, 0.0
      %1477 = vadd.xlane.f32.xlu0 %v1476
      %v1478 = vpop.xlane.xlu0 %1477
      %v1479 = vadd.f32 %v1469, 1.0
      %v1480 = vadd.f32 %v1472, 1.0
      %v1481 = vadd.f32 %v1475, 1.0
      %v1482 = vadd.f32 %v1478, 1.0
      %v1483 = vrsqrt.pop %v1479
      %v1484 = vrsqrt.pop %v1480
      %v1485 = vrsqrt.pop %v1481
      %v1486 = vrsqrt.pop %v1482
      %v1487 = vmul.f32 %v1483, %v983
      %v1488 = vmul.f32 %v1484, %v984
      %v1489 = vmul.f32 %v1485, %v985
      %v1490 = vmul.f32 %v1486, %v986
      %v1491 = vpack.c.bf16 %v1464, %v1463
      %v1492 = vpack.c.bf16 %v1466, %v1465
      %v1493 = vpack.c.bf16 %v1488, %v1487
      %v1494 = vpack.c.bf16 %v1490, %v1489
      %v1496 = vsel %vm1134, %v1491, 0
      %1498 = vmatprep.subr.bf16.mxu0 0
      %1499 = vmatpush1.bf16.msra.mxu0 0
      %1500 = vmatprep.subr.bf16.mxu0 0
      %1501 = vmatpush1.bf16.msra.mxu0 0
      %1502 = vmatprep.subr.bf16.mxu0 0
      %1503 = vmatpush1.bf16.msra.mxu0 0
      %1504 = vmatprep.subr.bf16.mxu0 0
      %1505 = vmatpush1.bf16.msra.mxu0 0
      %1506 = vmatprep.subr.bf16.mxu0 0
      %1507 = vmatpush1.bf16.msra.mxu0 0
      %1508 = vmatprep.subr.bf16.mxu0 0
      %1509 = vmatpush1.bf16.msra.mxu0 0
      %1510 = vmatprep.subr.bf16.mxu0 0
      %1511 = vmatpush1.bf16.msra.mxu0 0
      %1512 = vmatprep.subr.bf16.mxu0 0
      %1513 = vmatpush1.bf16.msra.mxu0 %v1493
      %1514 = vmatprep.subr.bf16.mxu0 0
      %1515 = vmatpush2.bf16.msra.mxu0 0
      %1516 = vmatprep.subr.bf16.mxu0 0
      %1517 = vmatpush2.bf16.msra.mxu0 0
      %1518 = vmatprep.subr.bf16.mxu0 0
      %1519 = vmatpush2.bf16.msra.mxu0 0
      %1520 = vmatprep.subr.bf16.mxu0 0
      %1521 = vmatpush2.bf16.msra.mxu0 0
      %1522 = vmatprep.subr.bf16.mxu0 0
      %1523 = vmatpush2.bf16.msra.mxu0 0
      %1524 = vmatprep.subr.bf16.mxu0 0
      %1525 = vmatpush2.bf16.msra.mxu0 0
      %1526 = vmatprep.subr.bf16.mxu0 0
      %1527 = vmatpush2.bf16.msra.mxu0 0
      %1528 = vmatprep.subr.bf16.mxu0 0
      %1529 = vmatpush2.bf16.msra.mxu0 0
      %1530 = vmatprep.mubr.bf16.mxu0 0
      %1531 = vmatmul.mubr.bf16.gmra.mxu0 %v1496
      %v1532 = vpop.f32.mrf.mxu0
      %v1533 = vadd.f32 0.0, %v1532
      %v1534 = vpop.f32.mrf.mxu0
      %v1535 = vpop.f32.mrf.mxu0
      %v1536 = vadd.f32 0.0, %v1535
      %v1537 = vpop.f32.mrf.mxu0
      %1538 = vdwg.mxu0
      %v1540 = vsel %vm1134, %v1492, 0
      %1542 = vmatprep.subr.bf16.mxu0 0
      %1543 = vmatpush1.bf16.msra.mxu0 0
      %1544 = vmatprep.subr.bf16.mxu0 0
      %1545 = vmatpush1.bf16.msra.mxu0 0
      %1546 = vmatprep.subr.bf16.mxu0 0
      %1547 = vmatpush1.bf16.msra.mxu0 0
      %1548 = vmatprep.subr.bf16.mxu0 0
      %1549 = vmatpush1.bf16.msra.mxu0 0
      %1550 = vmatprep.subr.bf16.mxu0 0
      %1551 = vmatpush1.bf16.msra.mxu0 0
      %1552 = vmatprep.subr.bf16.mxu0 0
      %1553 = vmatpush1.bf16.msra.mxu0 0
      %1554 = vmatprep.subr.bf16.mxu0 0
      %1555 = vmatpush1.bf16.msra.mxu0 0
      %1556 = vmatprep.subr.bf16.mxu0 0
      %1557 = vmatpush1.bf16.msra.mxu0 %v1494
      %1558 = vmatprep.subr.bf16.mxu0 0
      %1559 = vmatpush2.bf16.msra.mxu0 0
      %1560 = vmatprep.subr.bf16.mxu0 0
      %1561 = vmatpush2.bf16.msra.mxu0 0
      %1562 = vmatprep.subr.bf16.mxu0 0
      %1563 = vmatpush2.bf16.msra.mxu0 0
      %1564 = vmatprep.subr.bf16.mxu0 0
      %1565 = vmatpush2.bf16.msra.mxu0 0
      %1566 = vmatprep.subr.bf16.mxu0 0
      %1567 = vmatpush2.bf16.msra.mxu0 0
      %1568 = vmatprep.subr.bf16.mxu0 0
      %1569 = vmatpush2.bf16.msra.mxu0 0
      %1570 = vmatprep.subr.bf16.mxu0 0
      %1571 = vmatpush2.bf16.msra.mxu0 0
      %1572 = vmatprep.subr.bf16.mxu0 0
      %1573 = vmatpush2.bf16.msra.mxu0 0
      %1574 = vmatprep.mubr.bf16.mxu0 0
      %1575 = vmatmul.mubr.bf16.gmra.mxu0 %v1540
      %v1576 = vpop.f32.mrf.mxu0
      %v1577 = vadd.f32 0.0, %v1576
      %v1578 = vpop.f32.mrf.mxu0
      %v1579 = vpop.f32.mrf.mxu0
      %v1580 = vadd.f32 0.0, %v1579
      %v1581 = vpop.f32.mrf.mxu0
      %1582 = vdwg.mxu0
      %v1583 = vmul.f32 %v1483, %v1533
      %v1584 = vmul.f32 %v1484, %v1536
      %v1585 = vmul.f32 %v1485, %v1577
      %v1586 = vmul.f32 %v1486, %v1580
      %v1587 = vmul.f32 %v1483, %v1487
      %v1588 = vmul.f32 %v1484, %v1488
      %v1589 = vmul.f32 %v1485, %v1489
      %v1590 = vmul.f32 %v1486, %v1490
      %v1591 = vadd.f32 %v1583, %v1587
      %v1592 = vadd.f32 %v1584, %v1588
      %v1593 = vadd.f32 %v1585, %v1589
      %v1594 = vadd.f32 %v1586, %v1590
      %v1595 = vpack.c.bf16 %v984, %v983
      %v1596 = vpack.c.bf16 %v986, %v985
      %v1597 = vpack.c.bf16 %v1592, %v1591
      %v1598 = vpack.c.bf16 %v1594, %v1593
      %v1599 = vld [vmem:[%s11] sm:$0xff]
      %v1600 = vld [vmem:[%s11 + $0x8] sm:$0xff]
      %v1601 = vld [vmem:[%s11 + $0x10] sm:$0xff]
      %v1602 = vld [vmem:[%s11 + $0x18] sm:$0xff]
      %v1603 = vld [vmem:[%s11 + $0x20] sm:$0x11]
      %v1604 = vld [vmem:[%s12] sm:$0xff]
      %v1605 = vld [vmem:[%s12 + $0x8] sm:$0xff]
      %v1606 = vld [vmem:[%s12 + $0x10] sm:$0xff]
      %v1607 = vld [vmem:[%s12 + $0x18] sm:$0xff]
      %v1608 = vld [vmem:[%s12 + $0x20] sm:$0x11]
      %v1614 = vunpack.c.l.b16 %v1604
      %v1615 = vunpack.c.h.b16 %v1604
      %v1616 = vunpack.c.l.b16 %v1605
      %v1617 = vunpack.c.h.b16 %v1605
      %v1618 = vunpack.c.l.b16 %v1606
      %v1619 = vunpack.c.h.b16 %v1606
      %v1620 = vunpack.c.l.b16 %v1607
      %v1621 = vunpack.c.h.b16 %v1607
      %v1622 = vunpack.c.l.b16 %v1608
      %v1623 = vunpack.c.h.b16 %v1608
      %v1624 = vpack.c.b16 %v1616, %v1614
      %v1625 = vpack.c.b16 %v1617, %v1615
      %v1626 = vpack.c.b16 %v1620, %v1618
      %v1627 = vpack.c.b16 %v1621, %v1619
      %v1628 = vpack.c.b16 %v1622, %v1622
      %v1629 = vpack.c.b16 %v1623, %v1623
      %v1635 = vsel %vm999, %v1597, 0
      %v1638 = vsel %vm999, %v1598, 0
      %vm1640 = vcmask 1040384
      %v1642 = vsel %vm1640, %v1628, 0
      %v1645 = vsel %vm1640, %v1629, 0
      %1647 = vmatprep.subr.bf16.mxu0 0
      %1648 = vmatpush1.bf16.msra.mxu0 0
      %1649 = vmatprep.subr.bf16.mxu0 0
      %1650 = vmatpush1.bf16.msra.mxu0 0
      %1651 = vmatprep.subr.bf16.mxu0 0
      %1652 = vmatpush1.bf16.msra.mxu0 0
      %1653 = vmatprep.subr.bf16.mxu0 0
      %1654 = vmatpush1.bf16.msra.mxu0 0
      %1655 = vmatprep.subr.bf16.mxu0 0
      %1656 = vmatpush1.bf16.msra.mxu0 0
      %1657 = vmatprep.subr.bf16.mxu0 %v1645
      %1658 = vmatpush1.bf16.msra.mxu0 %v1642
      %1659 = vmatprep.subr.bf16.mxu0 %v1627
      %1660 = vmatpush1.bf16.msra.mxu0 %v1626
      %1661 = vmatprep.subr.bf16.mxu0 %v1625
      %1662 = vmatpush1.bf16.msra.mxu0 %v1624
      %1663 = vmatprep.subr.bf16.mxu0 0
      %1664 = vmatpush2.bf16.msra.mxu0 0
      %1665 = vmatprep.subr.bf16.mxu0 0
      %1666 = vmatpush2.bf16.msra.mxu0 0
      %1667 = vmatprep.subr.bf16.mxu0 0
      %1668 = vmatpush2.bf16.msra.mxu0 0
      %1669 = vmatprep.subr.bf16.mxu0 0
      %1670 = vmatpush2.bf16.msra.mxu0 0
      %1671 = vmatprep.subr.bf16.mxu0 0
      %1672 = vmatpush2.bf16.msra.mxu0 0
      %1673 = vmatprep.subr.bf16.mxu0 0
      %1674 = vmatpush2.bf16.msra.mxu0 0
      %1675 = vmatprep.subr.bf16.mxu0 0
      %1676 = vmatpush2.bf16.msra.mxu0 0
      %1677 = vmatprep.subr.bf16.mxu0 0
      %1678 = vmatpush2.bf16.msra.mxu0 0
      %1679 = vmatprep.mubr.bf16.mxu0 0
      %1680 = vmatmul.mubr.bf16.gmra.mxu0 %v1635
      %v1681 = vpop.f32.mrf.mxu0
      %v1682 = vadd.f32 0.0, %v1681
      %v1683 = vpop.f32.mrf.mxu0
      %v1684 = vadd.f32 0.0, %v1683
      %v1685 = vpop.f32.mrf.mxu0
      %v1686 = vadd.f32 0.0, %v1685
      %v1687 = vpop.f32.mrf.mxu0
      %v1688 = vadd.f32 0.0, %v1687
      %1689 = vmatprep.mubr.bf16.mxu0 0
      %1690 = vmatmul.mubr.bf16.gmra.mxu0 %v1638
      %v1691 = vpop.f32.mrf.mxu0
      %v1692 = vadd.f32 0.0, %v1691
      %v1693 = vpop.f32.mrf.mxu0
      %v1694 = vadd.f32 0.0, %v1693
      %v1695 = vpop.f32.mrf.mxu0
      %v1696 = vadd.f32 0.0, %v1695
      %v1697 = vpop.f32.mrf.mxu0
      %v1698 = vadd.f32 0.0, %v1697
      %1699 = vdwg.mxu0
      %v1705 = vunpack.c.l.b16 %v1599
      %v1706 = vunpack.c.h.b16 %v1599
      %v1707 = vunpack.c.l.b16 %v1600
      %v1708 = vunpack.c.h.b16 %v1600
      %v1709 = vunpack.c.l.b16 %v1601
      %v1710 = vunpack.c.h.b16 %v1601
      %v1711 = vunpack.c.l.b16 %v1602
      %v1712 = vunpack.c.h.b16 %v1602
      %v1713 = vunpack.c.l.b16 %v1603
      %v1714 = vunpack.c.h.b16 %v1603
      %v1715 = vpack.c.b16 %v1707, %v1705
      %v1716 = vpack.c.b16 %v1708, %v1706
      %v1717 = vpack.c.b16 %v1711, %v1709
      %v1718 = vpack.c.b16 %v1712, %v1710
      %v1719 = vpack.c.b16 %v1713, %v1713
      %v1720 = vpack.c.b16 %v1714, %v1714
      %v1726 = vsel %vm999, %v1595, 0
      %v1729 = vsel %vm999, %v1596, 0
      %v1732 = vsel %vm1640, %v1719, 0
      %v1735 = vsel %vm1640, %v1720, 0
      %1737 = vmatprep.subr.bf16.mxu0 0
      %1738 = vmatpush1.bf16.msra.mxu0 0
      %1739 = vmatprep.subr.bf16.mxu0 0
      %1740 = vmatpush1.bf16.msra.mxu0 0
      %1741 = vmatprep.subr.bf16.mxu0 0
      %1742 = vmatpush1.bf16.msra.mxu0 0
      %1743 = vmatprep.subr.bf16.mxu0 0
      %1744 = vmatpush1.bf16.msra.mxu0 0
      %1745 = vmatprep.subr.bf16.mxu0 0
      %1746 = vmatpush1.bf16.msra.mxu0 0
      %1747 = vmatprep.subr.bf16.mxu0 %v1735
      %1748 = vmatpush1.bf16.msra.mxu0 %v1732
      %1749 = vmatprep.subr.bf16.mxu0 %v1718
      %1750 = vmatpush1.bf16.msra.mxu0 %v1717
      %1751 = vmatprep.subr.bf16.mxu0 %v1716
      %1752 = vmatpush1.bf16.msra.mxu0 %v1715
      %1753 = vmatprep.subr.bf16.mxu0 0
      %1754 = vmatpush2.bf16.msra.mxu0 0
      %1755 = vmatprep.subr.bf16.mxu0 0
      %1756 = vmatpush2.bf16.msra.mxu0 0
      %1757 = vmatprep.subr.bf16.mxu0 0
      %1758 = vmatpush2.bf16.msra.mxu0 0
      %1759 = vmatprep.subr.bf16.mxu0 0
      %1760 = vmatpush2.bf16.msra.mxu0 0
      %1761 = vmatprep.subr.bf16.mxu0 0
      %1762 = vmatpush2.bf16.msra.mxu0 0
      %1763 = vmatprep.subr.bf16.mxu0 0
      %1764 = vmatpush2.bf16.msra.mxu0 0
      %1765 = vmatprep.subr.bf16.mxu0 0
      %1766 = vmatpush2.bf16.msra.mxu0 0
      %1767 = vmatprep.subr.bf16.mxu0 0
      %1768 = vmatpush2.bf16.msra.mxu0 0
      %1769 = vmatprep.mubr.bf16.mxu0 0
      %1770 = vmatmul.mubr.bf16.gmra.mxu0 %v1726
      %v1771 = vpop.f32.mrf.mxu0
      %v1772 = vadd.f32 %v1682, %v1771
      %v1773 = vpop.f32.mrf.mxu0
      %v1774 = vadd.f32 %v1684, %v1773
      %v1775 = vpop.f32.mrf.mxu0
      %v1776 = vadd.f32 %v1686, %v1775
      %v1777 = vpop.f32.mrf.mxu0
      %v1778 = vadd.f32 %v1688, %v1777
      %1779 = vmatprep.mubr.bf16.mxu0 0
      %1780 = vmatmul.mubr.bf16.gmra.mxu0 %v1729
      %v1781 = vpop.f32.mrf.mxu0
      %v1782 = vadd.f32 %v1692, %v1781
      %v1783 = vpop.f32.mrf.mxu0
      %v1784 = vadd.f32 %v1694, %v1783
      %v1785 = vpop.f32.mrf.mxu0
      %v1786 = vadd.f32 %v1696, %v1785
      %v1787 = vpop.f32.mrf.mxu0
      %v1788 = vadd.f32 %v1698, %v1787
      %1789 = vdwg.mxu0
      %v1790 = vmul.f32 %v1772, %v922
      %v1791 = vmul.f32 %v1774, %v923
      %v1792 = vmul.f32 %v1776, %v924
      %v1793 = vmul.f32 %v1778, %v925
      %v1794 = vmul.f32 %v1782, %v926
      %v1795 = vmul.f32 %v1784, %v927
      %v1796 = vmul.f32 %v1786, %v928
      %v1797 = vmul.f32 %v1788, %v929
      %v1798 = vld [vmem:[%s13] sm:$0xff]
      %v1799 = vld [vmem:[%s13 + $0x8] sm:$0xff]
      %v1800 = vld [vmem:[%s13 + $0x10] sm:$0xff]
      %v1801 = vld [vmem:[%s13 + $0x18] sm:$0xff]
      %1802 = vmatprep.subr.mxu0 0.0
      %1803 = vmatpush1.msra.mxu0 %v945
      %1804 = vmatprep.subr.mxu0 0.0
      %1805 = vmatpush1.msra.mxu0 %v944
      %1806 = vmatprep.subr.mxu0 0.0
      %1807 = vmatpush1.msra.mxu0 %v943
      %1808 = vmatprep.subr.mxu0 0.0
      %1809 = vmatpush1.msra.mxu0 %v942
      %1810 = vmatprep.subr.mxu0 0.0
      %1811 = vmatpush1.msra.mxu0 %v941
      %1812 = vmatprep.subr.mxu0 0.0
      %1813 = vmatpush1.msra.mxu0 %v940
      %1814 = vmatprep.subr.mxu0 0.0
      %1815 = vmatpush1.msra.mxu0 %v939
      %1816 = vmatprep.subr.mxu0 0.0
      %1817 = vmatpush1.msra.mxu0 %v938
      %1818 = vmatprep.subr.mxu0 0.0
      %1819 = vmatpush1.msra.mxu0 %v937
      %1820 = vmatprep.subr.mxu0 0.0
      %1821 = vmatpush1.msra.mxu0 %v936
      %1822 = vmatprep.subr.mxu0 0.0
      %1823 = vmatpush1.msra.mxu0 %v935
      %1824 = vmatprep.subr.mxu0 0.0
      %1825 = vmatpush1.msra.mxu0 %v934
      %1826 = vmatprep.subr.mxu0 0.0
      %1827 = vmatpush1.msra.mxu0 %v933
      %1828 = vmatprep.subr.mxu0 0.0
      %1829 = vmatpush1.msra.mxu0 %v932
      %1830 = vmatprep.subr.mxu0 0.0
      %1831 = vmatpush1.msra.mxu0 %v931
      %1832 = vmatprep.subr.mxu0 0.0
      %1833 = vmatpush1.msra.mxu0 %v930
      %1834 = vmatprep.subr.mxu0 0.0
      %1835 = vmatpush2.msra.mxu0 %v961
      %1836 = vmatprep.subr.mxu0 0.0
      %1837 = vmatpush2.msra.mxu0 %v960
      %1838 = vmatprep.subr.mxu0 0.0
      %1839 = vmatpush2.msra.mxu0 %v959
      %1840 = vmatprep.subr.mxu0 0.0
      %1841 = vmatpush2.msra.mxu0 %v958
      %1842 = vmatprep.subr.mxu0 0.0
      %1843 = vmatpush2.msra.mxu0 %v957
      %1844 = vmatprep.subr.mxu0 0.0
      %1845 = vmatpush2.msra.mxu0 %v956
      %1846 = vmatprep.subr.mxu0 0.0
      %1847 = vmatpush2.msra.mxu0 %v955
      %1848 = vmatprep.subr.mxu0 0.0
      %1849 = vmatpush2.msra.mxu0 %v954
      %1850 = vmatprep.subr.mxu0 0.0
      %1851 = vmatpush2.msra.mxu0 %v953
      %1852 = vmatprep.subr.mxu0 0.0
      %1853 = vmatpush2.msra.mxu0 %v952
      %1854 = vmatprep.subr.mxu0 0.0
      %1855 = vmatpush2.msra.mxu0 %v951
      %1856 = vmatprep.subr.mxu0 0.0
      %1857 = vmatpush2.msra.mxu0 %v950
      %1858 = vmatprep.subr.mxu0 0.0
      %1859 = vmatpush2.msra.mxu0 %v949
      %1860 = vmatprep.subr.mxu0 0.0
      %1861 = vmatpush2.msra.mxu0 %v948
      %1862 = vmatprep.subr.mxu0 0.0
      %1863 = vmatpush2.msra.mxu0 %v947
      %1864 = vmatprep.subr.mxu0 0.0
      %1865 = vmatpush2.msra.mxu0 %v946
      %1866 = vmatprep.mubr.f32.mxu0 %v1791
      %1867 = vmatmul.mubr.f32.gmra.mxu0 %v1790
      %v1868 = vpop.f32.mrf.mxu0
      %v1869 = vadd.f32 %v1798, %v1868
      %v1870 = vpop.f32.mrf.mxu0
      %1871 = vmatprep.mubr.f32.mxu0 %v1793
      %1872 = vmatmul.mubr.f32.gmra.mxu0 %v1792
      %v1873 = vpop.f32.mrf.mxu0
      %v1874 = vadd.f32 %v1799, %v1873
      %v1875 = vpop.f32.mrf.mxu0
      %1876 = vmatprep.mubr.f32.mxu0 %v1795
      %1877 = vmatmul.mubr.f32.gmra.mxu0 %v1794
      %v1878 = vpop.f32.mrf.mxu0
      %v1879 = vadd.f32 %v1800, %v1878
      %v1880 = vpop.f32.mrf.mxu0
      %1881 = vmatprep.mubr.f32.mxu0 %v1797
      %1882 = vmatmul.mubr.f32.gmra.mxu0 %v1796
      %v1883 = vpop.f32.mrf.mxu0
      %v1884 = vadd.f32 %v1801, %v1883
      %v1885 = vpop.f32.mrf.mxu0
      %1886 = vdwg.mxu0
      %v1887 = vxor.u32 %v1869, 2147483648
      %v1888 = vxor.u32 %v1874, 2147483648
      %v1889 = vxor.u32 %v1879, 2147483648
      %v1890 = vxor.u32 %v1884, 2147483648
      %v1891 = vmul.f32 %v1887, 1.442695
      %v1892 = vpow.pop %v1891
      %v1893 = vmul.f32 %v1888, 1.442695
      %v1894 = vpow.pop %v1893
      %v1895 = vmul.f32 %v1889, 1.442695
      %v1896 = vpow.pop %v1895
      %v1897 = vmul.f32 %v1890, 1.442695
      %v1898 = vpow.pop %v1897
      %v1899 = vadd.f32 %v1892, 1.0
      %v1900 = vadd.f32 %v1894, 1.0
      %v1901 = vadd.f32 %v1896, 1.0
      %v1902 = vadd.f32 %v1898, 1.0
      %v1903 = vrcp.pop %v1899
      %v1904 = vmul.f32 1.0, %v1903
      %v1905 = vrcp.pop %v1900
      %v1906 = vmul.f32 1.0, %v1905
      %v1907 = vrcp.pop %v1901
      %v1908 = vmul.f32 1.0, %v1907
      %v1909 = vrcp.pop %v1902
      %v1910 = vmul.f32 1.0, %v1909
      %v1911 = vld [vmem:[%s14] sm:$0xff]
      %v1912 = vld [vmem:[%s14 + $0x8] sm:$0xff]
      %v1913 = vld [vmem:[%s14 + $0x10] sm:$0xff]
      %v1914 = vld [vmem:[%s14 + $0x18] sm:$0xff]
      %v1915 = vld [vmem:[%s14 + $0x20] sm:$0x11]
      %v1916 = vld [vmem:[%s15] sm:$0xff]
      %v1917 = vld [vmem:[%s15 + $0x8] sm:$0xff]
      %v1918 = vld [vmem:[%s15 + $0x10] sm:$0xff]
      %v1919 = vld [vmem:[%s15 + $0x18] sm:$0xff]
      %v1920 = vld [vmem:[%s15 + $0x20] sm:$0x11]
      %v1926 = vunpack.c.l.b16 %v1916
      %v1927 = vunpack.c.h.b16 %v1916
      %v1928 = vunpack.c.l.b16 %v1917
      %v1929 = vunpack.c.h.b16 %v1917
      %v1930 = vunpack.c.l.b16 %v1918
      %v1931 = vunpack.c.h.b16 %v1918
      %v1932 = vunpack.c.l.b16 %v1919
      %v1933 = vunpack.c.h.b16 %v1919
      %v1934 = vunpack.c.l.b16 %v1920
      %v1935 = vunpack.c.h.b16 %v1920
      %v1936 = vpack.c.b16 %v1928, %v1926
      %v1937 = vpack.c.b16 %v1929, %v1927
      %v1938 = vpack.c.b16 %v1932, %v1930
      %v1939 = vpack.c.b16 %v1933, %v1931
      %v1940 = vpack.c.b16 %v1934, %v1934
      %v1941 = vpack.c.b16 %v1935, %v1935
      %v1947 = vsel %vm1640, %v1940, 0
      %v1950 = vsel %vm1640, %v1941, 0
      %1952 = vmatprep.subr.bf16.mxu0 0
      %1953 = vmatpush1.bf16.msra.mxu0 0
      %1954 = vmatprep.subr.bf16.mxu0 0
      %1955 = vmatpush1.bf16.msra.mxu0 0
      %1956 = vmatprep.subr.bf16.mxu0 0
      %1957 = vmatpush1.bf16.msra.mxu0 0
      %1958 = vmatprep.subr.bf16.mxu0 0
      %1959 = vmatpush1.bf16.msra.mxu0 0
      %1960 = vmatprep.subr.bf16.mxu0 0
      %1961 = vmatpush1.bf16.msra.mxu0 0
      %1962 = vmatprep.subr.bf16.mxu0 %v1950
      %1963 = vmatpush1.bf16.msra.mxu0 %v1947
      %1964 = vmatprep.subr.bf16.mxu0 %v1939
      %1965 = vmatpush1.bf16.msra.mxu0 %v1938
      %1966 = vmatprep.subr.bf16.mxu0 %v1937
      %1967 = vmatpush1.bf16.msra.mxu0 %v1936
      %1968 = vmatprep.subr.bf16.mxu0 0
      %1969 = vmatpush2.bf16.msra.mxu0 0
      %1970 = vmatprep.subr.bf16.mxu0 0
      %1971 = vmatpush2.bf16.msra.mxu0 0
      %1972 = vmatprep.subr.bf16.mxu0 0
      %1973 = vmatpush2.bf16.msra.mxu0 0
      %1974 = vmatprep.subr.bf16.mxu0 0
      %1975 = vmatpush2.bf16.msra.mxu0 0
      %1976 = vmatprep.subr.bf16.mxu0 0
      %1977 = vmatpush2.bf16.msra.mxu0 0
      %1978 = vmatprep.subr.bf16.mxu0 0
      %1979 = vmatpush2.bf16.msra.mxu0 0
      %1980 = vmatprep.subr.bf16.mxu0 0
      %1981 = vmatpush2.bf16.msra.mxu0 0
      %1982 = vmatprep.subr.bf16.mxu0 0
      %1983 = vmatpush2.bf16.msra.mxu0 0
      %1984 = vmatprep.mubr.bf16.mxu0 0
      %1985 = vmatmul.mubr.bf16.gmra.mxu0 %v1635
      %v1986 = vpop.f32.mrf.mxu0
      %v1987 = vadd.f32 0.0, %v1986
      %v1988 = vpop.f32.mrf.mxu0
      %v1989 = vadd.f32 0.0, %v1988
      %v1990 = vpop.f32.mrf.mxu0
      %v1991 = vadd.f32 0.0, %v1990
      %v1992 = vpop.f32.mrf.mxu0
      %v1993 = vadd.f32 0.0, %v1992
      %1994 = vmatprep.mubr.bf16.mxu0 0
      %1995 = vmatmul.mubr.bf16.gmra.mxu0 %v1638
      %v1996 = vpop.f32.mrf.mxu0
      %v1997 = vadd.f32 0.0, %v1996
      %v1998 = vpop.f32.mrf.mxu0
      %v1999 = vadd.f32 0.0, %v1998
      %v2000 = vpop.f32.mrf.mxu0
      %v2001 = vadd.f32 0.0, %v2000
      %v2002 = vpop.f32.mrf.mxu0
      %v2003 = vadd.f32 0.0, %v2002
      %2004 = vdwg.mxu0
      %v2010 = vunpack.c.l.b16 %v1911
      %v2011 = vunpack.c.h.b16 %v1911
      %v2012 = vunpack.c.l.b16 %v1912
      %v2013 = vunpack.c.h.b16 %v1912
      %v2014 = vunpack.c.l.b16 %v1913
      %v2015 = vunpack.c.h.b16 %v1913
      %v2016 = vunpack.c.l.b16 %v1914
      %v2017 = vunpack.c.h.b16 %v1914
      %v2018 = vunpack.c.l.b16 %v1915
      %v2019 = vunpack.c.h.b16 %v1915
      %v2020 = vpack.c.b16 %v2012, %v2010
      %v2021 = vpack.c.b16 %v2013, %v2011
      %v2022 = vpack.c.b16 %v2016, %v2014
      %v2023 = vpack.c.b16 %v2017, %v2015
      %v2024 = vpack.c.b16 %v2018, %v2018
      %v2025 = vpack.c.b16 %v2019, %v2019
      %v2031 = vsel %vm1640, %v2024, 0
      %v2034 = vsel %vm1640, %v2025, 0
      %2036 = vmatprep.subr.bf16.mxu0 0
      %2037 = vmatpush1.bf16.msra.mxu0 0
      %2038 = vmatprep.subr.bf16.mxu0 0
      %2039 = vmatpush1.bf16.msra.mxu0 0
      %2040 = vmatprep.subr.bf16.mxu0 0
      %2041 = vmatpush1.bf16.msra.mxu0 0
      %2042 = vmatprep.subr.bf16.mxu0 0
      %2043 = vmatpush1.bf16.msra.mxu0 0
      %2044 = vmatprep.subr.bf16.mxu0 0
      %2045 = vmatpush1.bf16.msra.mxu0 0
      %2046 = vmatprep.subr.bf16.mxu0 %v2034
      %2047 = vmatpush1.bf16.msra.mxu0 %v2031
      %2048 = vmatprep.subr.bf16.mxu0 %v2023
      %2049 = vmatpush1.bf16.msra.mxu0 %v2022
      %2050 = vmatprep.subr.bf16.mxu0 %v2021
      %2051 = vmatpush1.bf16.msra.mxu0 %v2020
      %2052 = vmatprep.subr.bf16.mxu0 0
      %2053 = vmatpush2.bf16.msra.mxu0 0
      %2054 = vmatprep.subr.bf16.mxu0 0
      %2055 = vmatpush2.bf16.msra.mxu0 0
      %2056 = vmatprep.subr.bf16.mxu0 0
      %2057 = vmatpush2.bf16.msra.mxu0 0
      %2058 = vmatprep.subr.bf16.mxu0 0
      %2059 = vmatpush2.bf16.msra.mxu0 0
      %2060 = vmatprep.subr.bf16.mxu0 0
      %2061 = vmatpush2.bf16.msra.mxu0 0
      %2062 = vmatprep.subr.bf16.mxu0 0
      %2063 = vmatpush2.bf16.msra.mxu0 0
      %2064 = vmatprep.subr.bf16.mxu0 0
      %2065 = vmatpush2.bf16.msra.mxu0 0
      %2066 = vmatprep.subr.bf16.mxu0 0
      %2067 = vmatpush2.bf16.msra.mxu0 0
      %2068 = vmatprep.mubr.bf16.mxu0 0
      %2069 = vmatmul.mubr.bf16.gmra.mxu0 %v1726
      %v2070 = vpop.f32.mrf.mxu0
      %v2071 = vadd.f32 %v1987, %v2070
      %v2072 = vpop.f32.mrf.mxu0
      %v2073 = vadd.f32 %v1989, %v2072
      %v2074 = vpop.f32.mrf.mxu0
      %v2075 = vadd.f32 %v1991, %v2074
      %v2076 = vpop.f32.mrf.mxu0
      %v2077 = vadd.f32 %v1993, %v2076
      %2078 = vmatprep.mubr.bf16.mxu0 0
      %2079 = vmatmul.mubr.bf16.gmra.mxu0 %v1729
      %v2080 = vpop.f32.mrf.mxu0
      %v2081 = vadd.f32 %v1997, %v2080
      %v2082 = vpop.f32.mrf.mxu0
      %v2083 = vadd.f32 %v1999, %v2082
      %v2084 = vpop.f32.mrf.mxu0
      %v2085 = vadd.f32 %v2001, %v2084
      %v2086 = vpop.f32.mrf.mxu0
      %v2087 = vadd.f32 %v2003, %v2086
      %2088 = vdwg.mxu0
      %v2089 = vmul.f32 %v2071, %v922
      %v2090 = vmul.f32 %v2073, %v923
      %v2091 = vmul.f32 %v2075, %v924
      %v2092 = vmul.f32 %v2077, %v925
      %v2093 = vmul.f32 %v2081, %v926
      %v2094 = vmul.f32 %v2083, %v927
      %v2095 = vmul.f32 %v2085, %v928
      %v2096 = vmul.f32 %v2087, %v929
      %v2097 = vld [vmem:[%s16] sm:$0xff]
      %v2098 = vld [vmem:[%s16 + $0x8] sm:$0xff]
      %v2099 = vld [vmem:[%s16 + $0x10] sm:$0xff]
      %v2100 = vld [vmem:[%s16 + $0x18] sm:$0xff]
      %2101 = vmatprep.subr.mxu0 0.0
      %2102 = vmatpush1.msra.mxu0 %v945
      %2103 = vmatprep.subr.mxu0 0.0
      %2104 = vmatpush1.msra.mxu0 %v944
      %2105 = vmatprep.subr.mxu0 0.0
      %2106 = vmatpush1.msra.mxu0 %v943
      %2107 = vmatprep.subr.mxu0 0.0
      %2108 = vmatpush1.msra.mxu0 %v942
      %2109 = vmatprep.subr.mxu0 0.0
      %2110 = vmatpush1.msra.mxu0 %v941
      %2111 = vmatprep.subr.mxu0 0.0
      %2112 = vmatpush1.msra.mxu0 %v940
      %2113 = vmatprep.subr.mxu0 0.0
      %2114 = vmatpush1.msra.mxu0 %v939
      %2115 = vmatprep.subr.mxu0 0.0
      %2116 = vmatpush1.msra.mxu0 %v938
      %2117 = vmatprep.subr.mxu0 0.0
      %2118 = vmatpush1.msra.mxu0 %v937
      %2119 = vmatprep.subr.mxu0 0.0
      %2120 = vmatpush1.msra.mxu0 %v936
      %2121 = vmatprep.subr.mxu0 0.0
      %2122 = vmatpush1.msra.mxu0 %v935
      %2123 = vmatprep.subr.mxu0 0.0
      %2124 = vmatpush1.msra.mxu0 %v934
      %2125 = vmatprep.subr.mxu0 0.0
      %2126 = vmatpush1.msra.mxu0 %v933
      %2127 = vmatprep.subr.mxu0 0.0
      %2128 = vmatpush1.msra.mxu0 %v932
      %2129 = vmatprep.subr.mxu0 0.0
      %2130 = vmatpush1.msra.mxu0 %v931
      %2131 = vmatprep.subr.mxu0 0.0
      %2132 = vmatpush1.msra.mxu0 %v930
      %2133 = vmatprep.subr.mxu0 0.0
      %2134 = vmatpush2.msra.mxu0 %v961
      %2135 = vmatprep.subr.mxu0 0.0
      %2136 = vmatpush2.msra.mxu0 %v960
      %2137 = vmatprep.subr.mxu0 0.0
      %2138 = vmatpush2.msra.mxu0 %v959
      %2139 = vmatprep.subr.mxu0 0.0
      %2140 = vmatpush2.msra.mxu0 %v958
      %2141 = vmatprep.subr.mxu0 0.0
      %2142 = vmatpush2.msra.mxu0 %v957
      %2143 = vmatprep.subr.mxu0 0.0
      %2144 = vmatpush2.msra.mxu0 %v956
      %2145 = vmatprep.subr.mxu0 0.0
      %2146 = vmatpush2.msra.mxu0 %v955
      %2147 = vmatprep.subr.mxu0 0.0
      %2148 = vmatpush2.msra.mxu0 %v954
      %2149 = vmatprep.subr.mxu0 0.0
      %2150 = vmatpush2.msra.mxu0 %v953
      %2151 = vmatprep.subr.mxu0 0.0
      %2152 = vmatpush2.msra.mxu0 %v952
      %2153 = vmatprep.subr.mxu0 0.0
      %2154 = vmatpush2.msra.mxu0 %v951
      %2155 = vmatprep.subr.mxu0 0.0
      %2156 = vmatpush2.msra.mxu0 %v950
      %2157 = vmatprep.subr.mxu0 0.0
      %2158 = vmatpush2.msra.mxu0 %v949
      %2159 = vmatprep.subr.mxu0 0.0
      %2160 = vmatpush2.msra.mxu0 %v948
      %2161 = vmatprep.subr.mxu0 0.0
      %2162 = vmatpush2.msra.mxu0 %v947
      %2163 = vmatprep.subr.mxu0 0.0
      %2164 = vmatpush2.msra.mxu0 %v946
      %2165 = vmatprep.mubr.f32.mxu0 %v2090
      %2166 = vmatmul.mubr.f32.gmra.mxu0 %v2089
      %v2167 = vpop.f32.mrf.mxu0
      %v2168 = vadd.f32 %v2097, %v2167
      %v2169 = vpop.f32.mrf.mxu0
      %2170 = vmatprep.mubr.f32.mxu0 %v2092
      %2171 = vmatmul.mubr.f32.gmra.mxu0 %v2091
      %v2172 = vpop.f32.mrf.mxu0
      %v2173 = vadd.f32 %v2098, %v2172
      %v2174 = vpop.f32.mrf.mxu0
      %2175 = vmatprep.mubr.f32.mxu0 %v2094
      %2176 = vmatmul.mubr.f32.gmra.mxu0 %v2093
      %v2177 = vpop.f32.mrf.mxu0
      %v2178 = vadd.f32 %v2099, %v2177
      %v2179 = vpop.f32.mrf.mxu0
      %2180 = vmatprep.mubr.f32.mxu0 %v2096
      %2181 = vmatmul.mubr.f32.gmra.mxu0 %v2095
      %v2182 = vpop.f32.mrf.mxu0
      %v2183 = vadd.f32 %v2100, %v2182
      %v2184 = vpop.f32.mrf.mxu0
      %2185 = vdwg.mxu0
      %v2186 = vxor.u32 %v2168, 2147483648
      %v2187 = vxor.u32 %v2173, 2147483648
      %v2188 = vxor.u32 %v2178, 2147483648
      %v2189 = vxor.u32 %v2183, 2147483648
      %v2190 = vmul.f32 %v2186, 1.442695
      %v2191 = vpow.pop %v2190
      %v2192 = vmul.f32 %v2187, 1.442695
      %v2193 = vpow.pop %v2192
      %v2194 = vmul.f32 %v2188, 1.442695
      %v2195 = vpow.pop %v2194
      %v2196 = vmul.f32 %v2189, 1.442695
      %v2197 = vpow.pop %v2196
      %v2198 = vadd.f32 %v2191, 1.0
      %v2199 = vadd.f32 %v2193, 1.0
      %v2200 = vadd.f32 %v2195, 1.0
      %v2201 = vadd.f32 %v2197, 1.0
      %v2202 = vrcp.pop %v2198
      %v2203 = vmul.f32 1.0, %v2202
      %v2204 = vrcp.pop %v2199
      %v2205 = vmul.f32 1.0, %v2204
      %v2206 = vrcp.pop %v2200
      %v2207 = vmul.f32 1.0, %v2206
      %v2208 = vrcp.pop %v2201
      %v2209 = vmul.f32 1.0, %v2208
      %v2210 = vmul.f32 %v1904, %v962
      %v2211 = vmul.f32 %v1906, %v963
      %v2212 = vmul.f32 %v1908, %v964
      %v2213 = vmul.f32 %v1910, %v965
      %2218 = vrot.lane.b32.xlu0 %v2210, 2
      %v2219 = vpop.permute.xlu0 %2218
      %2220 = vrot.lane.b32.xlu0 %v2211, 2
      %v2221 = vpop.permute.xlu0 %2220
      %2222 = vrot.lane.b32.xlu0 %v2212, 2
      %v2223 = vpop.permute.xlu0 %2222
      %2224 = vrot.lane.b32.xlu0 %v2213, 2
      %v2225 = vpop.permute.xlu0 %2224
      %v2230 = vsel %vm982, %v914, %v2219
      %v2231 = vsel %vm982, %v915, %v2221
      %v2232 = vsel %vm982, %v916, %v2223
      %v2233 = vsel %vm982, %v917, %v2225
      %v2234 = vld [vmem:[%s17] sm:$0xff]
      %v2235 = vld [vmem:[%s17 + $0x8] sm:$0xff]
      %v2236 = vld [vmem:[%s17 + $0x10] sm:$0xff]
      %v2237 = vld [vmem:[%s17 + $0x18] sm:$0xff]
      %v2238 = vld [vmem:[%s17 + $0x20] sm:$0x3]
      %v2239 = vld [vmem:[%s18] sm:$0x1]
      %v2241 = vlaneseq
      %v2242 = vshrl.u32 %v2241, 7
      %v2243 = vsub.s32 0, %v2242
      %v2244 = vrot.slane %v2239, %v2243
      %v2247 = vsel %vm999, %v2230, 0
      %v2250 = vsel %vm999, %v2231, 0
      %v2253 = vsel %vm999, %v2232, 0
      %v2256 = vsel %vm999, %v2233, 0
      %v2259 = vsel %vm1012, %v2238, 0
      %2261 = vmatprep.subr.mxu0 0.0
      %2262 = vmatpush1.msra.mxu0 0.0
      %2263 = vmatprep.subr.mxu0 0.0
      %2264 = vmatpush1.msra.mxu0 0.0
      %2265 = vmatprep.subr.mxu0 0.0
      %2266 = vmatpush1.msra.mxu0 0.0
      %2267 = vmatprep.subr.mxu0 0.0
      %2268 = vmatpush1.msra.mxu0 0.0
      %2269 = vmatprep.subr.mxu0 0.0
      %2270 = vmatpush1.msra.mxu0 0.0
      %2271 = vmatprep.subr.mxu0 0.0
      %2272 = vmatpush1.msra.mxu0 0.0
      %2273 = vmatprep.subr.mxu0 0.0
      %2274 = vmatpush1.msra.mxu0 0.0
      %2275 = vmatprep.subr.mxu0 0.0
      %2276 = vmatpush1.msra.mxu0 0.0
      %2277 = vmatprep.subr.mxu0 0.0
      %2278 = vmatpush1.msra.mxu0 0.0
      %2279 = vmatprep.subr.mxu0 0.0
      %2280 = vmatpush1.msra.mxu0 0.0
      %2281 = vmatprep.subr.mxu0 0.0
      %2282 = vmatpush1.msra.mxu0 0.0
      %2283 = vmatprep.subr.mxu0 0.0
      %2284 = vmatpush1.msra.mxu0 %v2259
      %2285 = vmatprep.subr.mxu0 0.0
      %2286 = vmatpush1.msra.mxu0 %v2237
      %2287 = vmatprep.subr.mxu0 0.0
      %2288 = vmatpush1.msra.mxu0 %v2236
      %2289 = vmatprep.subr.mxu0 0.0
      %2290 = vmatpush1.msra.mxu0 %v2235
      %2291 = vmatprep.subr.mxu0 0.0
      %2292 = vmatpush1.msra.mxu0 %v2234
      %2293 = vmatprep.subr.mxu0 0.0
      %2294 = vmatpush2.msra.mxu0 0.0
      %2295 = vmatprep.subr.mxu0 0.0
      %2296 = vmatpush2.msra.mxu0 0.0
      %2297 = vmatprep.subr.mxu0 0.0
      %2298 = vmatpush2.msra.mxu0 0.0
      %2299 = vmatprep.subr.mxu0 0.0
      %2300 = vmatpush2.msra.mxu0 0.0
      %2301 = vmatprep.subr.mxu0 0.0
      %2302 = vmatpush2.msra.mxu0 0.0
      %2303 = vmatprep.subr.mxu0 0.0
      %2304 = vmatpush2.msra.mxu0 0.0
      %2305 = vmatprep.subr.mxu0 0.0
      %2306 = vmatpush2.msra.mxu0 0.0
      %2307 = vmatprep.subr.mxu0 0.0
      %2308 = vmatpush2.msra.mxu0 0.0
      %2309 = vmatprep.subr.mxu0 0.0
      %2310 = vmatpush2.msra.mxu0 0.0
      %2311 = vmatprep.subr.mxu0 0.0
      %2312 = vmatpush2.msra.mxu0 0.0
      %2313 = vmatprep.subr.mxu0 0.0
      %2314 = vmatpush2.msra.mxu0 0.0
      %2315 = vmatprep.subr.mxu0 0.0
      %2316 = vmatpush2.msra.mxu0 0.0
      %2317 = vmatprep.subr.mxu0 0.0
      %2318 = vmatpush2.msra.mxu0 0.0
      %2319 = vmatprep.subr.mxu0 0.0
      %2320 = vmatpush2.msra.mxu0 0.0
      %2321 = vmatprep.subr.mxu0 0.0
      %2322 = vmatpush2.msra.mxu0 0.0
      %2323 = vmatprep.subr.mxu0 0.0
      %2324 = vmatpush2.msra.mxu0 0.0
      %2325 = vmatprep.mubr.f32.mxu0 0.0
      %2326 = vmatmul.mubr.f32.gmra.mxu0 %v2247
      %v2327 = vpop.f32.mrf.mxu0
      %v2328 = vadd.f32 %v2244, %v2327
      %v2329 = vpop.f32.mrf.mxu0
      %2330 = vmatprep.mubr.f32.mxu0 0.0
      %2331 = vmatmul.mubr.f32.gmra.mxu0 %v2250
      %v2332 = vpop.f32.mrf.mxu0
      %v2333 = vadd.f32 %v2244, %v2332
      %v2334 = vpop.f32.mrf.mxu0
      %2335 = vmatprep.mubr.f32.mxu0 0.0
      %2336 = vmatmul.mubr.f32.gmra.mxu0 %v2253
      %v2337 = vpop.f32.mrf.mxu0
      %v2338 = vadd.f32 %v2244, %v2337
      %v2339 = vpop.f32.mrf.mxu0
      %2340 = vmatprep.mubr.f32.mxu0 0.0
      %2341 = vmatmul.mubr.f32.gmra.mxu0 %v2256
      %v2342 = vpop.f32.mrf.mxu0
      %v2343 = vadd.f32 %v2244, %v2342
      %v2344 = vpop.f32.mrf.mxu0
      %2345 = vdwg.mxu0
      %v2346 = vxor.u32 %v2328, 2147483648
      %v2347 = vxor.u32 %v2333, 2147483648
      %v2348 = vxor.u32 %v2338, 2147483648
      %v2349 = vxor.u32 %v2343, 2147483648
      %v2350 = vmul.f32 %v2346, 1.442695
      %v2351 = vpow.pop %v2350
      %v2352 = vmul.f32 %v2347, 1.442695
      %v2353 = vpow.pop %v2352
      %v2354 = vmul.f32 %v2348, 1.442695
      %v2355 = vpow.pop %v2354
      %v2356 = vmul.f32 %v2349, 1.442695
      %v2357 = vpow.pop %v2356
      %v2358 = vadd.f32 %v2351, 1.0
      %v2359 = vadd.f32 %v2353, 1.0
      %v2360 = vadd.f32 %v2355, 1.0
      %v2361 = vadd.f32 %v2357, 1.0
      %v2362 = vrcp.pop %v2358
      %v2363 = vmul.f32 1.0, %v2362
      %v2364 = vrcp.pop %v2359
      %v2365 = vmul.f32 1.0, %v2364
      %v2366 = vrcp.pop %v2360
      %v2367 = vmul.f32 1.0, %v2366
      %v2368 = vrcp.pop %v2361
      %v2369 = vmul.f32 1.0, %v2368
      %v2370 = vld [vmem:[%s19] sm:$0xff]
      %v2371 = vld [vmem:[%s19 + $0x8] sm:$0xff]
      %v2372 = vld [vmem:[%s20] sm:$0x1]
      %v2374 = vlaneseq
      %v2375 = vshrl.u32 %v2374, 7
      %v2376 = vsub.s32 0, %v2375
      %v2377 = vrot.slane %v2372, %v2376
      %v2380 = vsel %vm1134, %v2363, 0
      %v2383 = vsel %vm1134, %v2365, 0
      %v2386 = vsel %vm1134, %v2367, 0
      %v2389 = vsel %vm1134, %v2369, 0
      %2391 = vmatprep.subr.mxu0 0.0
      %2392 = vmatpush1.msra.mxu0 0.0
      %2393 = vmatprep.subr.mxu0 0.0
      %2394 = vmatpush1.msra.mxu0 0.0
      %2395 = vmatprep.subr.mxu0 0.0
      %2396 = vmatpush1.msra.mxu0 0.0
      %2397 = vmatprep.subr.mxu0 0.0
      %2398 = vmatpush1.msra.mxu0 0.0
      %2399 = vmatprep.subr.mxu0 0.0
      %2400 = vmatpush1.msra.mxu0 0.0
      %2401 = vmatprep.subr.mxu0 0.0
      %2402 = vmatpush1.msra.mxu0 0.0
      %2403 = vmatprep.subr.mxu0 0.0
      %2404 = vmatpush1.msra.mxu0 0.0
      %2405 = vmatprep.subr.mxu0 0.0
      %2406 = vmatpush1.msra.mxu0 0.0
      %2407 = vmatprep.subr.mxu0 0.0
      %2408 = vmatpush1.msra.mxu0 0.0
      %2409 = vmatprep.subr.mxu0 0.0
      %2410 = vmatpush1.msra.mxu0 0.0
      %2411 = vmatprep.subr.mxu0 0.0
      %2412 = vmatpush1.msra.mxu0 0.0
      %2413 = vmatprep.subr.mxu0 0.0
      %2414 = vmatpush1.msra.mxu0 0.0
      %2415 = vmatprep.subr.mxu0 0.0
      %2416 = vmatpush1.msra.mxu0 0.0
      %2417 = vmatprep.subr.mxu0 0.0
      %2418 = vmatpush1.msra.mxu0 0.0
      %2419 = vmatprep.subr.mxu0 0.0
      %2420 = vmatpush1.msra.mxu0 %v2371
      %2421 = vmatprep.subr.mxu0 0.0
      %2422 = vmatpush1.msra.mxu0 %v2370
      %2423 = vmatprep.subr.mxu0 0.0
      %2424 = vmatpush2.msra.mxu0 0.0
      %2425 = vmatprep.subr.mxu0 0.0
      %2426 = vmatpush2.msra.mxu0 0.0
      %2427 = vmatprep.subr.mxu0 0.0
      %2428 = vmatpush2.msra.mxu0 0.0
      %2429 = vmatprep.subr.mxu0 0.0
      %2430 = vmatpush2.msra.mxu0 0.0
      %2431 = vmatprep.subr.mxu0 0.0
      %2432 = vmatpush2.msra.mxu0 0.0
      %2433 = vmatprep.subr.mxu0 0.0
      %2434 = vmatpush2.msra.mxu0 0.0
      %2435 = vmatprep.subr.mxu0 0.0
      %2436 = vmatpush2.msra.mxu0 0.0
      %2437 = vmatprep.subr.mxu0 0.0
      %2438 = vmatpush2.msra.mxu0 0.0
      %2439 = vmatprep.subr.mxu0 0.0
      %2440 = vmatpush2.msra.mxu0 0.0
      %2441 = vmatprep.subr.mxu0 0.0
      %2442 = vmatpush2.msra.mxu0 0.0
      %2443 = vmatprep.subr.mxu0 0.0
      %2444 = vmatpush2.msra.mxu0 0.0
      %2445 = vmatprep.subr.mxu0 0.0
      %2446 = vmatpush2.msra.mxu0 0.0
      %2447 = vmatprep.subr.mxu0 0.0
      %2448 = vmatpush2.msra.mxu0 0.0
      %2449 = vmatprep.subr.mxu0 0.0
      %2450 = vmatpush2.msra.mxu0 0.0
      %2451 = vmatprep.subr.mxu0 0.0
      %2452 = vmatpush2.msra.mxu0 0.0
      %2453 = vmatprep.subr.mxu0 0.0
      %2454 = vmatpush2.msra.mxu0 0.0
      %2455 = vmatprep.mubr.f32.mxu0 0.0
      %2456 = vmatmul.mubr.f32.gmra.mxu0 %v2380
      %v2457 = vpop.f32.mrf.mxu0
      %v2458 = vadd.f32 %v2377, %v2457
      %v2459 = vpop.f32.mrf.mxu0
      %2460 = vmatprep.mubr.f32.mxu0 0.0
      %2461 = vmatmul.mubr.f32.gmra.mxu0 %v2383
      %v2462 = vpop.f32.mrf.mxu0
      %v2463 = vadd.f32 %v2377, %v2462
      %v2464 = vpop.f32.mrf.mxu0
      %2465 = vmatprep.mubr.f32.mxu0 0.0
      %2466 = vmatmul.mubr.f32.gmra.mxu0 %v2386
      %v2467 = vpop.f32.mrf.mxu0
      %v2468 = vadd.f32 %v2377, %v2467
      %v2469 = vpop.f32.mrf.mxu0
      %2470 = vmatprep.mubr.f32.mxu0 0.0
      %2471 = vmatmul.mubr.f32.gmra.mxu0 %v2389
      %v2472 = vpop.f32.mrf.mxu0
      %v2473 = vadd.f32 %v2377, %v2472
      %v2474 = vpop.f32.mrf.mxu0
      %2475 = vdwg.mxu0
      %v2476 = vxor.u32 %v2458, 2147483648
      %v2477 = vxor.u32 %v2463, 2147483648
      %v2478 = vxor.u32 %v2468, 2147483648
      %v2479 = vxor.u32 %v2473, 2147483648
      %v2480 = vmul.f32 %v2476, 1.442695
      %v2481 = vpow.pop %v2480
      %v2482 = vmul.f32 %v2477, 1.442695
      %v2483 = vpow.pop %v2482
      %v2484 = vmul.f32 %v2478, 1.442695
      %v2485 = vpow.pop %v2484
      %v2486 = vmul.f32 %v2479, 1.442695
      %v2487 = vpow.pop %v2486
      %v2488 = vadd.f32 %v2481, 1.0
      %v2489 = vadd.f32 %v2483, 1.0
      %v2490 = vadd.f32 %v2485, 1.0
      %v2491 = vadd.f32 %v2487, 1.0
      %v2492 = vrcp.pop %v2488
      %v2493 = vmul.f32 1.0, %v2492
      %v2494 = vrcp.pop %v2489
      %v2495 = vmul.f32 1.0, %v2494
      %v2496 = vrcp.pop %v2490
      %v2497 = vmul.f32 1.0, %v2496
      %v2498 = vrcp.pop %v2491
      %v2499 = vmul.f32 1.0, %v2498
      %v2500 = vld [vmem:[%s21] sm:$0x3]
      %v2501 = vld [vmem:[%s22] sm:$0x1]
      %v2503 = vlaneseq
      %v2504 = vshrl.u32 %v2503, 7
      %v2505 = vsub.s32 0, %v2504
      %v2506 = vrot.slane %v2501, %v2505
      %v2509 = vsel %vm982, %v2493, 0
      %v2512 = vsel %vm982, %v2495, 0
      %v2515 = vsel %vm982, %v2497, 0
      %v2518 = vsel %vm982, %v2499, 0
      %v2521 = vsel %vm1012, %v2500, 0
      %2523 = vmatprep.subr.mxu0 0.0
      %2524 = vmatpush1.msra.mxu0 0.0
      %2525 = vmatprep.subr.mxu0 0.0
      %2526 = vmatpush1.msra.mxu0 0.0
      %2527 = vmatprep.subr.mxu0 0.0
      %2528 = vmatpush1.msra.mxu0 0.0
      %2529 = vmatprep.subr.mxu0 0.0
      %2530 = vmatpush1.msra.mxu0 0.0
      %2531 = vmatprep.subr.mxu0 0.0
      %2532 = vmatpush1.msra.mxu0 0.0
      %2533 = vmatprep.subr.mxu0 0.0
      %2534 = vmatpush1.msra.mxu0 0.0
      %2535 = vmatprep.subr.mxu0 0.0
      %2536 = vmatpush1.msra.mxu0 0.0
      %2537 = vmatprep.subr.mxu0 0.0
      %2538 = vmatpush1.msra.mxu0 0.0
      %2539 = vmatprep.subr.mxu0 0.0
      %2540 = vmatpush1.msra.mxu0 0.0
      %2541 = vmatprep.subr.mxu0 0.0
      %2542 = vmatpush1.msra.mxu0 0.0
      %2543 = vmatprep.subr.mxu0 0.0
      %2544 = vmatpush1.msra.mxu0 0.0
      %2545 = vmatprep.subr.mxu0 0.0
      %2546 = vmatpush1.msra.mxu0 0.0
      %2547 = vmatprep.subr.mxu0 0.0
      %2548 = vmatpush1.msra.mxu0 0.0
      %2549 = vmatprep.subr.mxu0 0.0
      %2550 = vmatpush1.msra.mxu0 0.0
      %2551 = vmatprep.subr.mxu0 0.0
      %2552 = vmatpush1.msra.mxu0 0.0
      %2553 = vmatprep.subr.mxu0 0.0
      %2554 = vmatpush1.msra.mxu0 %v2521
      %2555 = vmatprep.subr.mxu0 0.0
      %2556 = vmatpush2.msra.mxu0 0.0
      %2557 = vmatprep.subr.mxu0 0.0
      %2558 = vmatpush2.msra.mxu0 0.0
      %2559 = vmatprep.subr.mxu0 0.0
      %2560 = vmatpush2.msra.mxu0 0.0
      %2561 = vmatprep.subr.mxu0 0.0
      %2562 = vmatpush2.msra.mxu0 0.0
      %2563 = vmatprep.subr.mxu0 0.0
      %2564 = vmatpush2.msra.mxu0 0.0
      %2565 = vmatprep.subr.mxu0 0.0
      %2566 = vmatpush2.msra.mxu0 0.0
      %2567 = vmatprep.subr.mxu0 0.0
      %2568 = vmatpush2.msra.mxu0 0.0
      %2569 = vmatprep.subr.mxu0 0.0
      %2570 = vmatpush2.msra.mxu0 0.0
      %2571 = vmatprep.subr.mxu0 0.0
      %2572 = vmatpush2.msra.mxu0 0.0
      %2573 = vmatprep.subr.mxu0 0.0
      %2574 = vmatpush2.msra.mxu0 0.0
      %2575 = vmatprep.subr.mxu0 0.0
      %2576 = vmatpush2.msra.mxu0 0.0
      %2577 = vmatprep.subr.mxu0 0.0
      %2578 = vmatpush2.msra.mxu0 0.0
      %2579 = vmatprep.subr.mxu0 0.0
      %2580 = vmatpush2.msra.mxu0 0.0
      %2581 = vmatprep.subr.mxu0 0.0
      %2582 = vmatpush2.msra.mxu0 0.0
      %2583 = vmatprep.subr.mxu0 0.0
      %2584 = vmatpush2.msra.mxu0 0.0
      %2585 = vmatprep.subr.mxu0 0.0
      %2586 = vmatpush2.msra.mxu0 0.0
      %2587 = vmatprep.mubr.f32.mxu0 0.0
      %2588 = vmatmul.mubr.f32.gmra.mxu0 %v2509
      %v2589 = vpop.f32.mrf.mxu0
      %v2590 = vadd.f32 %v2506, %v2589
      %v2591 = vpop.f32.mrf.mxu0
      %2592 = vmatprep.mubr.f32.mxu0 0.0
      %2593 = vmatmul.mubr.f32.gmra.mxu0 %v2512
      %v2594 = vpop.f32.mrf.mxu0
      %v2595 = vadd.f32 %v2506, %v2594
      %v2596 = vpop.f32.mrf.mxu0
      %2597 = vmatprep.mubr.f32.mxu0 0.0
      %2598 = vmatmul.mubr.f32.gmra.mxu0 %v2515
      %v2599 = vpop.f32.mrf.mxu0
      %v2600 = vadd.f32 %v2506, %v2599
      %v2601 = vpop.f32.mrf.mxu0
      %2602 = vmatprep.mubr.f32.mxu0 0.0
      %2603 = vmatmul.mubr.f32.gmra.mxu0 %v2518
      %v2604 = vpop.f32.mrf.mxu0
      %v2605 = vadd.f32 %v2506, %v2604
      %v2606 = vpop.f32.mrf.mxu0
      %2607 = vdwg.mxu0
      %v2608 = vmul.f32 %v918, %v2590
      %v2609 = vmul.f32 %v919, %v2595
      %v2610 = vmul.f32 %v920, %v2600
      %v2611 = vmul.f32 %v921, %v2605
      %v2612 = vtanh.pop %v2608
      %v2613 = vtanh.pop %v2609
      %v2614 = vtanh.pop %v2610
      %v2615 = vtanh.pop %v2611
      %v2616 = vpack.c.bf16 %v2613, %v2612
      %v2617 = vpack.c.bf16 %v2615, %v2614
      %v2619 = vsel %vm1374, %v2616, 0
      %2621 = vmatprep.subr.bf16.mxu0 0
      %2622 = vmatpush1.bf16.xpose.msra.mxu0 0
      %2623 = vmatprep.subr.bf16.mxu0 0
      %2624 = vmatpush1.bf16.xpose.msra.mxu0 0
      %2625 = vmatprep.subr.bf16.mxu0 0
      %2626 = vmatpush1.bf16.xpose.msra.mxu0 0
      %2627 = vmatprep.subr.bf16.mxu0 0
      %2628 = vmatpush1.bf16.xpose.msra.mxu0 0
      %2629 = vmatprep.subr.bf16.mxu0 0
      %2630 = vmatpush1.bf16.xpose.msra.mxu0 0
      %2631 = vmatprep.subr.bf16.mxu0 0
      %2632 = vmatpush1.bf16.xpose.msra.mxu0 0
      %2633 = vmatprep.subr.bf16.mxu0 0
      %2634 = vmatpush1.bf16.xpose.msra.mxu0 0
      %2635 = vmatprep.subr.bf16.mxu0 0
      %2636 = vmatpush1.bf16.xpose.msra.mxu0 %v2619
      %2637 = vmatprep.subr.bf16.mxu0 0
      %2638 = vmatpush2.bf16.xpose.msra.mxu0 0
      %2639 = vmatprep.subr.bf16.mxu0 0
      %2640 = vmatpush2.bf16.xpose.msra.mxu0 0
      %2641 = vmatprep.subr.bf16.mxu0 0
      %2642 = vmatpush2.bf16.xpose.msra.mxu0 0
      %2643 = vmatprep.subr.bf16.mxu0 0
      %2644 = vmatpush2.bf16.xpose.msra.mxu0 0
      %2645 = vmatprep.subr.bf16.mxu0 0
      %2646 = vmatpush2.bf16.xpose.msra.mxu0 0
      %2647 = vmatprep.subr.bf16.mxu0 0
      %2648 = vmatpush2.bf16.xpose.msra.mxu0 0
      %2649 = vmatprep.subr.bf16.mxu0 0
      %2650 = vmatpush2.bf16.xpose.msra.mxu0 0
      %2651 = vmatprep.subr.bf16.mxu0 0
      %2652 = vmatpush2.bf16.xpose.msra.mxu0 0
      %2653 = vmatprep.mubr.bf16.mxu0 0
      %2654 = vmatmul.mubr.bf16.gmra.mxu0 %v2619
      %v2655 = vpop.f32.mrf.mxu0
      %v2656 = vadd.f32 0.0, %v2655
      %v2657 = vpop.f32.mrf.mxu0
      %v2658 = vpop.f32.mrf.mxu0
      %v2659 = vadd.f32 0.0, %v2658
      %v2660 = vpop.f32.mrf.mxu0
      %2661 = vdwg.mxu0
      %v2663 = vsel %vm1374, %v2617, 0
      %2665 = vmatprep.subr.bf16.mxu0 0
      %2666 = vmatpush1.bf16.xpose.msra.mxu0 0
      %2667 = vmatprep.subr.bf16.mxu0 0
      %2668 = vmatpush1.bf16.xpose.msra.mxu0 0
      %2669 = vmatprep.subr.bf16.mxu0 0
      %2670 = vmatpush1.bf16.xpose.msra.mxu0 0
      %2671 = vmatprep.subr.bf16.mxu0 0
      %2672 = vmatpush1.bf16.xpose.msra.mxu0 0
      %2673 = vmatprep.subr.bf16.mxu0 0
      %2674 = vmatpush1.bf16.xpose.msra.mxu0 0
      %2675 = vmatprep.subr.bf16.mxu0 0
      %2676 = vmatpush1.bf16.xpose.msra.mxu0 0
      %2677 = vmatprep.subr.bf16.mxu0 0
      %2678 = vmatpush1.bf16.xpose.msra.mxu0 0
      %2679 = vmatprep.subr.bf16.mxu0 0
      %2680 = vmatpush1.bf16.xpose.msra.mxu0 %v2663
      %2681 = vmatprep.subr.bf16.mxu0 0
      %2682 = vmatpush2.bf16.xpose.msra.mxu0 0
      %2683 = vmatprep.subr.bf16.mxu0 0
      %2684 = vmatpush2.bf16.xpose.msra.mxu0 0
      %2685 = vmatprep.subr.bf16.mxu0 0
      %2686 = vmatpush2.bf16.xpose.msra.mxu0 0
      %2687 = vmatprep.subr.bf16.mxu0 0
      %2688 = vmatpush2.bf16.xpose.msra.mxu0 0
      %2689 = vmatprep.subr.bf16.mxu0 0
      %2690 = vmatpush2.bf16.xpose.msra.mxu0 0
      %2691 = vmatprep.subr.bf16.mxu0 0
      %2692 = vmatpush2.bf16.xpose.msra.mxu0 0
      %2693 = vmatprep.subr.bf16.mxu0 0
      %2694 = vmatpush2.bf16.xpose.msra.mxu0 0
      %2695 = vmatprep.subr.bf16.mxu0 0
      %2696 = vmatpush2.bf16.xpose.msra.mxu0 0
      %2697 = vmatprep.mubr.bf16.mxu0 0
      %2698 = vmatmul.mubr.bf16.gmra.mxu0 %v2663
      %v2699 = vpop.f32.mrf.mxu0
      %v2700 = vadd.f32 0.0, %v2699
      %v2701 = vpop.f32.mrf.mxu0
      %v2702 = vpop.f32.mrf.mxu0
      %v2703 = vadd.f32 0.0, %v2702
      %v2704 = vpop.f32.mrf.mxu0
      %2705 = vdwg.mxu0
      %v2706 = vmax.f32 %v2656, 0.0
      %v2707 = vmax.f32 %v2659, 0.0
      %v2708 = vmax.f32 %v2700, 0.0
      %v2709 = vmax.f32 %v2703, 0.0
      %v2710 = vsel %vm1134, %v2706, 0.0
      %2711 = vadd.xlane.f32.xlu0 %v2710
      %v2712 = vpop.xlane.xlu0 %2711
      %v2713 = vsel %vm1134, %v2707, 0.0
      %2714 = vadd.xlane.f32.xlu0 %v2713
      %v2715 = vpop.xlane.xlu0 %2714
      %v2716 = vsel %vm1134, %v2708, 0.0
      %2717 = vadd.xlane.f32.xlu0 %v2716
      %v2718 = vpop.xlane.xlu0 %2717
      %v2719 = vsel %vm1134, %v2709, 0.0
      %2720 = vadd.xlane.f32.xlu0 %v2719
      %v2721 = vpop.xlane.xlu0 %2720
      %v2722 = vadd.f32 %v2712, 1.0
      %v2723 = vadd.f32 %v2715, 1.0
      %v2724 = vadd.f32 %v2718, 1.0
      %v2725 = vadd.f32 %v2721, 1.0
      %v2726 = vrsqrt.pop %v2722
      %v2727 = vrsqrt.pop %v2723
      %v2728 = vrsqrt.pop %v2724
      %v2729 = vrsqrt.pop %v2725
      %v2730 = vmul.f32 %v2726, %v2230
      %v2731 = vmul.f32 %v2727, %v2231
      %v2732 = vmul.f32 %v2728, %v2232
      %v2733 = vmul.f32 %v2729, %v2233
      %v2734 = vpack.c.bf16 %v2707, %v2706
      %v2735 = vpack.c.bf16 %v2709, %v2708
      %v2736 = vpack.c.bf16 %v2731, %v2730
      %v2737 = vpack.c.bf16 %v2733, %v2732
      %v2739 = vsel %vm1134, %v2734, 0
      %2741 = vmatprep.subr.bf16.mxu0 0
      %2742 = vmatpush1.bf16.msra.mxu0 0
      %2743 = vmatprep.subr.bf16.mxu0 0
      %2744 = vmatpush1.bf16.msra.mxu0 0
      %2745 = vmatprep.subr.bf16.mxu0 0
      %2746 = vmatpush1.bf16.msra.mxu0 0
      %2747 = vmatprep.subr.bf16.mxu0 0
      %2748 = vmatpush1.bf16.msra.mxu0 0
      %2749 = vmatprep.subr.bf16.mxu0 0
      %2750 = vmatpush1.bf16.msra.mxu0 0
      %2751 = vmatprep.subr.bf16.mxu0 0
      %2752 = vmatpush1.bf16.msra.mxu0 0
      %2753 = vmatprep.subr.bf16.mxu0 0
      %2754 = vmatpush1.bf16.msra.mxu0 0
      %2755 = vmatprep.subr.bf16.mxu0 0
      %2756 = vmatpush1.bf16.msra.mxu0 %v2736
      %2757 = vmatprep.subr.bf16.mxu0 0
      %2758 = vmatpush2.bf16.msra.mxu0 0
      %2759 = vmatprep.subr.bf16.mxu0 0
      %2760 = vmatpush2.bf16.msra.mxu0 0
      %2761 = vmatprep.subr.bf16.mxu0 0
      %2762 = vmatpush2.bf16.msra.mxu0 0
      %2763 = vmatprep.subr.bf16.mxu0 0
      %2764 = vmatpush2.bf16.msra.mxu0 0
      %2765 = vmatprep.subr.bf16.mxu0 0
      %2766 = vmatpush2.bf16.msra.mxu0 0
      %2767 = vmatprep.subr.bf16.mxu0 0
      %2768 = vmatpush2.bf16.msra.mxu0 0
      %2769 = vmatprep.subr.bf16.mxu0 0
      %2770 = vmatpush2.bf16.msra.mxu0 0
      %2771 = vmatprep.subr.bf16.mxu0 0
      %2772 = vmatpush2.bf16.msra.mxu0 0
      %2773 = vmatprep.mubr.bf16.mxu0 0
      %2774 = vmatmul.mubr.bf16.gmra.mxu0 %v2739
      %v2775 = vpop.f32.mrf.mxu0
      %v2776 = vadd.f32 0.0, %v2775
      %v2777 = vpop.f32.mrf.mxu0
      %v2778 = vpop.f32.mrf.mxu0
      %v2779 = vadd.f32 0.0, %v2778
      %v2780 = vpop.f32.mrf.mxu0
      %2781 = vdwg.mxu0
      %v2783 = vsel %vm1134, %v2735, 0
      %2785 = vmatprep.subr.bf16.mxu0 0
      %2786 = vmatpush1.bf16.msra.mxu0 0
      %2787 = vmatprep.subr.bf16.mxu0 0
      %2788 = vmatpush1.bf16.msra.mxu0 0
      %2789 = vmatprep.subr.bf16.mxu0 0
      %2790 = vmatpush1.bf16.msra.mxu0 0
      %2791 = vmatprep.subr.bf16.mxu0 0
      %2792 = vmatpush1.bf16.msra.mxu0 0
      %2793 = vmatprep.subr.bf16.mxu0 0
      %2794 = vmatpush1.bf16.msra.mxu0 0
      %2795 = vmatprep.subr.bf16.mxu0 0
      %2796 = vmatpush1.bf16.msra.mxu0 0
      %2797 = vmatprep.subr.bf16.mxu0 0
      %2798 = vmatpush1.bf16.msra.mxu0 0
      %2799 = vmatprep.subr.bf16.mxu0 0
      %2800 = vmatpush1.bf16.msra.mxu0 %v2737
      %2801 = vmatprep.subr.bf16.mxu0 0
      %2802 = vmatpush2.bf16.msra.mxu0 0
      %2803 = vmatprep.subr.bf16.mxu0 0
      %2804 = vmatpush2.bf16.msra.mxu0 0
      %2805 = vmatprep.subr.bf16.mxu0 0
      %2806 = vmatpush2.bf16.msra.mxu0 0
      %2807 = vmatprep.subr.bf16.mxu0 0
      %2808 = vmatpush2.bf16.msra.mxu0 0
      %2809 = vmatprep.subr.bf16.mxu0 0
      %2810 = vmatpush2.bf16.msra.mxu0 0
      %2811 = vmatprep.subr.bf16.mxu0 0
      %2812 = vmatpush2.bf16.msra.mxu0 0
      %2813 = vmatprep.subr.bf16.mxu0 0
      %2814 = vmatpush2.bf16.msra.mxu0 0
      %2815 = vmatprep.subr.bf16.mxu0 0
      %2816 = vmatpush2.bf16.msra.mxu0 0
      %2817 = vmatprep.mubr.bf16.mxu0 0
      %2818 = vmatmul.mubr.bf16.gmra.mxu0 %v2783
      %v2819 = vpop.f32.mrf.mxu0
      %v2820 = vadd.f32 0.0, %v2819
      %v2821 = vpop.f32.mrf.mxu0
      %v2822 = vpop.f32.mrf.mxu0
      %v2823 = vadd.f32 0.0, %v2822
      %v2824 = vpop.f32.mrf.mxu0
      %2825 = vdwg.mxu0
      %v2826 = vmul.f32 %v2726, %v2776
      %v2827 = vmul.f32 %v2727, %v2779
      %v2828 = vmul.f32 %v2728, %v2820
      %v2829 = vmul.f32 %v2729, %v2823
      %v2830 = vmul.f32 %v2726, %v2730
      %v2831 = vmul.f32 %v2727, %v2731
      %v2832 = vmul.f32 %v2728, %v2732
      %v2833 = vmul.f32 %v2729, %v2733
      %v2834 = vadd.f32 %v2826, %v2830
      %v2835 = vadd.f32 %v2827, %v2831
      %v2836 = vadd.f32 %v2828, %v2832
      %v2837 = vadd.f32 %v2829, %v2833
      %v2838 = vpack.c.bf16 %v2231, %v2230
      %v2839 = vpack.c.bf16 %v2233, %v2232
      %v2840 = vpack.c.bf16 %v2835, %v2834
      %v2841 = vpack.c.bf16 %v2837, %v2836
      %v2842 = vld [vmem:[%s23] sm:$0xff]
      %v2843 = vld [vmem:[%s23 + $0x8] sm:$0xff]
      %v2844 = vld [vmem:[%s23 + $0x10] sm:$0xff]
      %v2845 = vld [vmem:[%s23 + $0x18] sm:$0xff]
      %v2846 = vld [vmem:[%s23 + $0x20] sm:$0x11]
      %v2847 = vld [vmem:[%s24] sm:$0xff]
      %v2848 = vld [vmem:[%s24 + $0x8] sm:$0xff]
      %v2849 = vld [vmem:[%s24 + $0x10] sm:$0xff]
      %v2850 = vld [vmem:[%s24 + $0x18] sm:$0xff]
      %v2851 = vld [vmem:[%s24 + $0x20] sm:$0x11]
      %v2857 = vunpack.c.l.b16 %v2847
      %v2858 = vunpack.c.h.b16 %v2847
      %v2859 = vunpack.c.l.b16 %v2848
      %v2860 = vunpack.c.h.b16 %v2848
      %v2861 = vunpack.c.l.b16 %v2849
      %v2862 = vunpack.c.h.b16 %v2849
      %v2863 = vunpack.c.l.b16 %v2850
      %v2864 = vunpack.c.h.b16 %v2850
      %v2865 = vunpack.c.l.b16 %v2851
      %v2866 = vunpack.c.h.b16 %v2851
      %v2867 = vpack.c.b16 %v2859, %v2857
      %v2868 = vpack.c.b16 %v2860, %v2858
      %v2869 = vpack.c.b16 %v2863, %v2861
      %v2870 = vpack.c.b16 %v2864, %v2862
      %v2871 = vpack.c.b16 %v2865, %v2865
      %v2872 = vpack.c.b16 %v2866, %v2866
      %v2878 = vsel %vm999, %v2840, 0
      %v2881 = vsel %vm999, %v2841, 0
      %v2884 = vsel %vm1640, %v2871, 0
      %v2887 = vsel %vm1640, %v2872, 0
      %2889 = vmatprep.subr.bf16.mxu0 0
      %2890 = vmatpush1.bf16.msra.mxu0 0
      %2891 = vmatprep.subr.bf16.mxu0 0
      %2892 = vmatpush1.bf16.msra.mxu0 0
      %2893 = vmatprep.subr.bf16.mxu0 0
      %2894 = vmatpush1.bf16.msra.mxu0 0
      %2895 = vmatprep.subr.bf16.mxu0 0
      %2896 = vmatpush1.bf16.msra.mxu0 0
      %2897 = vmatprep.subr.bf16.mxu0 0
      %2898 = vmatpush1.bf16.msra.mxu0 0
      %2899 = vmatprep.subr.bf16.mxu0 %v2887
      %2900 = vmatpush1.bf16.msra.mxu0 %v2884
      %2901 = vmatprep.subr.bf16.mxu0 %v2870
      %2902 = vmatpush1.bf16.msra.mxu0 %v2869
      %2903 = vmatprep.subr.bf16.mxu0 %v2868
      %2904 = vmatpush1.bf16.msra.mxu0 %v2867
      %2905 = vmatprep.subr.bf16.mxu0 0
      %2906 = vmatpush2.bf16.msra.mxu0 0
      %2907 = vmatprep.subr.bf16.mxu0 0
      %2908 = vmatpush2.bf16.msra.mxu0 0
      %2909 = vmatprep.subr.bf16.mxu0 0
      %2910 = vmatpush2.bf16.msra.mxu0 0
      %2911 = vmatprep.subr.bf16.mxu0 0
      %2912 = vmatpush2.bf16.msra.mxu0 0
      %2913 = vmatprep.subr.bf16.mxu0 0
      %2914 = vmatpush2.bf16.msra.mxu0 0
      %2915 = vmatprep.subr.bf16.mxu0 0
      %2916 = vmatpush2.bf16.msra.mxu0 0
      %2917 = vmatprep.subr.bf16.mxu0 0
      %2918 = vmatpush2.bf16.msra.mxu0 0
      %2919 = vmatprep.subr.bf16.mxu0 0
      %2920 = vmatpush2.bf16.msra.mxu0 0
      %2921 = vmatprep.mubr.bf16.mxu0 0
      %2922 = vmatmul.mubr.bf16.gmra.mxu0 %v2878
      %v2923 = vpop.f32.mrf.mxu0
      %v2924 = vadd.f32 0.0, %v2923
      %v2925 = vpop.f32.mrf.mxu0
      %v2926 = vadd.f32 0.0, %v2925
      %v2927 = vpop.f32.mrf.mxu0
      %v2928 = vadd.f32 0.0, %v2927
      %v2929 = vpop.f32.mrf.mxu0
      %v2930 = vadd.f32 0.0, %v2929
      %2931 = vmatprep.mubr.bf16.mxu0 0
      %2932 = vmatmul.mubr.bf16.gmra.mxu0 %v2881
      %v2933 = vpop.f32.mrf.mxu0
      %v2934 = vadd.f32 0.0, %v2933
      %v2935 = vpop.f32.mrf.mxu0
      %v2936 = vadd.f32 0.0, %v2935
      %v2937 = vpop.f32.mrf.mxu0
      %v2938 = vadd.f32 0.0, %v2937
      %v2939 = vpop.f32.mrf.mxu0
      %v2940 = vadd.f32 0.0, %v2939
      %2941 = vdwg.mxu0
      %v2947 = vunpack.c.l.b16 %v2842
      %v2948 = vunpack.c.h.b16 %v2842
      %v2949 = vunpack.c.l.b16 %v2843
      %v2950 = vunpack.c.h.b16 %v2843
      %v2951 = vunpack.c.l.b16 %v2844
      %v2952 = vunpack.c.h.b16 %v2844
      %v2953 = vunpack.c.l.b16 %v2845
      %v2954 = vunpack.c.h.b16 %v2845
      %v2955 = vunpack.c.l.b16 %v2846
      %v2956 = vunpack.c.h.b16 %v2846
      %v2957 = vpack.c.b16 %v2949, %v2947
      %v2958 = vpack.c.b16 %v2950, %v2948
      %v2959 = vpack.c.b16 %v2953, %v2951
      %v2960 = vpack.c.b16 %v2954, %v2952
      %v2961 = vpack.c.b16 %v2955, %v2955
      %v2962 = vpack.c.b16 %v2956, %v2956
      %v2968 = vsel %vm999, %v2838, 0
      %v2971 = vsel %vm999, %v2839, 0
      %v2974 = vsel %vm1640, %v2961, 0
      %v2977 = vsel %vm1640, %v2962, 0
      %2979 = vmatprep.subr.bf16.mxu0 0
      %2980 = vmatpush1.bf16.msra.mxu0 0
      %2981 = vmatprep.subr.bf16.mxu0 0
      %2982 = vmatpush1.bf16.msra.mxu0 0
      %2983 = vmatprep.subr.bf16.mxu0 0
      %2984 = vmatpush1.bf16.msra.mxu0 0
      %2985 = vmatprep.subr.bf16.mxu0 0
      %2986 = vmatpush1.bf16.msra.mxu0 0
      %2987 = vmatprep.subr.bf16.mxu0 0
      %2988 = vmatpush1.bf16.msra.mxu0 0
      %2989 = vmatprep.subr.bf16.mxu0 %v2977
      %2990 = vmatpush1.bf16.msra.mxu0 %v2974
      %2991 = vmatprep.subr.bf16.mxu0 %v2960
      %2992 = vmatpush1.bf16.msra.mxu0 %v2959
      %2993 = vmatprep.subr.bf16.mxu0 %v2958
      %2994 = vmatpush1.bf16.msra.mxu0 %v2957
      %2995 = vmatprep.subr.bf16.mxu0 0
      %2996 = vmatpush2.bf16.msra.mxu0 0
      %2997 = vmatprep.subr.bf16.mxu0 0
      %2998 = vmatpush2.bf16.msra.mxu0 0
      %2999 = vmatprep.subr.bf16.mxu0 0
      %3000 = vmatpush2.bf16.msra.mxu0 0
      %3001 = vmatprep.subr.bf16.mxu0 0
      %3002 = vmatpush2.bf16.msra.mxu0 0
      %3003 = vmatprep.subr.bf16.mxu0 0
      %3004 = vmatpush2.bf16.msra.mxu0 0
      %3005 = vmatprep.subr.bf16.mxu0 0
      %3006 = vmatpush2.bf16.msra.mxu0 0
      %3007 = vmatprep.subr.bf16.mxu0 0
      %3008 = vmatpush2.bf16.msra.mxu0 0
      %3009 = vmatprep.subr.bf16.mxu0 0
      %3010 = vmatpush2.bf16.msra.mxu0 0
      %3011 = vmatprep.mubr.bf16.mxu0 0
      %3012 = vmatmul.mubr.bf16.gmra.mxu0 %v2968
      %v3013 = vpop.f32.mrf.mxu0
      %v3014 = vadd.f32 %v2924, %v3013
      %v3015 = vpop.f32.mrf.mxu0
      %v3016 = vadd.f32 %v2926, %v3015
      %v3017 = vpop.f32.mrf.mxu0
      %v3018 = vadd.f32 %v2928, %v3017
      %v3019 = vpop.f32.mrf.mxu0
      %v3020 = vadd.f32 %v2930, %v3019
      %3021 = vmatprep.mubr.bf16.mxu0 0
      %3022 = vmatmul.mubr.bf16.gmra.mxu0 %v2971
      %v3023 = vpop.f32.mrf.mxu0
      %v3024 = vadd.f32 %v2934, %v3023
      %v3025 = vpop.f32.mrf.mxu0
      %v3026 = vadd.f32 %v2936, %v3025
      %v3027 = vpop.f32.mrf.mxu0
      %v3028 = vadd.f32 %v2938, %v3027
      %v3029 = vpop.f32.mrf.mxu0
      %v3030 = vadd.f32 %v2940, %v3029
      %3031 = vdwg.mxu0
      %v3032 = vmul.f32 %v3014, %v922
      %v3033 = vmul.f32 %v3016, %v923
      %v3034 = vmul.f32 %v3018, %v924
      %v3035 = vmul.f32 %v3020, %v925
      %v3036 = vmul.f32 %v3024, %v926
      %v3037 = vmul.f32 %v3026, %v927
      %v3038 = vmul.f32 %v3028, %v928
      %v3039 = vmul.f32 %v3030, %v929
      %v3040 = vld [vmem:[%s25] sm:$0xff]
      %v3041 = vld [vmem:[%s25 + $0x8] sm:$0xff]
      %v3042 = vld [vmem:[%s25 + $0x10] sm:$0xff]
      %v3043 = vld [vmem:[%s25 + $0x18] sm:$0xff]
      %3044 = vmatprep.subr.mxu0 0.0
      %3045 = vmatpush1.msra.mxu0 %v945
      %3046 = vmatprep.subr.mxu0 0.0
      %3047 = vmatpush1.msra.mxu0 %v944
      %3048 = vmatprep.subr.mxu0 0.0
      %3049 = vmatpush1.msra.mxu0 %v943
      %3050 = vmatprep.subr.mxu0 0.0
      %3051 = vmatpush1.msra.mxu0 %v942
      %3052 = vmatprep.subr.mxu0 0.0
      %3053 = vmatpush1.msra.mxu0 %v941
      %3054 = vmatprep.subr.mxu0 0.0
      %3055 = vmatpush1.msra.mxu0 %v940
      %3056 = vmatprep.subr.mxu0 0.0
      %3057 = vmatpush1.msra.mxu0 %v939
      %3058 = vmatprep.subr.mxu0 0.0
      %3059 = vmatpush1.msra.mxu0 %v938
      %3060 = vmatprep.subr.mxu0 0.0
      %3061 = vmatpush1.msra.mxu0 %v937
      %3062 = vmatprep.subr.mxu0 0.0
      %3063 = vmatpush1.msra.mxu0 %v936
      %3064 = vmatprep.subr.mxu0 0.0
      %3065 = vmatpush1.msra.mxu0 %v935
      %3066 = vmatprep.subr.mxu0 0.0
      %3067 = vmatpush1.msra.mxu0 %v934
      %3068 = vmatprep.subr.mxu0 0.0
      %3069 = vmatpush1.msra.mxu0 %v933
      %3070 = vmatprep.subr.mxu0 0.0
      %3071 = vmatpush1.msra.mxu0 %v932
      %3072 = vmatprep.subr.mxu0 0.0
      %3073 = vmatpush1.msra.mxu0 %v931
      %3074 = vmatprep.subr.mxu0 0.0
      %3075 = vmatpush1.msra.mxu0 %v930
      %3076 = vmatprep.subr.mxu0 0.0
      %3077 = vmatpush2.msra.mxu0 %v961
      %3078 = vmatprep.subr.mxu0 0.0
      %3079 = vmatpush2.msra.mxu0 %v960
      %3080 = vmatprep.subr.mxu0 0.0
      %3081 = vmatpush2.msra.mxu0 %v959
      %3082 = vmatprep.subr.mxu0 0.0
      %3083 = vmatpush2.msra.mxu0 %v958
      %3084 = vmatprep.subr.mxu0 0.0
      %3085 = vmatpush2.msra.mxu0 %v957
      %3086 = vmatprep.subr.mxu0 0.0
      %3087 = vmatpush2.msra.mxu0 %v956
      %3088 = vmatprep.subr.mxu0 0.0
      %3089 = vmatpush2.msra.mxu0 %v955
      %3090 = vmatprep.subr.mxu0 0.0
      %3091 = vmatpush2.msra.mxu0 %v954
      %3092 = vmatprep.subr.mxu0 0.0
      %3093 = vmatpush2.msra.mxu0 %v953
      %3094 = vmatprep.subr.mxu0 0.0
      %3095 = vmatpush2.msra.mxu0 %v952
      %3096 = vmatprep.subr.mxu0 0.0
      %3097 = vmatpush2.msra.mxu0 %v951
      %3098 = vmatprep.subr.mxu0 0.0
      %3099 = vmatpush2.msra.mxu0 %v950
      %3100 = vmatprep.subr.mxu0 0.0
      %3101 = vmatpush2.msra.mxu0 %v949
      %3102 = vmatprep.subr.mxu0 0.0
      %3103 = vmatpush2.msra.mxu0 %v948
      %3104 = vmatprep.subr.mxu0 0.0
      %3105 = vmatpush2.msra.mxu0 %v947
      %3106 = vmatprep.subr.mxu0 0.0
      %3107 = vmatpush2.msra.mxu0 %v946
      %3108 = vmatprep.mubr.f32.mxu0 %v3033
      %3109 = vmatmul.mubr.f32.gmra.mxu0 %v3032
      %v3110 = vpop.f32.mrf.mxu0
      %v3111 = vadd.f32 %v3040, %v3110
      %v3112 = vpop.f32.mrf.mxu0
      %3113 = vmatprep.mubr.f32.mxu0 %v3035
      %3114 = vmatmul.mubr.f32.gmra.mxu0 %v3034
      %v3115 = vpop.f32.mrf.mxu0
      %v3116 = vadd.f32 %v3041, %v3115
      %v3117 = vpop.f32.mrf.mxu0
      %3118 = vmatprep.mubr.f32.mxu0 %v3037
      %3119 = vmatmul.mubr.f32.gmra.mxu0 %v3036
      %v3120 = vpop.f32.mrf.mxu0
      %v3121 = vadd.f32 %v3042, %v3120
      %v3122 = vpop.f32.mrf.mxu0
      %3123 = vmatprep.mubr.f32.mxu0 %v3039
      %3124 = vmatmul.mubr.f32.gmra.mxu0 %v3038
      %v3125 = vpop.f32.mrf.mxu0
      %v3126 = vadd.f32 %v3043, %v3125
      %v3127 = vpop.f32.mrf.mxu0
      %3128 = vdwg.mxu0
      %v3129 = vtanh.pop %v3111
      %v3130 = vtanh.pop %v3116
      %v3131 = vtanh.pop %v3121
      %v3132 = vtanh.pop %v3126
      %v3133 = vmul.f32 %v2203, %v962
      %v3134 = vmul.f32 %v2205, %v963
      %v3135 = vmul.f32 %v2207, %v964
      %v3136 = vmul.f32 %v2209, %v965
      %v3137 = vsub.f32 1.0, %v2203
      %v3138 = vsub.f32 1.0, %v2205
      %v3139 = vsub.f32 1.0, %v2207
      %v3140 = vsub.f32 1.0, %v2209
      %v3141 = vmul.f32 %v3137, %v3129
      %v3142 = vmul.f32 %v3138, %v3130
      %v3143 = vmul.f32 %v3139, %v3131
      %v3144 = vmul.f32 %v3140, %v3132
      %v3145 = vadd.f32 %v3133, %v3141
      %v3146 = vadd.f32 %v3134, %v3142
      %v3147 = vadd.f32 %v3135, %v3143
      %v3148 = vadd.f32 %v3136, %v3144
      %vm3149 = vcmask 261120
      %3150 = vst.msk [vmem:[#allocation2] sm:$0xff] %vm3149, %v3145
      %3151 = vst.msk [vmem:[#allocation2 + $0x8] sm:$0xff] %vm3149, %v3146
      %3152 = vst.msk [vmem:[#allocation2 + $0x10] sm:$0xff] %vm3149, %v3147
      %3153 = vst.msk [vmem:[#allocation2 + $0x18] sm:$0xff] %vm3149, %v3148
      %3154 = vst.msk [vmem:[%s898] sm:$0xff] %vm3149, %v3145
      %3155 = vst.msk [vmem:[%s898 + $0x8] sm:$0xff] %vm3149, %v3146
      %3156 = vst.msk [vmem:[%s898 + $0x10] sm:$0xff] %vm3149, %v3147
      %3157 = vst.msk [vmem:[%s898 + $0x18] sm:$0xff] %vm3149, %v3148
      %s3158 = smul.u32 2, %s41
      %p3159 = scmp.lt.s32.totalorder %s42, 7
      %s3160 = scalar_select %p3159, %s42, 7
      %p3161 = scmp.lt.s32.totalorder %s3158, 1
      %s3162 = scalar_select %p3161, %s3158, 1
      %s3163 = smul.addr %s3162, 2
      %s3164 = smul.addr %s3160, 4
      %s3165 = sadd.s32 %s3163, %s3164
      %s3166 = smul.addr %s3165, 8
      %s3167 = scalar_lea.vmem %s26, %s3166
      // Predicated region
      $region129: #{dgcrm_forward.1} parent=123 // pred_check
        %p3168 = pneg %p634
      $region130: #{dgcrm_forward.1} parent=123 // pred_check_branch
        %3170 = sbr.rel (%p3168) target = $region132
      $region131: #{dgcrm_forward.1} parent=123 // pred_region
        %s3171 = smul.u32 2, %s41
      $region132: #{dgcrm_forward.1} parent=123 // pred_fallthru
        _
    $region124: #{dgcrm_forward.1} parent=5 // pred_fallthru
      _
    %p3172 = scmp.le.s32.totalorder 2, %s32
    // Predicated region
    $region133: #{dgcrm_forward.1} parent=5 // pred_check
      %p3173 = pneg %p3172
    $region134: #{dgcrm_forward.1} parent=5 // pred_check_branch
      %3175 = sbr.rel (%p3173) target = $region136
    $region135: #{dgcrm_forward.1} parent=5 // pred_region
      %s3176 = ssub.s32 %s32, 2
      // Predicated region
      $region137: #{dgcrm_forward.1} parent=135 // pred_check
        %p3177 = pneg %p640
      $region138: #{dgcrm_forward.1} parent=135 // pred_check_branch
        %3179 = sbr.rel (%p3177) target = $region140
      $region139: #{dgcrm_forward.1} parent=135 // pred_region
        %s3180 = smul.u32 2, %s43
        %p3181 = scmp.lt.s32.totalorder %s44, 7
        %s3182 = scalar_select %p3181, %s44, 7
        %p3183 = scmp.lt.s32.totalorder %s3180, 1
        %s3184 = scalar_select %p3183, %s3180, 1
        %s3185 = smul.addr %s3184, 2
        %s3186 = smul.addr %s3182, 4
        %s3187 = sadd.s32 %s3185, %s3186
        %s3188 = smul.addr %s3187, 8
        %s3189 = scalar_lea.vmem %s26, %s3188
      $region140: #{dgcrm_forward.1} parent=135 // pred_fallthru
        _
    $region136: #{dgcrm_forward.1} parent=5 // pred_fallthru
      _
  $region6: #{dgcrm_forward.1} parent=0 // loop_footer
    %s36 = sadd.s32 1, %s32
  $region7: #{dgcrm_forward.1} parent=0 // loop_footer_branch
    %31 = sbr.rel target = $region3
  $region8: #{dgcrm_forward.1} parent=0 // loop_exit
    _

</llo_original>
